<compile_context>
chip_gen: v5e
topology: v5e:2x2
jax: 0.10.0
libtpu: 0.0.40
codegen_flags: <defaults>
</compile_context>

<pallas_src>
import jax
import jax.numpy as jnp
from jax.experimental import pallas as pl
from jax.experimental.pallas import tpu as pltpu


# network geometry (fixed by the 15x15 LeNet)
H0 = W0 = 15          # input spatial size
LANES = 128           # all channel dims padded to one full vreg lane width
CIN1_PAD = 8          # input channels 3 -> padded to 8 lanes

# ---- single packed weight slab: row offsets (all 8-row aligned) -------------
OFF_W1, LEN_W1 = 0, 4 * CIN1_PAD            # conv1 weights  [32, 128]
OFF_B1 = OFF_W1 + LEN_W1                    # conv1 bias row (32)
OFF_W2, LEN_W2 = OFF_B1 + 8, 4 * 16         # conv2 weights  [64, 128]  (40)
OFF_B2 = OFF_W2 + LEN_W2                    # (104)
OFF_W3, LEN_W3 = OFF_B2 + 8, 4 * 32         # conv3 weights  [128, 128] (112)
OFF_B3 = OFF_W3 + LEN_W3                    # (240)
OFF_W4, LEN_W4 = OFF_B3 + 8, 4 * 16         # conv4 weights  [64, 128]  (248)
OFF_B4 = OFF_W4 + LEN_W4                    # (312)
OFF_G = OFF_B4 + 8                          # fc1 weights: 9 blocks of 16 rows (320)
OFF_FB1 = OFF_G + 9 * 16                    # fc1 bias row  (464)
OFF_W2R = OFF_FB1 + 8                       # fc2 weight row (472)
OFF_FB2 = OFF_W2R + 8                       # fc2 bias row, broadcast over lanes (480)
SLAB_ROWS = OFF_FB2 + 8                     # 488 rows ≈ 250 KB f32


# ---------------------------------------------------------------------------
# Fused Pallas kernel
# ---------------------------------------------------------------------------

def _build_lenet_call(B):
    """Builds a single fused gridless pallas_call computing the whole forward."""
    M0 = B * H0 * W0          # conv1 output rows (full 15x15 grid per image)
    M1 = B * 7 * 7            # conv2 grid rows (7x7 grid per image)
    M2 = B * 4 * 4            # conv3/conv4 grid rows (padded 4x4 grid per image)
    R_IN = M0 + W0 + 1        # input rows incl. slack for shifted reads
    R_P1 = M1 + 8             # pool1 output rows + slack for conv2 shifted reads
    R_P2 = M2 + 5             # padded pool2 grid + slack for conv3 shifted reads
    R_A3 = M2 + 5             # padded relu_x3 grid + slack for conv4 shifted reads

    def conv2x2(src_ref, w_ref, w_off, b_off, *, n_rows, width, cin):
        """2x2 'valid' conv (+bias +ReLU) as ONE matmul: the 4 (dy,dx)-shifted
        activation slices are lane-concatenated into [n_rows, 4*cin] and hit
        the pre-packed [4*cin, 128] weight block (block k = dy*2+dx).  Output
        row r = b*Hg*Wg + i*Wg + j ("full grid"); rows with i == Hg-1 or
        j == Wg-1 are junk and never consumed downstream."""
        offs = (0, 1, width, width + 1)
        xs = [src_ref[pl.ds(off, n_rows), :][:, :cin] for off in offs]
        xcat = jnp.concatenate(xs, axis=1)                       # [n_rows, 4*cin]
        w = w_ref[pl.ds(w_off, 4 * cin), :]                      # [4*cin, 128]
        b = w_ref[pl.ds(b_off, 1), :]                            # [1, 128]
        acc = jnp.dot(xcat, w, preferred_element_type=jnp.float32)
        return jnp.maximum(acc + b, 0.0)

    def maxpool2x2(src_ref, dst_ref, *, img_rows, width_in, n_out, dst_row):
        """2x2 / stride-2 max pool over the valid region of a full-grid flat
        activation; writes n_out rows per (image, output row) at dst_row(b, pi)."""
        for b in range(B):
            for pi in range(n_out):
                base = b * img_rows + 2 * pi * width_in
                m = None
                for di in (0, 1):
                    for dj in (0, 1):
                        start = base + di * width_in + dj
                        v = src_ref[pl.ds(start, n_out, stride=2), :]
                        m = v if m is None else jnp.maximum(m, v)
                dst_ref[pl.ds(dst_row(b, pi), n_out), :] = m

    def kernel(x_ref, w_ref, o_ref, a1, p1, a2, p2p, a3p, a4):
        f32 = jnp.float32

        # conv1 + ReLU : 15x15x3 -> (15x15 grid, valid 14x14) x 16
        a1[...] = conv2x2(x_ref, w_ref, OFF_W1, OFF_B1,
                          n_rows=M0, width=W0, cin=CIN1_PAD)

        # pool1 : valid 14x14 -> 7x7 grid.  Only p1's 8 slack rows need zeroing
        # (the 49 valid rows per image are fully overwritten by the pool).
        p1[pl.ds(M1, 8), :] = jnp.zeros((8, LANES), f32)
        maxpool2x2(a1, p1, img_rows=H0 * W0, width_in=W0, n_out=7,
                   dst_row=lambda b, pi: b * 49 + pi * 7)

        # conv2 + ReLU : 7x7x16 -> (7x7 grid, valid 6x6) x 32
        a2[...] = conv2x2(p1, w_ref, OFF_W2, OFF_B2, n_rows=M1, width=7, cin=16)

        # pool2 : valid 6x6 -> 3x3, written at (pi+1, pj+1) of the zeroed 4x4
        # grid p2p  ( == ConstantPad2d((1,0,1,0)) of the pooled output ).
        # p2p is small (37 rows) so a full memset covers pad + slack rows.
        p2p[...] = jnp.zeros(p2p.shape, f32)
        maxpool2x2(a2, p2p, img_rows=49, width_in=7, n_out=3,
                   dst_row=lambda b, pi: b * 16 + (pi + 1) * 4 + 1)

        # conv3 + ReLU : 4x4x32 -> valid 3x3 x 16, padded-by-placement: mask the
        # full-grid output with a 0/1 row mask (valid iff i<3 and j<3 inside its
        # image) so the single (+1,+1)-shifted bulk store also writes the zero
        # padding rows of its own image and of the next image's pad block.
        z3 = conv2x2(p2p, w_ref, OFF_W3, OFF_B3, n_rows=M2, width=4, cin=32)
        r = jax.lax.broadcasted_iota(jnp.int32, (M2, 1), 0) % 16
        valid = jnp.logical_and(r % 4 < 3, r < 12).astype(f32)   # [M2, 1]
        a3p[pl.ds(0, 5), :] = jnp.zeros((5, LANES), f32)         # image-0 pad rows
        a3p[pl.ds(5, M2), :] = z3 * valid

        # conv4 + ReLU : 4x4x16 -> (4x4 grid, valid 3x3) x 16
        a4[...] = conv2x2(a3p, w_ref, OFF_W4, OFF_B4, n_rows=M2, width=4, cin=16)

        # fc1 + ReLU : the NCHW flatten (index = c*9 + i*3 + j) is absorbed
        # into 9 pre-packed [16, 128] weight blocks; gather the B rows of each
        # spatial position with a strided load and accumulate 9 tiny matmuls.
        acc = None
        for k in range(9):
            i, j = divmod(k, 3)
            rows = a4[pl.ds(i * 4 + j, B, stride=16), :][:, :16]  # [B, 16]
            gk = w_ref[pl.ds(OFF_G + k * 16, 16), :]              # [16, 128]
            t = jnp.dot(rows, gk, preferred_element_type=jnp.float32)
            acc = t if acc is None else acc + t
        fb1 = w_ref[pl.ds(OFF_FB1, 1), :]
        h = jnp.maximum(acc + fb1, 0.0)                           # [B, 128]

        # fc2 : 50 -> 1 as a lane reduction; output kept lane-dense (B, 128)
        # (fc2 bias row is pre-broadcast across all lanes, so every output lane
        #  holds the answer; the wrapper slices column 0).
        w2r = w_ref[pl.ds(OFF_W2R, 1), :]
        fb2 = w_ref[pl.ds(OFF_FB2, 1), :]
        cap = jnp.sum(h * w2r, axis=1, keepdims=True) + fb2       # [B,1]+[1,128]
        o_ref[...] = cap.astype(o_ref.dtype)

    vspec = pl.BlockSpec(memory_space=pltpu.MemorySpace.VMEM)
    call = pl.pallas_call(
        kernel,
        out_shape=jax.ShapeDtypeStruct((B, LANES), jnp.float32),
        in_specs=[vspec, vspec],          # x, packed weight slab
        out_specs=vspec,
        scratch_shapes=[
            pltpu.VMEM((M0, LANES), jnp.float32),    # a1  : conv1 out (15x15 grid)
            pltpu.VMEM((R_P1, LANES), jnp.float32),  # p1  : pool1 out (7x7 grid)
            pltpu.VMEM((M1, LANES), jnp.float32),    # a2  : conv2 out (7x7 grid)
            pltpu.VMEM((R_P2, LANES), jnp.float32),  # p2p : padded pool2 (4x4 grid)
            pltpu.VMEM((R_A3, LANES), jnp.float32),  # a3p : padded conv3 out (4x4)
            pltpu.VMEM((M2, LANES), jnp.float32),    # a4  : conv4 out (4x4 grid)
        ],
    )
    return call, R_IN


def make_lenet_forward(B):
    call, r_in = _build_lenet_call(B)

    def forward(w_slab, x_nchw):
        # Only wrapper-side glue: NCHW -> NHWC -> flat [B*225, 3], then pad
        # rows (shifted-read slack) and lanes (3 -> 8); slice lane-dense output.
        x = jnp.transpose(x_nchw, (0, 2, 3, 1)).reshape(B * H0 * W0, 3)
        x = jnp.pad(x, ((0, r_in - B * H0 * W0), (0, CIN1_PAD - 3)))
        out = call(x.astype(jnp.float32), w_slab)
        return out[:, :1]

    return forward


# ---------------------------------------------------------------------------
# Parameters: PyTorch-layout init + one-time repack into ONE kernel-ready slab
# ---------------------------------------------------------------------------

def init_params(key):
    ks = jax.random.split(key, 6)

    def kaiming(k, shape):  # [O, C, kh, kw]; kaiming_normal_, fan_in mode
        fan_in = shape[1] * shape[2] * shape[3]
        return jax.random.normal(k, shape, jnp.float32) * jnp.sqrt(2.0 / fan_in)

    p = {}
    p["w1"] = kaiming(ks[0], (16, 3, 2, 2));  p["b1"] = jnp.zeros((16,), jnp.float32)
    p["w2"] = kaiming(ks[1], (32, 16, 2, 2)); p["b2"] = jnp.zeros((32,), jnp.float32)
    p["w3"] = kaiming(ks[2], (16, 32, 2, 2)); p["b3"] = jnp.zeros((16,), jnp.float32)
    p["w4"] = kaiming(ks[3], (16, 16, 2, 2)); p["b4"] = jnp.zeros((16,), jnp.float32)
    p["fc1_w"] = jax.random.normal(ks[4], (50, 3 * 3 * 16), jnp.float32) * jnp.sqrt(1.0 / 144)
    p["fc1_b"] = jnp.zeros((50,), jnp.float32)
    p["fc2_w"] = jax.random.normal(ks[5], (1, 50), jnp.float32) * jnp.sqrt(1.0 / 50)
    p["fc2_b"] = jnp.zeros((1,), jnp.float32)
    return p


def pack_params(p):
    """One-time repack of PyTorch-layout params into ONE [SLAB_ROWS, 128] slab
    (all transposes / channel padding / bias rows hoisted out of the forward)."""
    slab = jnp.zeros((SLAB_ROWS, LANES), jnp.float32)

    def put_conv(slab, w, b, w_off, b_off, cin_pad):
        O, C = int(w.shape[0]), int(w.shape[1])
        blocks = []
        for dy in (0, 1):
            for dx in (0, 1):                                     # k = dy*2 + dx
                wk = jnp.transpose(w[:, :, dy, dx])               # [C, O]
                blocks.append(jnp.pad(wk, ((0, cin_pad - C), (0, LANES - O))))
        wm = jnp.concatenate(blocks, axis=0)                      # [4*cin_pad, 128]
        slab = slab.at[w_off:w_off + 4 * cin_pad, :].set(wm)
        slab = slab.at[b_off, :].set(jnp.pad(b, (0, LANES - O)))
        return slab

    slab = put_conv(slab, p["w1"], p["b1"], OFF_W1, OFF_B1, CIN1_PAD)
    slab = put_conv(slab, p["w2"], p["b2"], OFF_W2, OFF_B2, 16)
    slab = put_conv(slab, p["w3"], p["b3"], OFF_W3, OFF_B3, 32)
    slab = put_conv(slab, p["w4"], p["b4"], OFF_W4, OFF_B4, 16)

    # fc1: absorb the NCHW flatten (index = c*9 + i*3 + j) into 9 [16,128] blocks
    w_fc1 = p["fc1_w"].reshape(50, 16, 3, 3)
    for i in range(3):
        for j in range(3):
            gk = jnp.transpose(w_fc1[:, :, i, j])                 # [16, 50]
            gk = jnp.pad(gk, ((0, 0), (0, LANES - 50)))
            off = OFF_G + (i * 3 + j) * 16
            slab = slab.at[off:off + 16, :].set(gk)

    slab = slab.at[OFF_FB1, :].set(jnp.pad(p["fc1_b"], (0, LANES - 50)))
    slab = slab.at[OFF_W2R, :].set(jnp.pad(p["fc2_w"][0], (0, LANES - 50)))
    slab = slab.at[OFF_FB2, :].set(jnp.full((LANES,), p["fc2_b"][0], jnp.float32))
    return slab.astype(jnp.float32)


# ---------------------------------------------------------------------------
# Plain-JAX reference (for numerical validation only)
# ---------------------------------------------------------------------------

def lenet_reference(p, x):
    def conv(v, w, b):
        y = jax.lax.conv_general_dilated(
            v, w, window_strides=(1, 1), padding="VALID",
            dimension_numbers=("NCHW", "OIHW", "NCHW"))
        return y + b.reshape(1, -1, 1, 1)

    def pool(v):
        return jnp.maximum(
            jnp.maximum(v[:, :, 0::2, 0::2], v[:, :, 0::2, 1::2]),
            jnp.maximum(v[:, :, 1::2, 0::2], v[:, :, 1::2, 1::2]))

    pad = lambda v: jnp.pad(v, ((0, 0), (0, 0), (1, 0), (1, 0)))
    relu = jax.nn.relu

    x1 = pool(relu(conv(x, p["w1"], p["b1"])))
    x2 = pool(relu(conv(x1, p["w2"], p["b2"])))
    x3 = relu(conv(pad(x2), p["w3"], p["b3"]))
    x4 = relu(conv(pad(x3), p["w4"], p["b4"]))
    flat = x4.reshape(x4.shape[0], -1)
    h = relu(flat @ p["fc1_w"].T + p["fc1_b"])
    return h @ p["fc2_w"].T + p["fc2_b"]


if __name__ == "__main__":
    key = jax.random.PRNGKey(0)
    k_params, k_x = jax.random.split(key)
    params = init_params(k_params)
    w_slab = pack_params(params)          # one-time repack, outside jit

    batch = 2
    x = jax.random.normal(k_x, (batch, 3, H0, W0), dtype=jnp.float32)

    fwd = jax.jit(make_lenet_forward(batch))
    out = jax.block_until_ready(fwd(w_slab, x))
    assert out.shape == (batch, 1), out.shape

    ref = lenet_reference(params, x)
    err = float(jnp.max(jnp.abs(out - ref)))
    assert err < 1e-2, f"mismatch vs reference: max abs err = {err}"

    print("KERNEL_OK")
</pallas_src>

<mosaic_0001>
module attributes {stable_mosaic.version = 11 : i64} {
  func.func @kernel(%arg0: memref<466x8xf32, #tpu.memory_space<vmem>>, %arg1: memref<488x128xf32, #tpu.memory_space<vmem>>, %arg2: memref<2x128xf32, #tpu.memory_space<vmem>>, %arg3: memref<450x128xf32, #tpu.memory_space<vmem>>, %arg4: memref<106x128xf32, #tpu.memory_space<vmem>>, %arg5: memref<98x128xf32, #tpu.memory_space<vmem>>, %arg6: memref<37x128xf32, #tpu.memory_space<vmem>>, %arg7: memref<37x128xf32, #tpu.memory_space<vmem>>, %arg8: memref<32x128xf32, #tpu.memory_space<vmem>>) attributes {dimension_semantics = [], scalar_prefetch = 0 : i64, scratch_operands = 6 : i64, tpu.core_type = #tpu.core_type<tc>} {
    %c0 = arith.constant 0 : index
    %c0_0 = arith.constant 0 : index
    %0 = vector.load %arg0[%c0, %c0_0] : memref<466x8xf32, #tpu.memory_space<vmem>>, vector<450x8xf32>
    %c1 = arith.constant 1 : index
    %c0_1 = arith.constant 0 : index
    %1 = vector.load %arg0[%c1, %c0_1] : memref<466x8xf32, #tpu.memory_space<vmem>>, vector<450x8xf32>
    %c15 = arith.constant 15 : index
    %c0_2 = arith.constant 0 : index
    %2 = vector.load %arg0[%c15, %c0_2] : memref<466x8xf32, #tpu.memory_space<vmem>>, vector<450x8xf32>
    %c16 = arith.constant 16 : index
    %c0_3 = arith.constant 0 : index
    %3 = vector.load %arg0[%c16, %c0_3] : memref<466x8xf32, #tpu.memory_space<vmem>>, vector<450x8xf32>
    %4 = tpu.concatenate %0, %1, %2, %3 in 1 : vector<450x8xf32>, vector<450x8xf32>, vector<450x8xf32>, vector<450x8xf32> -> vector<450x32xf32>
    %c0_4 = arith.constant 0 : index
    %c0_5 = arith.constant 0 : index
    %5 = vector.load %arg1[%c0_4, %c0_5] : memref<488x128xf32, #tpu.memory_space<vmem>>, vector<32x128xf32>
    %c32 = arith.constant 32 : index
    %c0_6 = arith.constant 0 : index
    %6 = vector.load %arg1[%c32, %c0_6] : memref<488x128xf32, #tpu.memory_space<vmem>>, vector<1x128xf32>
    %cst = arith.constant dense<0.000000e+00> : vector<450x128xf32>
    %7 = tpu.matmul %4, %5, %cst {dimension_numbers = #tpu.dot_dimension_numbers<[1], [0], [0], [1], [0, 0, 1, 1], [], []>} : vector<450x32xf32>, vector<32x128xf32>, vector<450x128xf32> -> vector<450x128xf32>
    %8 = vector.broadcast %6 : vector<1x128xf32> to vector<450x128xf32>
    %9 = arith.addf %7, %8 : vector<450x128xf32>
    %cst_7 = arith.constant 0.000000e+00 : f32
    %10 = vector.broadcast %cst_7 : f32 to vector<450x128xf32>
    %11 = arith.maximumf %9, %10 : vector<450x128xf32>
    %c0_8 = arith.constant 0 : index
    %c0_9 = arith.constant 0 : index
    %12 = vector.load %arg3[%c0_8, %c0_9] : memref<450x128xf32, #tpu.memory_space<vmem>>, vector<450x128xf32>
    tpu.vector_store %arg3[%c0_8, %c0_9], %11 {strides = array<i32>} : memref<450x128xf32, #tpu.memory_space<vmem>>, vector<450x128xf32>,
    %cst_10 = arith.constant 0.000000e+00 : f32
    %13 = vector.broadcast %cst_10 : f32 to vector<8x128xf32>
    %c98 = arith.constant 98 : index
    %c0_11 = arith.constant 0 : index
    %14 = vector.load %arg4[%c98, %c0_11] : memref<106x128xf32, #tpu.memory_space<vmem>>, vector<8x128xf32>
    tpu.vector_store %arg4[%c98, %c0_11], %13 {strides = array<i32>} : memref<106x128xf32, #tpu.memory_space<vmem>>, vector<8x128xf32>,
    %c0_12 = arith.constant 0 : index
    %c0_13 = arith.constant 0 : index
    %15 = tpu.strided_load %arg3[%c0_12, %c0_13] {strides = array<i32: 2, 1>} : memref<450x128xf32, #tpu.memory_space<vmem>>, vector<7x128xf32>
    %c1_14 = arith.constant 1 : index
    %c0_15 = arith.constant 0 : index
    %16 = tpu.strided_load %arg3[%c1_14, %c0_15] {strides = array<i32: 2, 1>} : memref<450x128xf32, #tpu.memory_space<vmem>>, vector<7x128xf32>
    %17 = arith.maximumf %15, %16 : vector<7x128xf32>
    %c15_16 = arith.constant 15 : index
    %c0_17 = arith.constant 0 : index
    %18 = tpu.strided_load %arg3[%c15_16, %c0_17] {strides = array<i32: 2, 1>} : memref<450x128xf32, #tpu.memory_space<vmem>>, vector<7x128xf32>
    %19 = arith.maximumf %17, %18 : vector<7x128xf32>
    %c16_18 = arith.constant 16 : index
    %c0_19 = arith.constant 0 : index
    %20 = tpu.strided_load %arg3[%c16_18, %c0_19] {strides = array<i32: 2, 1>} : memref<450x128xf32, #tpu.memory_space<vmem>>, vector<7x128xf32>
    %21 = arith.maximumf %19, %20 : vector<7x128xf32>
    %c0_20 = arith.constant 0 : index
    %c0_21 = arith.constant 0 : index
    %22 = vector.load %arg4[%c0_20, %c0_21] : memref<106x128xf32, #tpu.memory_space<vmem>>, vector<7x128xf32>
    tpu.vector_store %arg4[%c0_20, %c0_21], %21 {strides = array<i32>} : memref<106x128xf32, #tpu.memory_space<vmem>>, vector<7x128xf32>,
    %c30 = arith.constant 30 : index
    %c0_22 = arith.constant 0 : index
    %23 = tpu.strided_load %arg3[%c30, %c0_22] {strides = array<i32: 2, 1>} : memref<450x128xf32, #tpu.memory_space<vmem>>, vector<7x128xf32>
    %c31 = arith.constant 31 : index
    %c0_23 = arith.constant 0 : index
    %24 = tpu.strided_load %arg3[%c31, %c0_23] {strides = array<i32: 2, 1>} : memref<450x128xf32, #tpu.memory_space<vmem>>, vector<7x128xf32>
    %25 = arith.maximumf %23, %24 : vector<7x128xf32>
    %c45 = arith.constant 45 : index
    %c0_24 = arith.constant 0 : index
    %26 = tpu.strided_load %arg3[%c45, %c0_24] {strides = array<i32: 2, 1>} : memref<450x128xf32, #tpu.memory_space<vmem>>, vector<7x128xf32>
    %27 = arith.maximumf %25, %26 : vector<7x128xf32>
    %c46 = arith.constant 46 : index
    %c0_25 = arith.constant 0 : index
    %28 = tpu.strided_load %arg3[%c46, %c0_25] {strides = array<i32: 2, 1>} : memref<450x128xf32, #tpu.memory_space<vmem>>, vector<7x128xf32>
    %29 = arith.maximumf %27, %28 : vector<7x128xf32>
    %c7 = arith.constant 7 : index
    %c0_26 = arith.constant 0 : index
    %30 = vector.load %arg4[%c7, %c0_26] : memref<106x128xf32, #tpu.memory_space<vmem>>, vector<7x128xf32>
    tpu.vector_store %arg4[%c7, %c0_26], %29 {strides = array<i32>} : memref<106x128xf32, #tpu.memory_space<vmem>>, vector<7x128xf32>,
    %c60 = arith.constant 60 : index
    %c0_27 = arith.constant 0 : index
    %31 = tpu.strided_load %arg3[%c60, %c0_27] {strides = array<i32: 2, 1>} : memref<450x128xf32, #tpu.memory_space<vmem>>, vector<7x128xf32>
    %c61 = arith.constant 61 : index
    %c0_28 = arith.constant 0 : index
    %32 = tpu.strided_load %arg3[%c61, %c0_28] {strides = array<i32: 2, 1>} : memref<450x128xf32, #tpu.memory_space<vmem>>, vector<7x128xf32>
    %33 = arith.maximumf %31, %32 : vector<7x128xf32>
    %c75 = arith.constant 75 : index
    %c0_29 = arith.constant 0 : index
    %34 = tpu.strided_load %arg3[%c75, %c0_29] {strides = array<i32: 2, 1>} : memref<450x128xf32, #tpu.memory_space<vmem>>, vector<7x128xf32>
    %35 = arith.maximumf %33, %34 : vector<7x128xf32>
    %c76 = arith.constant 76 : index
    %c0_30 = arith.constant 0 : index
    %36 = tpu.strided_load %arg3[%c76, %c0_30] {strides = array<i32: 2, 1>} : memref<450x128xf32, #tpu.memory_space<vmem>>, vector<7x128xf32>
    %37 = arith.maximumf %35, %36 : vector<7x128xf32>
    %c14 = arith.constant 14 : index
    %c0_31 = arith.constant 0 : index
    %38 = vector.load %arg4[%c14, %c0_31] : memref<106x128xf32, #tpu.memory_space<vmem>>, vector<7x128xf32>
    tpu.vector_store %arg4[%c14, %c0_31], %37 {strides = array<i32>} : memref<106x128xf32, #tpu.memory_space<vmem>>, vector<7x128xf32>,
    %c90 = arith.constant 90 : index
    %c0_32 = arith.constant 0 : index
    %39 = tpu.strided_load %arg3[%c90, %c0_32] {strides = array<i32: 2, 1>} : memref<450x128xf32, #tpu.memory_space<vmem>>, vector<7x128xf32>
    %c91 = arith.constant 91 : index
    %c0_33 = arith.constant 0 : index
    %40 = tpu.strided_load %arg3[%c91, %c0_33] {strides = array<i32: 2, 1>} : memref<450x128xf32, #tpu.memory_space<vmem>>, vector<7x128xf32>
    %41 = arith.maximumf %39, %40 : vector<7x128xf32>
    %c105 = arith.constant 105 : index
    %c0_34 = arith.constant 0 : index
    %42 = tpu.strided_load %arg3[%c105, %c0_34] {strides = array<i32: 2, 1>} : memref<450x128xf32, #tpu.memory_space<vmem>>, vector<7x128xf32>
    %43 = arith.maximumf %41, %42 : vector<7x128xf32>
    %c106 = arith.constant 106 : index
    %c0_35 = arith.constant 0 : index
    %44 = tpu.strided_load %arg3[%c106, %c0_35] {strides = array<i32: 2, 1>} : memref<450x128xf32, #tpu.memory_space<vmem>>, vector<7x128xf32>
    %45 = arith.maximumf %43, %44 : vector<7x128xf32>
    %c21 = arith.constant 21 : index
    %c0_36 = arith.constant 0 : index
    %46 = vector.load %arg4[%c21, %c0_36] : memref<106x128xf32, #tpu.memory_space<vmem>>, vector<7x128xf32>
    tpu.vector_store %arg4[%c21, %c0_36], %45 {strides = array<i32>} : memref<106x128xf32, #tpu.memory_space<vmem>>, vector<7x128xf32>,
    %c120 = arith.constant 120 : index
    %c0_37 = arith.constant 0 : index
    %47 = tpu.strided_load %arg3[%c120, %c0_37] {strides = array<i32: 2, 1>} : memref<450x128xf32, #tpu.memory_space<vmem>>, vector<7x128xf32>
    %c121 = arith.constant 121 : index
    %c0_38 = arith.constant 0 : index
    %48 = tpu.strided_load %arg3[%c121, %c0_38] {strides = array<i32: 2, 1>} : memref<450x128xf32, #tpu.memory_space<vmem>>, vector<7x128xf32>
    %49 = arith.maximumf %47, %48 : vector<7x128xf32>
    %c135 = arith.constant 135 : index
    %c0_39 = arith.constant 0 : index
    %50 = tpu.strided_load %arg3[%c135, %c0_39] {strides = array<i32: 2, 1>} : memref<450x128xf32, #tpu.memory_space<vmem>>, vector<7x128xf32>
    %51 = arith.maximumf %49, %50 : vector<7x128xf32>
    %c136 = arith.constant 136 : index
    %c0_40 = arith.constant 0 : index
    %52 = tpu.strided_load %arg3[%c136, %c0_40] {strides = array<i32: 2, 1>} : memref<450x128xf32, #tpu.memory_space<vmem>>, vector<7x128xf32>
    %53 = arith.maximumf %51, %52 : vector<7x128xf32>
    %c28 = arith.constant 28 : index
    %c0_41 = arith.constant 0 : index
    %54 = vector.load %arg4[%c28, %c0_41] : memref<106x128xf32, #tpu.memory_space<vmem>>, vector<7x128xf32>
    tpu.vector_store %arg4[%c28, %c0_41], %53 {strides = array<i32>} : memref<106x128xf32, #tpu.memory_space<vmem>>, vector<7x128xf32>,
    %c150 = arith.constant 150 : index
    %c0_42 = arith.constant 0 : index
    %55 = tpu.strided_load %arg3[%c150, %c0_42] {strides = array<i32: 2, 1>} : memref<450x128xf32, #tpu.memory_space<vmem>>, vector<7x128xf32>
    %c151 = arith.constant 151 : index
    %c0_43 = arith.constant 0 : index
    %56 = tpu.strided_load %arg3[%c151, %c0_43] {strides = array<i32: 2, 1>} : memref<450x128xf32, #tpu.memory_space<vmem>>, vector<7x128xf32>
    %57 = arith.maximumf %55, %56 : vector<7x128xf32>
    %c165 = arith.constant 165 : index
    %c0_44 = arith.constant 0 : index
    %58 = tpu.strided_load %arg3[%c165, %c0_44] {strides = array<i32: 2, 1>} : memref<450x128xf32, #tpu.memory_space<vmem>>, vector<7x128xf32>
    %59 = arith.maximumf %57, %58 : vector<7x128xf32>
    %c166 = arith.constant 166 : index
    %c0_45 = arith.constant 0 : index
    %60 = tpu.strided_load %arg3[%c166, %c0_45] {strides = array<i32: 2, 1>} : memref<450x128xf32, #tpu.memory_space<vmem>>, vector<7x128xf32>
    %61 = arith.maximumf %59, %60 : vector<7x128xf32>
    %c35 = arith.constant 35 : index
    %c0_46 = arith.constant 0 : index
    %62 = vector.load %arg4[%c35, %c0_46] : memref<106x128xf32, #tpu.memory_space<vmem>>, vector<7x128xf32>
    tpu.vector_store %arg4[%c35, %c0_46], %61 {strides = array<i32>} : memref<106x128xf32, #tpu.memory_space<vmem>>, vector<7x128xf32>,
    %c180 = arith.constant 180 : index
    %c0_47 = arith.constant 0 : index
    %63 = tpu.strided_load %arg3[%c180, %c0_47] {strides = array<i32: 2, 1>} : memref<450x128xf32, #tpu.memory_space<vmem>>, vector<7x128xf32>
    %c181 = arith.constant 181 : index
    %c0_48 = arith.constant 0 : index
    %64 = tpu.strided_load %arg3[%c181, %c0_48] {strides = array<i32: 2, 1>} : memref<450x128xf32, #tpu.memory_space<vmem>>, vector<7x128xf32>
    %65 = arith.maximumf %63, %64 : vector<7x128xf32>
    %c195 = arith.constant 195 : index
    %c0_49 = arith.constant 0 : index
    %66 = tpu.strided_load %arg3[%c195, %c0_49] {strides = array<i32: 2, 1>} : memref<450x128xf32, #tpu.memory_space<vmem>>, vector<7x128xf32>
    %67 = arith.maximumf %65, %66 : vector<7x128xf32>
    %c196 = arith.constant 196 : index
    %c0_50 = arith.constant 0 : index
    %68 = tpu.strided_load %arg3[%c196, %c0_50] {strides = array<i32: 2, 1>} : memref<450x128xf32, #tpu.memory_space<vmem>>, vector<7x128xf32>
    %69 = arith.maximumf %67, %68 : vector<7x128xf32>
    %c42 = arith.constant 42 : index
    %c0_51 = arith.constant 0 : index
    %70 = vector.load %arg4[%c42, %c0_51] : memref<106x128xf32, #tpu.memory_space<vmem>>, vector<7x128xf32>
    tpu.vector_store %arg4[%c42, %c0_51], %69 {strides = array<i32>} : memref<106x128xf32, #tpu.memory_space<vmem>>, vector<7x128xf32>,
    %c225 = arith.constant 225 : index
    %c0_52 = arith.constant 0 : index
    %71 = tpu.strided_load %arg3[%c225, %c0_52] {strides = array<i32: 2, 1>} : memref<450x128xf32, #tpu.memory_space<vmem>>, vector<7x128xf32>
    %c226 = arith.constant 226 : index
    %c0_53 = arith.constant 0 : index
    %72 = tpu.strided_load %arg3[%c226, %c0_53] {strides = array<i32: 2, 1>} : memref<450x128xf32, #tpu.memory_space<vmem>>, vector<7x128xf32>
    %73 = arith.maximumf %71, %72 : vector<7x128xf32>
    %c240 = arith.constant 240 : index
    %c0_54 = arith.constant 0 : index
    %74 = tpu.strided_load %arg3[%c240, %c0_54] {strides = array<i32: 2, 1>} : memref<450x128xf32, #tpu.memory_space<vmem>>, vector<7x128xf32>
    %75 = arith.maximumf %73, %74 : vector<7x128xf32>
    %c241 = arith.constant 241 : index
    %c0_55 = arith.constant 0 : index
    %76 = tpu.strided_load %arg3[%c241, %c0_55] {strides = array<i32: 2, 1>} : memref<450x128xf32, #tpu.memory_space<vmem>>, vector<7x128xf32>
    %77 = arith.maximumf %75, %76 : vector<7x128xf32>
    %c49 = arith.constant 49 : index
    %c0_56 = arith.constant 0 : index
    %78 = vector.load %arg4[%c49, %c0_56] : memref<106x128xf32, #tpu.memory_space<vmem>>, vector<7x128xf32>
    tpu.vector_store %arg4[%c49, %c0_56], %77 {strides = array<i32>} : memref<106x128xf32, #tpu.memory_space<vmem>>, vector<7x128xf32>,
    %c255 = arith.constant 255 : index
    %c0_57 = arith.constant 0 : index
    %79 = tpu.strided_load %arg3[%c255, %c0_57] {strides = array<i32: 2, 1>} : memref<450x128xf32, #tpu.memory_space<vmem>>, vector<7x128xf32>
    %c256 = arith.constant 256 : index
    %c0_58 = arith.constant 0 : index
    %80 = tpu.strided_load %arg3[%c256, %c0_58] {strides = array<i32: 2, 1>} : memref<450x128xf32, #tpu.memory_space<vmem>>, vector<7x128xf32>
    %81 = arith.maximumf %79, %80 : vector<7x128xf32>
    %c270 = arith.constant 270 : index
    %c0_59 = arith.constant 0 : index
    %82 = tpu.strided_load %arg3[%c270, %c0_59] {strides = array<i32: 2, 1>} : memref<450x128xf32, #tpu.memory_space<vmem>>, vector<7x128xf32>
    %83 = arith.maximumf %81, %82 : vector<7x128xf32>
    %c271 = arith.constant 271 : index
    %c0_60 = arith.constant 0 : index
    %84 = tpu.strided_load %arg3[%c271, %c0_60] {strides = array<i32: 2, 1>} : memref<450x128xf32, #tpu.memory_space<vmem>>, vector<7x128xf32>
    %85 = arith.maximumf %83, %84 : vector<7x128xf32>
    %c56 = arith.constant 56 : index
    %c0_61 = arith.constant 0 : index
    %86 = vector.load %arg4[%c56, %c0_61] : memref<106x128xf32, #tpu.memory_space<vmem>>, vector<7x128xf32>
    tpu.vector_store %arg4[%c56, %c0_61], %85 {strides = array<i32>} : memref<106x128xf32, #tpu.memory_space<vmem>>, vector<7x128xf32>,
    %c285 = arith.constant 285 : index
    %c0_62 = arith.constant 0 : index
    %87 = tpu.strided_load %arg3[%c285, %c0_62] {strides = array<i32: 2, 1>} : memref<450x128xf32, #tpu.memory_space<vmem>>, vector<7x128xf32>
    %c286 = arith.constant 286 : index
    %c0_63 = arith.constant 0 : index
    %88 = tpu.strided_load %arg3[%c286, %c0_63] {strides = array<i32: 2, 1>} : memref<450x128xf32, #tpu.memory_space<vmem>>, vector<7x128xf32>
    %89 = arith.maximumf %87, %88 : vector<7x128xf32>
    %c300 = arith.constant 300 : index
    %c0_64 = arith.constant 0 : index
    %90 = tpu.strided_load %arg3[%c300, %c0_64] {strides = array<i32: 2, 1>} : memref<450x128xf32, #tpu.memory_space<vmem>>, vector<7x128xf32>
    %91 = arith.maximumf %89, %90 : vector<7x128xf32>
    %c301 = arith.constant 301 : index
    %c0_65 = arith.constant 0 : index
    %92 = tpu.strided_load %arg3[%c301, %c0_65] {strides = array<i32: 2, 1>} : memref<450x128xf32, #tpu.memory_space<vmem>>, vector<7x128xf32>
    %93 = arith.maximumf %91, %92 : vector<7x128xf32>
    %c63 = arith.constant 63 : index
    %c0_66 = arith.constant 0 : index
    %94 = vector.load %arg4[%c63, %c0_66] : memref<106x128xf32, #tpu.memory_space<vmem>>, vector<7x128xf32>
    tpu.vector_store %arg4[%c63, %c0_66], %93 {strides = array<i32>} : memref<106x128xf32, #tpu.memory_space<vmem>>, vector<7x128xf32>,
    %c315 = arith.constant 315 : index
    %c0_67 = arith.constant 0 : index
    %95 = tpu.strided_load %arg3[%c315, %c0_67] {strides = array<i32: 2, 1>} : memref<450x128xf32, #tpu.memory_space<vmem>>, vector<7x128xf32>
    %c316 = arith.constant 316 : index
    %c0_68 = arith.constant 0 : index
    %96 = tpu.strided_load %arg3[%c316, %c0_68] {strides = array<i32: 2, 1>} : memref<450x128xf32, #tpu.memory_space<vmem>>, vector<7x128xf32>
    %97 = arith.maximumf %95, %96 : vector<7x128xf32>
    %c330 = arith.constant 330 : index
    %c0_69 = arith.constant 0 : index
    %98 = tpu.strided_load %arg3[%c330, %c0_69] {strides = array<i32: 2, 1>} : memref<450x128xf32, #tpu.memory_space<vmem>>, vector<7x128xf32>
    %99 = arith.maximumf %97, %98 : vector<7x128xf32>
    %c331 = arith.constant 331 : index
    %c0_70 = arith.constant 0 : index
    %100 = tpu.strided_load %arg3[%c331, %c0_70] {strides = array<i32: 2, 1>} : memref<450x128xf32, #tpu.memory_space<vmem>>, vector<7x128xf32>
    %101 = arith.maximumf %99, %100 : vector<7x128xf32>
    %c70 = arith.constant 70 : index
    %c0_71 = arith.constant 0 : index
    %102 = vector.load %arg4[%c70, %c0_71] : memref<106x128xf32, #tpu.memory_space<vmem>>, vector<7x128xf32>
    tpu.vector_store %arg4[%c70, %c0_71], %101 {strides = array<i32>} : memref<106x128xf32, #tpu.memory_space<vmem>>, vector<7x128xf32>,
    %c345 = arith.constant 345 : index
    %c0_72 = arith.constant 0 : index
    %103 = tpu.strided_load %arg3[%c345, %c0_72] {strides = array<i32: 2, 1>} : memref<450x128xf32, #tpu.memory_space<vmem>>, vector<7x128xf32>
    %c346 = arith.constant 346 : index
    %c0_73 = arith.constant 0 : index
    %104 = tpu.strided_load %arg3[%c346, %c0_73] {strides = array<i32: 2, 1>} : memref<450x128xf32, #tpu.memory_space<vmem>>, vector<7x128xf32>
    %105 = arith.maximumf %103, %104 : vector<7x128xf32>
    %c360 = arith.constant 360 : index
    %c0_74 = arith.constant 0 : index
    %106 = tpu.strided_load %arg3[%c360, %c0_74] {strides = array<i32: 2, 1>} : memref<450x128xf32, #tpu.memory_space<vmem>>, vector<7x128xf32>
    %107 = arith.maximumf %105, %106 : vector<7x128xf32>
    %c361 = arith.constant 361 : index
    %c0_75 = arith.constant 0 : index
    %108 = tpu.strided_load %arg3[%c361, %c0_75] {strides = array<i32: 2, 1>} : memref<450x128xf32, #tpu.memory_space<vmem>>, vector<7x128xf32>
    %109 = arith.maximumf %107, %108 : vector<7x128xf32>
    %c77 = arith.constant 77 : index
    %c0_76 = arith.constant 0 : index
    %110 = vector.load %arg4[%c77, %c0_76] : memref<106x128xf32, #tpu.memory_space<vmem>>, vector<7x128xf32>
    tpu.vector_store %arg4[%c77, %c0_76], %109 {strides = array<i32>} : memref<106x128xf32, #tpu.memory_space<vmem>>, vector<7x128xf32>,
    %c375 = arith.constant 375 : index
    %c0_77 = arith.constant 0 : index
    %111 = tpu.strided_load %arg3[%c375, %c0_77] {strides = array<i32: 2, 1>} : memref<450x128xf32, #tpu.memory_space<vmem>>, vector<7x128xf32>
    %c376 = arith.constant 376 : index
    %c0_78 = arith.constant 0 : index
    %112 = tpu.strided_load %arg3[%c376, %c0_78] {strides = array<i32: 2, 1>} : memref<450x128xf32, #tpu.memory_space<vmem>>, vector<7x128xf32>
    %113 = arith.maximumf %111, %112 : vector<7x128xf32>
    %c390 = arith.constant 390 : index
    %c0_79 = arith.constant 0 : index
    %114 = tpu.strided_load %arg3[%c390, %c0_79] {strides = array<i32: 2, 1>} : memref<450x128xf32, #tpu.memory_space<vmem>>, vector<7x128xf32>
    %115 = arith.maximumf %113, %114 : vector<7x128xf32>
    %c391 = arith.constant 391 : index
    %c0_80 = arith.constant 0 : index
    %116 = tpu.strided_load %arg3[%c391, %c0_80] {strides = array<i32: 2, 1>} : memref<450x128xf32, #tpu.memory_space<vmem>>, vector<7x128xf32>
    %117 = arith.maximumf %115, %116 : vector<7x128xf32>
    %c84 = arith.constant 84 : index
    %c0_81 = arith.constant 0 : index
    %118 = vector.load %arg4[%c84, %c0_81] : memref<106x128xf32, #tpu.memory_space<vmem>>, vector<7x128xf32>
    tpu.vector_store %arg4[%c84, %c0_81], %117 {strides = array<i32>} : memref<106x128xf32, #tpu.memory_space<vmem>>, vector<7x128xf32>,
    %c405 = arith.constant 405 : index
    %c0_82 = arith.constant 0 : index
    %119 = tpu.strided_load %arg3[%c405, %c0_82] {strides = array<i32: 2, 1>} : memref<450x128xf32, #tpu.memory_space<vmem>>, vector<7x128xf32>
    %c406 = arith.constant 406 : index
    %c0_83 = arith.constant 0 : index
    %120 = tpu.strided_load %arg3[%c406, %c0_83] {strides = array<i32: 2, 1>} : memref<450x128xf32, #tpu.memory_space<vmem>>, vector<7x128xf32>
    %121 = arith.maximumf %119, %120 : vector<7x128xf32>
    %c420 = arith.constant 420 : index
    %c0_84 = arith.constant 0 : index
    %122 = tpu.strided_load %arg3[%c420, %c0_84] {strides = array<i32: 2, 1>} : memref<450x128xf32, #tpu.memory_space<vmem>>, vector<7x128xf32>
    %123 = arith.maximumf %121, %122 : vector<7x128xf32>
    %c421 = arith.constant 421 : index
    %c0_85 = arith.constant 0 : index
    %124 = tpu.strided_load %arg3[%c421, %c0_85] {strides = array<i32: 2, 1>} : memref<450x128xf32, #tpu.memory_space<vmem>>, vector<7x128xf32>
    %125 = arith.maximumf %123, %124 : vector<7x128xf32>
    %c91_86 = arith.constant 91 : index
    %c0_87 = arith.constant 0 : index
    %126 = vector.load %arg4[%c91_86, %c0_87] : memref<106x128xf32, #tpu.memory_space<vmem>>, vector<7x128xf32>
    tpu.vector_store %arg4[%c91_86, %c0_87], %125 {strides = array<i32>} : memref<106x128xf32, #tpu.memory_space<vmem>>, vector<7x128xf32>,
    %c0_88 = arith.constant 0 : index
    %c0_89 = arith.constant 0 : index
    %127 = vector.load %arg4[%c0_88, %c0_89] : memref<106x128xf32, #tpu.memory_space<vmem>>, vector<98x128xf32>
    %128 = vector.extract_strided_slice %127 {offsets = [0, 0], sizes = [98, 16], strides = [1, 1]} : vector<98x128xf32> to vector<98x16xf32>
    %c1_90 = arith.constant 1 : index
    %c0_91 = arith.constant 0 : index
    %129 = vector.load %arg4[%c1_90, %c0_91] : memref<106x128xf32, #tpu.memory_space<vmem>>, vector<98x128xf32>
    %130 = vector.extract_strided_slice %129 {offsets = [0, 0], sizes = [98, 16], strides = [1, 1]} : vector<98x128xf32> to vector<98x16xf32>
    %c7_92 = arith.constant 7 : index
    %c0_93 = arith.constant 0 : index
    %131 = vector.load %arg4[%c7_92, %c0_93] : memref<106x128xf32, #tpu.memory_space<vmem>>, vector<98x128xf32>
    %132 = vector.extract_strided_slice %131 {offsets = [0, 0], sizes = [98, 16], strides = [1, 1]} : vector<98x128xf32> to vector<98x16xf32>
    %c8 = arith.constant 8 : index
    %c0_94 = arith.constant 0 : index
    %133 = vector.load %arg4[%c8, %c0_94] : memref<106x128xf32, #tpu.memory_space<vmem>>, vector<98x128xf32>
    %134 = vector.extract_strided_slice %133 {offsets = [0, 0], sizes = [98, 16], strides = [1, 1]} : vector<98x128xf32> to vector<98x16xf32>
    %135 = tpu.concatenate %128, %130, %132, %134 in 1 : vector<98x16xf32>, vector<98x16xf32>, vector<98x16xf32>, vector<98x16xf32> -> vector<98x64xf32>
    %c40 = arith.constant 40 : index
    %c0_95 = arith.constant 0 : index
    %136 = vector.load %arg1[%c40, %c0_95] : memref<488x128xf32, #tpu.memory_space<vmem>>, vector<64x128xf32>
    %c104 = arith.constant 104 : index
    %c0_96 = arith.constant 0 : index
    %137 = vector.load %arg1[%c104, %c0_96] : memref<488x128xf32, #tpu.memory_space<vmem>>, vector<1x128xf32>
    %cst_97 = arith.constant dense<0.000000e+00> : vector<98x128xf32>
    %138 = tpu.matmul %135, %136, %cst_97 {dimension_numbers = #tpu.dot_dimension_numbers<[1], [0], [0], [1], [0, 0, 1, 1], [], []>} : vector<98x64xf32>, vector<64x128xf32>, vector<98x128xf32> -> vector<98x128xf32>
    %139 = vector.broadcast %137 : vector<1x128xf32> to vector<98x128xf32>
    %140 = arith.addf %138, %139 : vector<98x128xf32>
    %cst_98 = arith.constant 0.000000e+00 : f32
    %141 = vector.broadcast %cst_98 : f32 to vector<98x128xf32>
    %142 = arith.maximumf %140, %141 : vector<98x128xf32>
    %c0_99 = arith.constant 0 : index
    %c0_100 = arith.constant 0 : index
    %143 = vector.load %arg5[%c0_99, %c0_100] : memref<98x128xf32, #tpu.memory_space<vmem>>, vector<98x128xf32>
    tpu.vector_store %arg5[%c0_99, %c0_100], %142 {strides = array<i32>} : memref<98x128xf32, #tpu.memory_space<vmem>>, vector<98x128xf32>,
    %cst_101 = arith.constant 0.000000e+00 : f32
    %144 = vector.broadcast %cst_101 : f32 to vector<37x128xf32>
    %c0_102 = arith.constant 0 : index
    %c0_103 = arith.constant 0 : index
    %145 = vector.load %arg6[%c0_102, %c0_103] : memref<37x128xf32, #tpu.memory_space<vmem>>, vector<37x128xf32>
    tpu.vector_store %arg6[%c0_102, %c0_103], %144 {strides = array<i32>} : memref<37x128xf32, #tpu.memory_space<vmem>>, vector<37x128xf32>,
    %c0_104 = arith.constant 0 : index
    %c0_105 = arith.constant 0 : index
    %146 = tpu.strided_load %arg5[%c0_104, %c0_105] {strides = array<i32: 2, 1>} : memref<98x128xf32, #tpu.memory_space<vmem>>, vector<3x128xf32>
    %c1_106 = arith.constant 1 : index
    %c0_107 = arith.constant 0 : index
    %147 = tpu.strided_load %arg5[%c1_106, %c0_107] {strides = array<i32: 2, 1>} : memref<98x128xf32, #tpu.memory_space<vmem>>, vector<3x128xf32>
    %148 = arith.maximumf %146, %147 : vector<3x128xf32>
    %c7_108 = arith.constant 7 : index
    %c0_109 = arith.constant 0 : index
    %149 = tpu.strided_load %arg5[%c7_108, %c0_109] {strides = array<i32: 2, 1>} : memref<98x128xf32, #tpu.memory_space<vmem>>, vector<3x128xf32>
    %150 = arith.maximumf %148, %149 : vector<3x128xf32>
    %c8_110 = arith.constant 8 : index
    %c0_111 = arith.constant 0 : index
    %151 = tpu.strided_load %arg5[%c8_110, %c0_111] {strides = array<i32: 2, 1>} : memref<98x128xf32, #tpu.memory_space<vmem>>, vector<3x128xf32>
    %152 = arith.maximumf %150, %151 : vector<3x128xf32>
    %c5 = arith.constant 5 : index
    %c0_112 = arith.constant 0 : index
    %153 = vector.load %arg6[%c5, %c0_112] : memref<37x128xf32, #tpu.memory_space<vmem>>, vector<3x128xf32>
    tpu.vector_store %arg6[%c5, %c0_112], %152 {strides = array<i32>} : memref<37x128xf32, #tpu.memory_space<vmem>>, vector<3x128xf32>,
    %c14_113 = arith.constant 14 : index
    %c0_114 = arith.constant 0 : index
    %154 = tpu.strided_load %arg5[%c14_113, %c0_114] {strides = array<i32: 2, 1>} : memref<98x128xf32, #tpu.memory_space<vmem>>, vector<3x128xf32>
    %c15_115 = arith.constant 15 : index
    %c0_116 = arith.constant 0 : index
    %155 = tpu.strided_load %arg5[%c15_115, %c0_116] {strides = array<i32: 2, 1>} : memref<98x128xf32, #tpu.memory_space<vmem>>, vector<3x128xf32>
    %156 = arith.maximumf %154, %155 : vector<3x128xf32>
    %c21_117 = arith.constant 21 : index
    %c0_118 = arith.constant 0 : index
    %157 = tpu.strided_load %arg5[%c21_117, %c0_118] {strides = array<i32: 2, 1>} : memref<98x128xf32, #tpu.memory_space<vmem>>, vector<3x128xf32>
    %158 = arith.maximumf %156, %157 : vector<3x128xf32>
    %c22 = arith.constant 22 : index
    %c0_119 = arith.constant 0 : index
    %159 = tpu.strided_load %arg5[%c22, %c0_119] {strides = array<i32: 2, 1>} : memref<98x128xf32, #tpu.memory_space<vmem>>, vector<3x128xf32>
    %160 = arith.maximumf %158, %159 : vector<3x128xf32>
    %c9 = arith.constant 9 : index
    %c0_120 = arith.constant 0 : index
    %161 = vector.load %arg6[%c9, %c0_120] : memref<37x128xf32, #tpu.memory_space<vmem>>, vector<3x128xf32>
    tpu.vector_store %arg6[%c9, %c0_120], %160 {strides = array<i32>} : memref<37x128xf32, #tpu.memory_space<vmem>>, vector<3x128xf32>,
    %c28_121 = arith.constant 28 : index
    %c0_122 = arith.constant 0 : index
    %162 = tpu.strided_load %arg5[%c28_121, %c0_122] {strides = array<i32: 2, 1>} : memref<98x128xf32, #tpu.memory_space<vmem>>, vector<3x128xf32>
    %c29 = arith.constant 29 : index
    %c0_123 = arith.constant 0 : index
    %163 = tpu.strided_load %arg5[%c29, %c0_123] {strides = array<i32: 2, 1>} : memref<98x128xf32, #tpu.memory_space<vmem>>, vector<3x128xf32>
    %164 = arith.maximumf %162, %163 : vector<3x128xf32>
    %c35_124 = arith.constant 35 : index
    %c0_125 = arith.constant 0 : index
    %165 = tpu.strided_load %arg5[%c35_124, %c0_125] {strides = array<i32: 2, 1>} : memref<98x128xf32, #tpu.memory_space<vmem>>, vector<3x128xf32>
    %166 = arith.maximumf %164, %165 : vector<3x128xf32>
    %c36 = arith.constant 36 : index
    %c0_126 = arith.constant 0 : index
    %167 = tpu.strided_load %arg5[%c36, %c0_126] {strides = array<i32: 2, 1>} : memref<98x128xf32, #tpu.memory_space<vmem>>, vector<3x128xf32>
    %168 = arith.maximumf %166, %167 : vector<3x128xf32>
    %c13 = arith.constant 13 : index
    %c0_127 = arith.constant 0 : index
    %169 = vector.load %arg6[%c13, %c0_127] : memref<37x128xf32, #tpu.memory_space<vmem>>, vector<3x128xf32>
    tpu.vector_store %arg6[%c13, %c0_127], %168 {strides = array<i32>} : memref<37x128xf32, #tpu.memory_space<vmem>>, vector<3x128xf32>,
    %c49_128 = arith.constant 49 : index
    %c0_129 = arith.constant 0 : index
    %170 = tpu.strided_load %arg5[%c49_128, %c0_129] {strides = array<i32: 2, 1>} : memref<98x128xf32, #tpu.memory_space<vmem>>, vector<3x128xf32>
    %c50 = arith.constant 50 : index
    %c0_130 = arith.constant 0 : index
    %171 = tpu.strided_load %arg5[%c50, %c0_130] {strides = array<i32: 2, 1>} : memref<98x128xf32, #tpu.memory_space<vmem>>, vector<3x128xf32>
    %172 = arith.maximumf %170, %171 : vector<3x128xf32>
    %c56_131 = arith.constant 56 : index
    %c0_132 = arith.constant 0 : index
    %173 = tpu.strided_load %arg5[%c56_131, %c0_132] {strides = array<i32: 2, 1>} : memref<98x128xf32, #tpu.memory_space<vmem>>, vector<3x128xf32>
    %174 = arith.maximumf %172, %173 : vector<3x128xf32>
    %c57 = arith.constant 57 : index
    %c0_133 = arith.constant 0 : index
    %175 = tpu.strided_load %arg5[%c57, %c0_133] {strides = array<i32: 2, 1>} : memref<98x128xf32, #tpu.memory_space<vmem>>, vector<3x128xf32>
    %176 = arith.maximumf %174, %175 : vector<3x128xf32>
    %c21_134 = arith.constant 21 : index
    %c0_135 = arith.constant 0 : index
    %177 = vector.load %arg6[%c21_134, %c0_135] : memref<37x128xf32, #tpu.memory_space<vmem>>, vector<3x128xf32>
    tpu.vector_store %arg6[%c21_134, %c0_135], %176 {strides = array<i32>} : memref<37x128xf32, #tpu.memory_space<vmem>>, vector<3x128xf32>,
    %c63_136 = arith.constant 63 : index
    %c0_137 = arith.constant 0 : index
    %178 = tpu.strided_load %arg5[%c63_136, %c0_137] {strides = array<i32: 2, 1>} : memref<98x128xf32, #tpu.memory_space<vmem>>, vector<3x128xf32>
    %c64 = arith.constant 64 : index
    %c0_138 = arith.constant 0 : index
    %179 = tpu.strided_load %arg5[%c64, %c0_138] {strides = array<i32: 2, 1>} : memref<98x128xf32, #tpu.memory_space<vmem>>, vector<3x128xf32>
    %180 = arith.maximumf %178, %179 : vector<3x128xf32>
    %c70_139 = arith.constant 70 : index
    %c0_140 = arith.constant 0 : index
    %181 = tpu.strided_load %arg5[%c70_139, %c0_140] {strides = array<i32: 2, 1>} : memref<98x128xf32, #tpu.memory_space<vmem>>, vector<3x128xf32>
    %182 = arith.maximumf %180, %181 : vector<3x128xf32>
    %c71 = arith.constant 71 : index
    %c0_141 = arith.constant 0 : index
    %183 = tpu.strided_load %arg5[%c71, %c0_141] {strides = array<i32: 2, 1>} : memref<98x128xf32, #tpu.memory_space<vmem>>, vector<3x128xf32>
    %184 = arith.maximumf %182, %183 : vector<3x128xf32>
    %c25 = arith.constant 25 : index
    %c0_142 = arith.constant 0 : index
    %185 = vector.load %arg6[%c25, %c0_142] : memref<37x128xf32, #tpu.memory_space<vmem>>, vector<3x128xf32>
    tpu.vector_store %arg6[%c25, %c0_142], %184 {strides = array<i32>} : memref<37x128xf32, #tpu.memory_space<vmem>>, vector<3x128xf32>,
    %c77_143 = arith.constant 77 : index
    %c0_144 = arith.constant 0 : index
    %186 = tpu.strided_load %arg5[%c77_143, %c0_144] {strides = array<i32: 2, 1>} : memref<98x128xf32, #tpu.memory_space<vmem>>, vector<3x128xf32>
    %c78 = arith.constant 78 : index
    %c0_145 = arith.constant 0 : index
    %187 = tpu.strided_load %arg5[%c78, %c0_145] {strides = array<i32: 2, 1>} : memref<98x128xf32, #tpu.memory_space<vmem>>, vector<3x128xf32>
    %188 = arith.maximumf %186, %187 : vector<3x128xf32>
    %c84_146 = arith.constant 84 : index
    %c0_147 = arith.constant 0 : index
    %189 = tpu.strided_load %arg5[%c84_146, %c0_147] {strides = array<i32: 2, 1>} : memref<98x128xf32, #tpu.memory_space<vmem>>, vector<3x128xf32>
    %190 = arith.maximumf %188, %189 : vector<3x128xf32>
    %c85 = arith.constant 85 : index
    %c0_148 = arith.constant 0 : index
    %191 = tpu.strided_load %arg5[%c85, %c0_148] {strides = array<i32: 2, 1>} : memref<98x128xf32, #tpu.memory_space<vmem>>, vector<3x128xf32>
    %192 = arith.maximumf %190, %191 : vector<3x128xf32>
    %c29_149 = arith.constant 29 : index
    %c0_150 = arith.constant 0 : index
    %193 = vector.load %arg6[%c29_149, %c0_150] : memref<37x128xf32, #tpu.memory_space<vmem>>, vector<3x128xf32>
    tpu.vector_store %arg6[%c29_149, %c0_150], %192 {strides = array<i32>} : memref<37x128xf32, #tpu.memory_space<vmem>>, vector<3x128xf32>,
    %c0_151 = arith.constant 0 : index
    %c0_152 = arith.constant 0 : index
    %194 = vector.load %arg6[%c0_151, %c0_152] : memref<37x128xf32, #tpu.memory_space<vmem>>, vector<32x128xf32>
    %195 = vector.extract_strided_slice %194 {offsets = [0, 0], sizes = [32, 32], strides = [1, 1]} : vector<32x128xf32> to vector<32x32xf32>
    %c1_153 = arith.constant 1 : index
    %c0_154 = arith.constant 0 : index
    %196 = vector.load %arg6[%c1_153, %c0_154] : memref<37x128xf32, #tpu.memory_space<vmem>>, vector<32x128xf32>
    %197 = vector.extract_strided_slice %196 {offsets = [0, 0], sizes = [32, 32], strides = [1, 1]} : vector<32x128xf32> to vector<32x32xf32>
    %c4 = arith.constant 4 : index
    %c0_155 = arith.constant 0 : index
    %198 = vector.load %arg6[%c4, %c0_155] : memref<37x128xf32, #tpu.memory_space<vmem>>, vector<32x128xf32>
    %199 = vector.extract_strided_slice %198 {offsets = [0, 0], sizes = [32, 32], strides = [1, 1]} : vector<32x128xf32> to vector<32x32xf32>
    %c5_156 = arith.constant 5 : index
    %c0_157 = arith.constant 0 : index
    %200 = vector.load %arg6[%c5_156, %c0_157] : memref<37x128xf32, #tpu.memory_space<vmem>>, vector<32x128xf32>
    %201 = vector.extract_strided_slice %200 {offsets = [0, 0], sizes = [32, 32], strides = [1, 1]} : vector<32x128xf32> to vector<32x32xf32>
    %202 = tpu.concatenate %195, %197, %199, %201 in 1 : vector<32x32xf32>, vector<32x32xf32>, vector<32x32xf32>, vector<32x32xf32> -> vector<32x128xf32>
    %c112 = arith.constant 112 : index
    %c0_158 = arith.constant 0 : index
    %203 = vector.load %arg1[%c112, %c0_158] : memref<488x128xf32, #tpu.memory_space<vmem>>, vector<128x128xf32>
    %c240_159 = arith.constant 240 : index
    %c0_160 = arith.constant 0 : index
    %204 = vector.load %arg1[%c240_159, %c0_160] : memref<488x128xf32, #tpu.memory_space<vmem>>, vector<1x128xf32>
    %cst_161 = arith.constant dense<0.000000e+00> : vector<32x128xf32>
    %205 = tpu.matmul %202, %203, %cst_161 {dimension_numbers = #tpu.dot_dimension_numbers<[1], [0], [0], [1], [0, 0, 1, 1], [], []>} : vector<32x128xf32>, vector<128x128xf32>, vector<32x128xf32> -> vector<32x128xf32>
    %206 = vector.broadcast %204 : vector<1x128xf32> to vector<32x128xf32>
    %207 = arith.addf %205, %206 : vector<32x128xf32>
    %cst_162 = arith.constant 0.000000e+00 : f32
    %208 = vector.broadcast %cst_162 : f32 to vector<32x128xf32>
    %209 = arith.maximumf %207, %208 : vector<32x128xf32>
    %210 = tpu.iota {dimensions = array<i32: 0>} : vector<32x1xi32>
    %c16_i32 = arith.constant 16 : i32
    %c0_i32 = arith.constant 0 : i32
    %211 = arith.cmpi eq, %c16_i32, %c0_i32 : i32
    %c1_i32 = arith.constant 1 : i32
    %212 = arith.select %211, %c1_i32, %c16_i32 : i32
    %213 = vector.broadcast %212 : i32 to vector<32x1xi32>
    %214 = arith.remsi %210, %213 : vector<32x1xi32>
    %c0_i32_163 = arith.constant 0 : i32
    %215 = vector.broadcast %c0_i32_163 : i32 to vector<32x1xi32>
    %216 = arith.cmpi ne, %214, %215 : vector<32x1xi32>
    %c0_i32_164 = arith.constant 0 : i32
    %217 = vector.broadcast %c0_i32_164 : i32 to vector<32x1xi32>
    %218 = arith.cmpi slt, %214, %217 : vector<32x1xi32>
    %c0_i32_165 = arith.constant 0 : i32
    %219 = arith.cmpi slt, %212, %c0_i32_165 : i32
    %220 = vector.broadcast %219 : i1 to vector<32x1xi1>
    %221 = vector.broadcast %220 : vector<32x1xi1> to vector<32x1xi1>
    %222 = arith.xori %218, %221 : vector<32x1xi1>
    %223 = arith.andi %222, %216 : vector<32x1xi1>
    %224 = vector.broadcast %212 : i32 to vector<32x1xi32>
    %225 = arith.addi %214, %224 : vector<32x1xi32>
    %226 = arith.select %223, %225, %214 : vector<32x1xi1>, vector<32x1xi32>
    %c4_i32 = arith.constant 4 : i32
    %c0_i32_166 = arith.constant 0 : i32
    %227 = arith.cmpi eq, %c4_i32, %c0_i32_166 : i32
    %c1_i32_167 = arith.constant 1 : i32
    %228 = arith.select %227, %c1_i32_167, %c4_i32 : i32
    %229 = vector.broadcast %228 : i32 to vector<32x1xi32>
    %230 = arith.remsi %226, %229 : vector<32x1xi32>
    %c0_i32_168 = arith.constant 0 : i32
    %231 = vector.broadcast %c0_i32_168 : i32 to vector<32x1xi32>
    %232 = arith.cmpi ne, %230, %231 : vector<32x1xi32>
    %c0_i32_169 = arith.constant 0 : i32
    %233 = vector.broadcast %c0_i32_169 : i32 to vector<32x1xi32>
    %234 = arith.cmpi slt, %230, %233 : vector<32x1xi32>
    %c0_i32_170 = arith.constant 0 : i32
    %235 = arith.cmpi slt, %228, %c0_i32_170 : i32
    %236 = vector.broadcast %235 : i1 to vector<32x1xi1>
    %237 = vector.broadcast %236 : vector<32x1xi1> to vector<32x1xi1>
    %238 = arith.xori %234, %237 : vector<32x1xi1>
    %239 = arith.andi %238, %232 : vector<32x1xi1>
    %240 = vector.broadcast %228 : i32 to vector<32x1xi32>
    %241 = arith.addi %230, %240 : vector<32x1xi32>
    %242 = arith.select %239, %241, %230 : vector<32x1xi1>, vector<32x1xi32>
    %c3_i32 = arith.constant 3 : i32
    %243 = vector.broadcast %c3_i32 : i32 to vector<32x1xi32>
    %244 = arith.cmpi slt, %242, %243 : vector<32x1xi32>
    %c12_i32 = arith.constant 12 : i32
    %245 = vector.broadcast %c12_i32 : i32 to vector<32x1xi32>
    %246 = arith.cmpi slt, %226, %245 : vector<32x1xi32>
    %247 = arith.andi %244, %246 : vector<32x1xi1>
    %248 = arith.extui %247 : vector<32x1xi1> to vector<32x1xi32>
    %249 = arith.sitofp %248 : vector<32x1xi32> to vector<32x1xf32>
    %cst_171 = arith.constant 0.000000e+00 : f32
    %250 = vector.broadcast %cst_171 : f32 to vector<5x128xf32>
    %c0_172 = arith.constant 0 : index
    %c0_173 = arith.constant 0 : index
    %251 = vector.load %arg7[%c0_172, %c0_173] : memref<37x128xf32, #tpu.memory_space<vmem>>, vector<5x128xf32>
    tpu.vector_store %arg7[%c0_172, %c0_173], %250 {strides = array<i32>} : memref<37x128xf32, #tpu.memory_space<vmem>>, vector<5x128xf32>,
    %252 = vector.broadcast %249 : vector<32x1xf32> to vector<32x128xf32>
    %253 = arith.mulf %209, %252 : vector<32x128xf32>
    %c5_174 = arith.constant 5 : index
    %c0_175 = arith.constant 0 : index
    %254 = vector.load %arg7[%c5_174, %c0_175] : memref<37x128xf32, #tpu.memory_space<vmem>>, vector<32x128xf32>
    tpu.vector_store %arg7[%c5_174, %c0_175], %253 {strides = array<i32>} : memref<37x128xf32, #tpu.memory_space<vmem>>, vector<32x128xf32>,
    %c0_176 = arith.constant 0 : index
    %c0_177 = arith.constant 0 : index
    %255 = vector.load %arg7[%c0_176, %c0_177] : memref<37x128xf32, #tpu.memory_space<vmem>>, vector<32x128xf32>
    %256 = vector.extract_strided_slice %255 {offsets = [0, 0], sizes = [32, 16], strides = [1, 1]} : vector<32x128xf32> to vector<32x16xf32>
    %c1_178 = arith.constant 1 : index
    %c0_179 = arith.constant 0 : index
    %257 = vector.load %arg7[%c1_178, %c0_179] : memref<37x128xf32, #tpu.memory_space<vmem>>, vector<32x128xf32>
    %258 = vector.extract_strided_slice %257 {offsets = [0, 0], sizes = [32, 16], strides = [1, 1]} : vector<32x128xf32> to vector<32x16xf32>
    %c4_180 = arith.constant 4 : index
    %c0_181 = arith.constant 0 : index
    %259 = vector.load %arg7[%c4_180, %c0_181] : memref<37x128xf32, #tpu.memory_space<vmem>>, vector<32x128xf32>
    %260 = vector.extract_strided_slice %259 {offsets = [0, 0], sizes = [32, 16], strides = [1, 1]} : vector<32x128xf32> to vector<32x16xf32>
    %c5_182 = arith.constant 5 : index
    %c0_183 = arith.constant 0 : index
    %261 = vector.load %arg7[%c5_182, %c0_183] : memref<37x128xf32, #tpu.memory_space<vmem>>, vector<32x128xf32>
    %262 = vector.extract_strided_slice %261 {offsets = [0, 0], sizes = [32, 16], strides = [1, 1]} : vector<32x128xf32> to vector<32x16xf32>
    %263 = tpu.concatenate %256, %258, %260, %262 in 1 : vector<32x16xf32>, vector<32x16xf32>, vector<32x16xf32>, vector<32x16xf32> -> vector<32x64xf32>
    %c248 = arith.constant 248 : index
    %c0_184 = arith.constant 0 : index
    %264 = vector.load %arg1[%c248, %c0_184] : memref<488x128xf32, #tpu.memory_space<vmem>>, vector<64x128xf32>
    %c312 = arith.constant 312 : index
    %c0_185 = arith.constant 0 : index
    %265 = vector.load %arg1[%c312, %c0_185] : memref<488x128xf32, #tpu.memory_space<vmem>>, vector<1x128xf32>
    %cst_186 = arith.constant dense<0.000000e+00> : vector<32x128xf32>
    %266 = tpu.matmul %263, %264, %cst_186 {dimension_numbers = #tpu.dot_dimension_numbers<[1], [0], [0], [1], [0, 0, 1, 1], [], []>} : vector<32x64xf32>, vector<64x128xf32>, vector<32x128xf32> -> vector<32x128xf32>
    %267 = vector.broadcast %265 : vector<1x128xf32> to vector<32x128xf32>
    %268 = arith.addf %266, %267 : vector<32x128xf32>
    %cst_187 = arith.constant 0.000000e+00 : f32
    %269 = vector.broadcast %cst_187 : f32 to vector<32x128xf32>
    %270 = arith.maximumf %268, %269 : vector<32x128xf32>
    %c0_188 = arith.constant 0 : index
    %c0_189 = arith.constant 0 : index
    %271 = vector.load %arg8[%c0_188, %c0_189] : memref<32x128xf32, #tpu.memory_space<vmem>>, vector<32x128xf32>
    tpu.vector_store %arg8[%c0_188, %c0_189], %270 {strides = array<i32>} : memref<32x128xf32, #tpu.memory_space<vmem>>, vector<32x128xf32>,
    %c0_190 = arith.constant 0 : index
    %c0_191 = arith.constant 0 : index
    %272 = tpu.strided_load %arg8[%c0_190, %c0_191] {strides = array<i32: 16, 1>} : memref<32x128xf32, #tpu.memory_space<vmem>>, vector<2x128xf32>
    %273 = vector.extract_strided_slice %272 {offsets = [0, 0], sizes = [2, 16], strides = [1, 1]} : vector<2x128xf32> to vector<2x16xf32>
    %c320 = arith.constant 320 : index
    %c0_192 = arith.constant 0 : index
    %274 = vector.load %arg1[%c320, %c0_192] : memref<488x128xf32, #tpu.memory_space<vmem>>, vector<16x128xf32>
    %cst_193 = arith.constant dense<0.000000e+00> : vector<2x128xf32>
    %275 = tpu.matmul %273, %274, %cst_193 {dimension_numbers = #tpu.dot_dimension_numbers<[1], [0], [0], [1], [0, 0, 1, 1], [], []>} : vector<2x16xf32>, vector<16x128xf32>, vector<2x128xf32> -> vector<2x128xf32>
    %c1_194 = arith.constant 1 : index
    %c0_195 = arith.constant 0 : index
    %276 = tpu.strided_load %arg8[%c1_194, %c0_195] {strides = array<i32: 16, 1>} : memref<32x128xf32, #tpu.memory_space<vmem>>, vector<2x128xf32>
    %277 = vector.extract_strided_slice %276 {offsets = [0, 0], sizes = [2, 16], strides = [1, 1]} : vector<2x128xf32> to vector<2x16xf32>
    %c336 = arith.constant 336 : index
    %c0_196 = arith.constant 0 : index
    %278 = vector.load %arg1[%c336, %c0_196] : memref<488x128xf32, #tpu.memory_space<vmem>>, vector<16x128xf32>
    %cst_197 = arith.constant dense<0.000000e+00> : vector<2x128xf32>
    %279 = tpu.matmul %277, %278, %cst_197 {dimension_numbers = #tpu.dot_dimension_numbers<[1], [0], [0], [1], [0, 0, 1, 1], [], []>} : vector<2x16xf32>, vector<16x128xf32>, vector<2x128xf32> -> vector<2x128xf32>
    %280 = arith.addf %275, %279 : vector<2x128xf32>
    %c2 = arith.constant 2 : index
    %c0_198 = arith.constant 0 : index
    %281 = tpu.strided_load %arg8[%c2, %c0_198] {strides = array<i32: 16, 1>} : memref<32x128xf32, #tpu.memory_space<vmem>>, vector<2x128xf32>
    %282 = vector.extract_strided_slice %281 {offsets = [0, 0], sizes = [2, 16], strides = [1, 1]} : vector<2x128xf32> to vector<2x16xf32>
    %c352 = arith.constant 352 : index
    %c0_199 = arith.constant 0 : index
    %283 = vector.load %arg1[%c352, %c0_199] : memref<488x128xf32, #tpu.memory_space<vmem>>, vector<16x128xf32>
    %cst_200 = arith.constant dense<0.000000e+00> : vector<2x128xf32>
    %284 = tpu.matmul %282, %283, %cst_200 {dimension_numbers = #tpu.dot_dimension_numbers<[1], [0], [0], [1], [0, 0, 1, 1], [], []>} : vector<2x16xf32>, vector<16x128xf32>, vector<2x128xf32> -> vector<2x128xf32>
    %285 = arith.addf %280, %284 : vector<2x128xf32>
    %c4_201 = arith.constant 4 : index
    %c0_202 = arith.constant 0 : index
    %286 = tpu.strided_load %arg8[%c4_201, %c0_202] {strides = array<i32: 16, 1>} : memref<32x128xf32, #tpu.memory_space<vmem>>, vector<2x128xf32>
    %287 = vector.extract_strided_slice %286 {offsets = [0, 0], sizes = [2, 16], strides = [1, 1]} : vector<2x128xf32> to vector<2x16xf32>
    %c368 = arith.constant 368 : index
    %c0_203 = arith.constant 0 : index
    %288 = vector.load %arg1[%c368, %c0_203] : memref<488x128xf32, #tpu.memory_space<vmem>>, vector<16x128xf32>
    %cst_204 = arith.constant dense<0.000000e+00> : vector<2x128xf32>
    %289 = tpu.matmul %287, %288, %cst_204 {dimension_numbers = #tpu.dot_dimension_numbers<[1], [0], [0], [1], [0, 0, 1, 1], [], []>} : vector<2x16xf32>, vector<16x128xf32>, vector<2x128xf32> -> vector<2x128xf32>
    %290 = arith.addf %285, %289 : vector<2x128xf32>
    %c5_205 = arith.constant 5 : index
    %c0_206 = arith.constant 0 : index
    %291 = tpu.strided_load %arg8[%c5_205, %c0_206] {strides = array<i32: 16, 1>} : memref<32x128xf32, #tpu.memory_space<vmem>>, vector<2x128xf32>
    %292 = vector.extract_strided_slice %291 {offsets = [0, 0], sizes = [2, 16], strides = [1, 1]} : vector<2x128xf32> to vector<2x16xf32>
    %c384 = arith.constant 384 : index
    %c0_207 = arith.constant 0 : index
    %293 = vector.load %arg1[%c384, %c0_207] : memref<488x128xf32, #tpu.memory_space<vmem>>, vector<16x128xf32>
    %cst_208 = arith.constant dense<0.000000e+00> : vector<2x128xf32>
    %294 = tpu.matmul %292, %293, %cst_208 {dimension_numbers = #tpu.dot_dimension_numbers<[1], [0], [0], [1], [0, 0, 1, 1], [], []>} : vector<2x16xf32>, vector<16x128xf32>, vector<2x128xf32> -> vector<2x128xf32>
    %295 = arith.addf %290, %294 : vector<2x128xf32>
    %c6 = arith.constant 6 : index
    %c0_209 = arith.constant 0 : index
    %296 = tpu.strided_load %arg8[%c6, %c0_209] {strides = array<i32: 16, 1>} : memref<32x128xf32, #tpu.memory_space<vmem>>, vector<2x128xf32>
    %297 = vector.extract_strided_slice %296 {offsets = [0, 0], sizes = [2, 16], strides = [1, 1]} : vector<2x128xf32> to vector<2x16xf32>
    %c400 = arith.constant 400 : index
    %c0_210 = arith.constant 0 : index
    %298 = vector.load %arg1[%c400, %c0_210] : memref<488x128xf32, #tpu.memory_space<vmem>>, vector<16x128xf32>
    %cst_211 = arith.constant dense<0.000000e+00> : vector<2x128xf32>
    %299 = tpu.matmul %297, %298, %cst_211 {dimension_numbers = #tpu.dot_dimension_numbers<[1], [0], [0], [1], [0, 0, 1, 1], [], []>} : vector<2x16xf32>, vector<16x128xf32>, vector<2x128xf32> -> vector<2x128xf32>
    %300 = arith.addf %295, %299 : vector<2x128xf32>
    %c8_212 = arith.constant 8 : index
    %c0_213 = arith.constant 0 : index
    %301 = tpu.strided_load %arg8[%c8_212, %c0_213] {strides = array<i32: 16, 1>} : memref<32x128xf32, #tpu.memory_space<vmem>>, vector<2x128xf32>
    %302 = vector.extract_strided_slice %301 {offsets = [0, 0], sizes = [2, 16], strides = [1, 1]} : vector<2x128xf32> to vector<2x16xf32>
    %c416 = arith.constant 416 : index
    %c0_214 = arith.constant 0 : index
    %303 = vector.load %arg1[%c416, %c0_214] : memref<488x128xf32, #tpu.memory_space<vmem>>, vector<16x128xf32>
    %cst_215 = arith.constant dense<0.000000e+00> : vector<2x128xf32>
    %304 = tpu.matmul %302, %303, %cst_215 {dimension_numbers = #tpu.dot_dimension_numbers<[1], [0], [0], [1], [0, 0, 1, 1], [], []>} : vector<2x16xf32>, vector<16x128xf32>, vector<2x128xf32> -> vector<2x128xf32>
    %305 = arith.addf %300, %304 : vector<2x128xf32>
    %c9_216 = arith.constant 9 : index
    %c0_217 = arith.constant 0 : index
    %306 = tpu.strided_load %arg8[%c9_216, %c0_217] {strides = array<i32: 16, 1>} : memref<32x128xf32, #tpu.memory_space<vmem>>, vector<2x128xf32>
    %307 = vector.extract_strided_slice %306 {offsets = [0, 0], sizes = [2, 16], strides = [1, 1]} : vector<2x128xf32> to vector<2x16xf32>
    %c432 = arith.constant 432 : index
    %c0_218 = arith.constant 0 : index
    %308 = vector.load %arg1[%c432, %c0_218] : memref<488x128xf32, #tpu.memory_space<vmem>>, vector<16x128xf32>
    %cst_219 = arith.constant dense<0.000000e+00> : vector<2x128xf32>
    %309 = tpu.matmul %307, %308, %cst_219 {dimension_numbers = #tpu.dot_dimension_numbers<[1], [0], [0], [1], [0, 0, 1, 1], [], []>} : vector<2x16xf32>, vector<16x128xf32>, vector<2x128xf32> -> vector<2x128xf32>
    %310 = arith.addf %305, %309 : vector<2x128xf32>
    %c10 = arith.constant 10 : index
    %c0_220 = arith.constant 0 : index
    %311 = tpu.strided_load %arg8[%c10, %c0_220] {strides = array<i32: 16, 1>} : memref<32x128xf32, #tpu.memory_space<vmem>>, vector<2x128xf32>
    %312 = vector.extract_strided_slice %311 {offsets = [0, 0], sizes = [2, 16], strides = [1, 1]} : vector<2x128xf32> to vector<2x16xf32>
    %c448 = arith.constant 448 : index
    %c0_221 = arith.constant 0 : index
    %313 = vector.load %arg1[%c448, %c0_221] : memref<488x128xf32, #tpu.memory_space<vmem>>, vector<16x128xf32>
    %cst_222 = arith.constant dense<0.000000e+00> : vector<2x128xf32>
    %314 = tpu.matmul %312, %313, %cst_222 {dimension_numbers = #tpu.dot_dimension_numbers<[1], [0], [0], [1], [0, 0, 1, 1], [], []>} : vector<2x16xf32>, vector<16x128xf32>, vector<2x128xf32> -> vector<2x128xf32>
    %315 = arith.addf %310, %314 : vector<2x128xf32>
    %c464 = arith.constant 464 : index
    %c0_223 = arith.constant 0 : index
    %316 = vector.load %arg1[%c464, %c0_223] : memref<488x128xf32, #tpu.memory_space<vmem>>, vector<1x128xf32>
    %317 = vector.broadcast %316 : vector<1x128xf32> to vector<2x128xf32>
    %318 = arith.addf %315, %317 : vector<2x128xf32>
    %cst_224 = arith.constant 0.000000e+00 : f32
    %319 = vector.broadcast %cst_224 : f32 to vector<2x128xf32>
    %320 = arith.maximumf %318, %319 : vector<2x128xf32>
    %c472 = arith.constant 472 : index
    %c0_225 = arith.constant 0 : index
    %321 = vector.load %arg1[%c472, %c0_225] : memref<488x128xf32, #tpu.memory_space<vmem>>, vector<1x128xf32>
    %c480 = arith.constant 480 : index
    %c0_226 = arith.constant 0 : index
    %322 = vector.load %arg1[%c480, %c0_226] : memref<488x128xf32, #tpu.memory_space<vmem>>, vector<1x128xf32>
    %323 = vector.broadcast %321 : vector<1x128xf32> to vector<2x128xf32>
    %324 = arith.mulf %320, %323 : vector<2x128xf32>
    %cst_227 = arith.constant dense<0.000000e+00> : vector<2xf32>
    %325 = vector.multi_reduction <add>, %324, %cst_227 [1] : vector<2x128xf32> to vector<2xf32>
    %326 = vector.shape_cast %325 : vector<2xf32> to vector<2x1xf32>
    %327 = vector.broadcast %326 : vector<2x1xf32> to vector<2x128xf32>
    %328 = vector.broadcast %322 : vector<1x128xf32> to vector<2x128xf32>
    %329 = arith.addf %327, %328 : vector<2x128xf32>
    %c0_228 = arith.constant 0 : index
    %c0_229 = arith.constant 0 : index
    %330 = vector.load %arg2[%c0_228, %c0_229] : memref<2x128xf32, #tpu.memory_space<vmem>>, vector<2x128xf32>
    tpu.vector_store %arg2[%c0_228, %c0_229], %329 {strides = array<i32>} : memref<2x128xf32, #tpu.memory_space<vmem>>, vector<2x128xf32>,
    return
  }
}

</mosaic_0001>

<llo_original>
// kernel: forward.1
$region0: #{forward.1}
  #allocation0 [shape = 'u32[]', space=smem, size = 0x4, offset = 0x4, fixed_abs, tag = 'smem constant byte address 0x4 - core index']
  #allocation1 [shape = 'u32[72,128]{1,0:T(1,128)}', space=vmem, size = 0x9000, scoped, tag = 'internal scratch']
  #allocation2 [shape = 'f32[450,128]{1,0:T(8,128)}', space=vmem, size = 0x39000, scoped, tag = 'scratch operand']
  #allocation3 [shape = 'f32[106,128]{1,0:T(8,128)}', space=vmem, size = 0xe000, scoped, tag = 'scratch operand']
  #allocation4 [shape = 'f32[98,128]{1,0:T(8,128)}', space=vmem, size = 0xd000, scoped, tag = 'scratch operand']
  #allocation5 [shape = 'f32[37,128]{1,0:T(8,128)}', space=vmem, size = 0x5000, scoped, tag = 'scratch operand']
  #allocation6 [shape = 'f32[37,128]{1,0:T(8,128)}', space=vmem, size = 0x5000, scoped, tag = 'scratch operand']
  #allocation7 [shape = 'f32[32,128]{1,0:T(8,128)}', space=vmem, size = 0x4000, scoped, tag = 'scratch operand']
  %s0 = inlined_call_operand.vmem [shape: f32[466,8], index: 0, kind: input, shape index: {}]
  %s1 = inlined_call_operand.vmem [shape: f32[488,128], index: 1, kind: input, shape index: {}]
  %s2 = inlined_call_operand.vmem [shape: f32[2,128], index: 2, kind: output, shape index: {}]
  %s3 = sld [smem:[#allocation0]]
  $region18: #{forward.1} parent=0
    _
  %s5 = ssub.s32 1, %s3
  %s6 = scalar_select 0, %s5, %s3
  // Predicated region
  $region2: #{forward.1} parent=0 // pred_check
    _
  $region3: #{forward.1} parent=0 // pred_check_branch
    %8 = sbr.rel (0) target = $region5
  $region4: #{forward.1} parent=0 // pred_region
    _
  $region5: #{forward.1} parent=0 // pred_fallthru
    _
  // Predicated region
  $region6: #{forward.1} parent=0 // pred_check
    _
  $region7: #{forward.1} parent=0 // pred_check_branch
    %10 = sbr.rel (0) target = $region9
  $region8: #{forward.1} parent=0 // pred_region
    _
  $region9: #{forward.1} parent=0 // pred_fallthru
    _
  %v11 = vld [vmem:[%s0] sm:$0xff]
  %v12 = vld [vmem:[%s0 + $0x8] sm:$0xff]
  %v13 = vld [vmem:[%s0 + $0x10] sm:$0xff]
  %v14 = vld [vmem:[%s0 + $0x18] sm:$0xff]
  %v15 = vld [vmem:[%s0 + $0x20] sm:$0xff]
  %v16 = vld [vmem:[%s0 + $0x28] sm:$0xff]
  %v17 = vld [vmem:[%s0 + $0x30] sm:$0xff]
  %v18 = vld [vmem:[%s0 + $0x38] sm:$0xff]
  %v19 = vld [vmem:[%s0 + $0x40] sm:$0xff]
  %v20 = vld [vmem:[%s0 + $0x48] sm:$0xff]
  %v21 = vld [vmem:[%s0 + $0x50] sm:$0xff]
  %v22 = vld [vmem:[%s0 + $0x58] sm:$0xff]
  %v23 = vld [vmem:[%s0 + $0x60] sm:$0xff]
  %v24 = vld [vmem:[%s0 + $0x68] sm:$0xff]
  %v25 = vld [vmem:[%s0 + $0x70] sm:$0xff]
  %v26 = vld [vmem:[%s0 + $0x78] sm:$0xff]
  %v27 = vld [vmem:[%s0 + $0x80] sm:$0xff]
  %v28 = vld [vmem:[%s0 + $0x88] sm:$0xff]
  %v29 = vld [vmem:[%s0 + $0x90] sm:$0xff]
  %v30 = vld [vmem:[%s0 + $0x98] sm:$0xff]
  %v31 = vld [vmem:[%s0 + $0xa0] sm:$0xff]
  %v32 = vld [vmem:[%s0 + $0xa8] sm:$0xff]
  %v33 = vld [vmem:[%s0 + $0xb0] sm:$0xff]
  %v34 = vld [vmem:[%s0 + $0xb8] sm:$0xff]
  %v35 = vld [vmem:[%s0 + $0xc0] sm:$0xff]
  %v36 = vld [vmem:[%s0 + $0xc8] sm:$0xff]
  %v37 = vld [vmem:[%s0 + $0xd0] sm:$0xff]
  %v38 = vld [vmem:[%s0 + $0xd8] sm:$0xff]
  %v39 = vld [vmem:[%s0 + $0xe0] sm:$0xff]
  %v40 = vld [vmem:[%s0 + $0xe8] sm:$0xff]
  %v41 = vld [vmem:[%s0 + $0xf0] sm:$0xff]
  %v42 = vld [vmem:[%s0 + $0xf8] sm:$0xff]
  %v43 = vld [vmem:[%s0 + $0x100] sm:$0xff]
  %v44 = vld [vmem:[%s0 + $0x108] sm:$0xff]
  %v45 = vld [vmem:[%s0 + $0x110] sm:$0xff]
  %v46 = vld [vmem:[%s0 + $0x118] sm:$0xff]
  %v47 = vld [vmem:[%s0 + $0x120] sm:$0xff]
  %v48 = vld [vmem:[%s0 + $0x128] sm:$0xff]
  %v49 = vld [vmem:[%s0 + $0x130] sm:$0xff]
  %v50 = vld [vmem:[%s0 + $0x138] sm:$0xff]
  %v51 = vld [vmem:[%s0 + $0x140] sm:$0xff]
  %v52 = vld [vmem:[%s0 + $0x148] sm:$0xff]
  %v53 = vld [vmem:[%s0 + $0x150] sm:$0xff]
  %v54 = vld [vmem:[%s0 + $0x158] sm:$0xff]
  %v55 = vld [vmem:[%s0 + $0x160] sm:$0xff]
  %v56 = vld [vmem:[%s0 + $0x168] sm:$0xff]
  %v57 = vld [vmem:[%s0 + $0x170] sm:$0xff]
  %v58 = vld [vmem:[%s0 + $0x178] sm:$0xff]
  %v59 = vld [vmem:[%s0 + $0x180] sm:$0xff]
  %v60 = vld [vmem:[%s0 + $0x188] sm:$0xff]
  %v61 = vld [vmem:[%s0 + $0x190] sm:$0xff]
  %v62 = vld [vmem:[%s0 + $0x198] sm:$0xff]
  %v63 = vld [vmem:[%s0 + $0x1a0] sm:$0xff]
  %v64 = vld [vmem:[%s0 + $0x1a8] sm:$0xff]
  %v65 = vld [vmem:[%s0 + $0x1b0] sm:$0xff]
  %v66 = vld [vmem:[%s0 + $0x1b8] sm:$0xff]
  %v67 = vld [vmem:[%s0 + $0x1c0] sm:$0x3]
  %v68 = vld [vmem:[%s0 + $0x1] sm:$0xff]
  %v69 = vld [vmem:[%s0 + $0x9] sm:$0xff]
  %v70 = vld [vmem:[%s0 + $0x11] sm:$0xff]
  %v71 = vld [vmem:[%s0 + $0x19] sm:$0xff]
  %v72 = vld [vmem:[%s0 + $0x21] sm:$0xff]
  %v73 = vld [vmem:[%s0 + $0x29] sm:$0xff]
  %v74 = vld [vmem:[%s0 + $0x31] sm:$0xff]
  %v75 = vld [vmem:[%s0 + $0x39] sm:$0xff]
  %v76 = vld [vmem:[%s0 + $0x41] sm:$0xff]
  %v77 = vld [vmem:[%s0 + $0x49] sm:$0xff]
  %v78 = vld [vmem:[%s0 + $0x51] sm:$0xff]
  %v79 = vld [vmem:[%s0 + $0x59] sm:$0xff]
  %v80 = vld [vmem:[%s0 + $0x61] sm:$0xff]
  %v81 = vld [vmem:[%s0 + $0x69] sm:$0xff]
  %v82 = vld [vmem:[%s0 + $0x71] sm:$0xff]
  %v83 = vld [vmem:[%s0 + $0x79] sm:$0xff]
  %v84 = vld [vmem:[%s0 + $0x81] sm:$0xff]
  %v85 = vld [vmem:[%s0 + $0x89] sm:$0xff]
  %v86 = vld [vmem:[%s0 + $0x91] sm:$0xff]
  %v87 = vld [vmem:[%s0 + $0x99] sm:$0xff]
  %v88 = vld [vmem:[%s0 + $0xa1] sm:$0xff]
  %v89 = vld [vmem:[%s0 + $0xa9] sm:$0xff]
  %v90 = vld [vmem:[%s0 + $0xb1] sm:$0xff]
  %v91 = vld [vmem:[%s0 + $0xb9] sm:$0xff]
  %v92 = vld [vmem:[%s0 + $0xc1] sm:$0xff]
  %v93 = vld [vmem:[%s0 + $0xc9] sm:$0xff]
  %v94 = vld [vmem:[%s0 + $0xd1] sm:$0xff]
  %v95 = vld [vmem:[%s0 + $0xd9] sm:$0xff]
  %v96 = vld [vmem:[%s0 + $0xe1] sm:$0xff]
  %v97 = vld [vmem:[%s0 + $0xe9] sm:$0xff]
  %v98 = vld [vmem:[%s0 + $0xf1] sm:$0xff]
  %v99 = vld [vmem:[%s0 + $0xf9] sm:$0xff]
  %v100 = vld [vmem:[%s0 + $0x101] sm:$0xff]
  %v101 = vld [vmem:[%s0 + $0x109] sm:$0xff]
  %v102 = vld [vmem:[%s0 + $0x111] sm:$0xff]
  %v103 = vld [vmem:[%s0 + $0x119] sm:$0xff]
  %v104 = vld [vmem:[%s0 + $0x121] sm:$0xff]
  %v105 = vld [vmem:[%s0 + $0x129] sm:$0xff]
  %v106 = vld [vmem:[%s0 + $0x131] sm:$0xff]
  %v107 = vld [vmem:[%s0 + $0x139] sm:$0xff]
  %v108 = vld [vmem:[%s0 + $0x141] sm:$0xff]
  %v109 = vld [vmem:[%s0 + $0x149] sm:$0xff]
  %v110 = vld [vmem:[%s0 + $0x151] sm:$0xff]
  %v111 = vld [vmem:[%s0 + $0x159] sm:$0xff]
  %v112 = vld [vmem:[%s0 + $0x161] sm:$0xff]
  %v113 = vld [vmem:[%s0 + $0x169] sm:$0xff]
  %v114 = vld [vmem:[%s0 + $0x171] sm:$0xff]
  %v115 = vld [vmem:[%s0 + $0x179] sm:$0xff]
  %v116 = vld [vmem:[%s0 + $0x181] sm:$0xff]
  %v117 = vld [vmem:[%s0 + $0x189] sm:$0xff]
  %v118 = vld [vmem:[%s0 + $0x191] sm:$0xff]
  %v119 = vld [vmem:[%s0 + $0x199] sm:$0xff]
  %v120 = vld [vmem:[%s0 + $0x1a1] sm:$0xff]
  %v121 = vld [vmem:[%s0 + $0x1a9] sm:$0xff]
  %v122 = vld [vmem:[%s0 + $0x1b1] sm:$0xff]
  %v123 = vld [vmem:[%s0 + $0x1b9] sm:$0xff]
  %v124 = vld [vmem:[%s0 + $0x1c1] sm:$0x3]
  %v125 = vld [vmem:[%s0 + $0xf] sm:$0xff]
  %v126 = vld [vmem:[%s0 + $0x17] sm:$0xff]
  %v127 = vld [vmem:[%s0 + $0x1f] sm:$0xff]
  %v128 = vld [vmem:[%s0 + $0x27] sm:$0xff]
  %v129 = vld [vmem:[%s0 + $0x2f] sm:$0xff]
  %v130 = vld [vmem:[%s0 + $0x37] sm:$0xff]
  %v131 = vld [vmem:[%s0 + $0x3f] sm:$0xff]
  %v132 = vld [vmem:[%s0 + $0x47] sm:$0xff]
  %v133 = vld [vmem:[%s0 + $0x4f] sm:$0xff]
  %v134 = vld [vmem:[%s0 + $0x57] sm:$0xff]
  %v135 = vld [vmem:[%s0 + $0x5f] sm:$0xff]
  %v136 = vld [vmem:[%s0 + $0x67] sm:$0xff]
  %v137 = vld [vmem:[%s0 + $0x6f] sm:$0xff]
  %v138 = vld [vmem:[%s0 + $0x77] sm:$0xff]
  %v139 = vld [vmem:[%s0 + $0x7f] sm:$0xff]
  %v140 = vld [vmem:[%s0 + $0x87] sm:$0xff]
  %v141 = vld [vmem:[%s0 + $0x8f] sm:$0xff]
  %v142 = vld [vmem:[%s0 + $0x97] sm:$0xff]
  %v143 = vld [vmem:[%s0 + $0x9f] sm:$0xff]
  %v144 = vld [vmem:[%s0 + $0xa7] sm:$0xff]
  %v145 = vld [vmem:[%s0 + $0xaf] sm:$0xff]
  %v146 = vld [vmem:[%s0 + $0xb7] sm:$0xff]
  %v147 = vld [vmem:[%s0 + $0xbf] sm:$0xff]
  %v148 = vld [vmem:[%s0 + $0xc7] sm:$0xff]
  %v149 = vld [vmem:[%s0 + $0xcf] sm:$0xff]
  %v150 = vld [vmem:[%s0 + $0xd7] sm:$0xff]
  %v151 = vld [vmem:[%s0 + $0xdf] sm:$0xff]
  %v152 = vld [vmem:[%s0 + $0xe7] sm:$0xff]
  %v153 = vld [vmem:[%s0 + $0xef] sm:$0xff]
  %v154 = vld [vmem:[%s0 + $0xf7] sm:$0xff]
  %v155 = vld [vmem:[%s0 + $0xff] sm:$0xff]
  %v156 = vld [vmem:[%s0 + $0x107] sm:$0xff]
  %v157 = vld [vmem:[%s0 + $0x10f] sm:$0xff]
  %v158 = vld [vmem:[%s0 + $0x117] sm:$0xff]
  %v159 = vld [vmem:[%s0 + $0x11f] sm:$0xff]
  %v160 = vld [vmem:[%s0 + $0x127] sm:$0xff]
  %v161 = vld [vmem:[%s0 + $0x12f] sm:$0xff]
  %v162 = vld [vmem:[%s0 + $0x137] sm:$0xff]
  %v163 = vld [vmem:[%s0 + $0x13f] sm:$0xff]
  %v164 = vld [vmem:[%s0 + $0x147] sm:$0xff]
  %v165 = vld [vmem:[%s0 + $0x14f] sm:$0xff]
  %v166 = vld [vmem:[%s0 + $0x157] sm:$0xff]
  %v167 = vld [vmem:[%s0 + $0x15f] sm:$0xff]
  %v168 = vld [vmem:[%s0 + $0x167] sm:$0xff]
  %v169 = vld [vmem:[%s0 + $0x16f] sm:$0xff]
  %v170 = vld [vmem:[%s0 + $0x177] sm:$0xff]
  %v171 = vld [vmem:[%s0 + $0x17f] sm:$0xff]
  %v172 = vld [vmem:[%s0 + $0x187] sm:$0xff]
  %v173 = vld [vmem:[%s0 + $0x18f] sm:$0xff]
  %v174 = vld [vmem:[%s0 + $0x197] sm:$0xff]
  %v175 = vld [vmem:[%s0 + $0x19f] sm:$0xff]
  %v176 = vld [vmem:[%s0 + $0x1a7] sm:$0xff]
  %v177 = vld [vmem:[%s0 + $0x1af] sm:$0xff]
  %v178 = vld [vmem:[%s0 + $0x1b7] sm:$0xff]
  %v179 = vld [vmem:[%s0 + $0x1bf] sm:$0xff]
  %v180 = vld [vmem:[%s0 + $0x1c7] sm:$0xff]
  %v181 = vld [vmem:[%s0 + $0x1cf] sm:$0x3]
  %v182 = vld [vmem:[%s0 + $0x1c0] sm:$0xff]
  %v183 = vld [vmem:[%s0 + $0x1c8] sm:$0xff]
  %v184 = vld [vmem:[%s0 + $0x1d0] sm:$0x3]
  %242 = vrot.lane.b32.xlu0 %v68, 8
  %v243 = vpop.permute.xlu0 %242
  %244 = vrot.lane.b32.xlu0 %v69, 8
  %v245 = vpop.permute.xlu0 %244
  %246 = vrot.lane.b32.xlu0 %v70, 8
  %v247 = vpop.permute.xlu0 %246
  %248 = vrot.lane.b32.xlu0 %v71, 8
  %v249 = vpop.permute.xlu0 %248
  %250 = vrot.lane.b32.xlu0 %v72, 8
  %v251 = vpop.permute.xlu0 %250
  %252 = vrot.lane.b32.xlu0 %v73, 8
  %v253 = vpop.permute.xlu0 %252
  %254 = vrot.lane.b32.xlu0 %v74, 8
  %v255 = vpop.permute.xlu0 %254
  %256 = vrot.lane.b32.xlu0 %v75, 8
  %v257 = vpop.permute.xlu0 %256
  %258 = vrot.lane.b32.xlu0 %v76, 8
  %v259 = vpop.permute.xlu0 %258
  %260 = vrot.lane.b32.xlu0 %v77, 8
  %v261 = vpop.permute.xlu0 %260
  %262 = vrot.lane.b32.xlu0 %v78, 8
  %v263 = vpop.permute.xlu0 %262
  %264 = vrot.lane.b32.xlu0 %v79, 8
  %v265 = vpop.permute.xlu0 %264
  %266 = vrot.lane.b32.xlu0 %v80, 8
  %v267 = vpop.permute.xlu0 %266
  %268 = vrot.lane.b32.xlu0 %v81, 8
  %v269 = vpop.permute.xlu0 %268
  %270 = vrot.lane.b32.xlu0 %v82, 8
  %v271 = vpop.permute.xlu0 %270
  %272 = vrot.lane.b32.xlu0 %v83, 8
  %v273 = vpop.permute.xlu0 %272
  %274 = vrot.lane.b32.xlu0 %v84, 8
  %v275 = vpop.permute.xlu0 %274
  %276 = vrot.lane.b32.xlu0 %v85, 8
  %v277 = vpop.permute.xlu0 %276
  %278 = vrot.lane.b32.xlu0 %v86, 8
  %v279 = vpop.permute.xlu0 %278
  %280 = vrot.lane.b32.xlu0 %v87, 8
  %v281 = vpop.permute.xlu0 %280
  %282 = vrot.lane.b32.xlu0 %v88, 8
  %v283 = vpop.permute.xlu0 %282
  %284 = vrot.lane.b32.xlu0 %v89, 8
  %v285 = vpop.permute.xlu0 %284
  %286 = vrot.lane.b32.xlu0 %v90, 8
  %v287 = vpop.permute.xlu0 %286
  %288 = vrot.lane.b32.xlu0 %v91, 8
  %v289 = vpop.permute.xlu0 %288
  %290 = vrot.lane.b32.xlu0 %v92, 8
  %v291 = vpop.permute.xlu0 %290
  %292 = vrot.lane.b32.xlu0 %v93, 8
  %v293 = vpop.permute.xlu0 %292
  %294 = vrot.lane.b32.xlu0 %v94, 8
  %v295 = vpop.permute.xlu0 %294
  %296 = vrot.lane.b32.xlu0 %v95, 8
  %v297 = vpop.permute.xlu0 %296
  %298 = vrot.lane.b32.xlu0 %v96, 8
  %v299 = vpop.permute.xlu0 %298
  %300 = vrot.lane.b32.xlu0 %v97, 8
  %v301 = vpop.permute.xlu0 %300
  %302 = vrot.lane.b32.xlu0 %v98, 8
  %v303 = vpop.permute.xlu0 %302
  %304 = vrot.lane.b32.xlu0 %v99, 8
  %v305 = vpop.permute.xlu0 %304
  %306 = vrot.lane.b32.xlu0 %v100, 8
  %v307 = vpop.permute.xlu0 %306
  %308 = vrot.lane.b32.xlu0 %v101, 8
  %v309 = vpop.permute.xlu0 %308
  %310 = vrot.lane.b32.xlu0 %v102, 8
  %v311 = vpop.permute.xlu0 %310
  %312 = vrot.lane.b32.xlu0 %v103, 8
  %v313 = vpop.permute.xlu0 %312
  %314 = vrot.lane.b32.xlu0 %v104, 8
  %v315 = vpop.permute.xlu0 %314
  %316 = vrot.lane.b32.xlu0 %v105, 8
  %v317 = vpop.permute.xlu0 %316
  %318 = vrot.lane.b32.xlu0 %v106, 8
  %v319 = vpop.permute.xlu0 %318
  %320 = vrot.lane.b32.xlu0 %v107, 8
  %v321 = vpop.permute.xlu0 %320
  %322 = vrot.lane.b32.xlu0 %v108, 8
  %v323 = vpop.permute.xlu0 %322
  %324 = vrot.lane.b32.xlu0 %v109, 8
  %v325 = vpop.permute.xlu0 %324
  %326 = vrot.lane.b32.xlu0 %v110, 8
  %v327 = vpop.permute.xlu0 %326
  %328 = vrot.lane.b32.xlu0 %v111, 8
  %v329 = vpop.permute.xlu0 %328
  %330 = vrot.lane.b32.xlu0 %v112, 8
  %v331 = vpop.permute.xlu0 %330
  %332 = vrot.lane.b32.xlu0 %v113, 8
  %v333 = vpop.permute.xlu0 %332
  %334 = vrot.lane.b32.xlu0 %v114, 8
  %v335 = vpop.permute.xlu0 %334
  %336 = vrot.lane.b32.xlu0 %v115, 8
  %v337 = vpop.permute.xlu0 %336
  %338 = vrot.lane.b32.xlu0 %v116, 8
  %v339 = vpop.permute.xlu0 %338
  %340 = vrot.lane.b32.xlu0 %v117, 8
  %v341 = vpop.permute.xlu0 %340
  %342 = vrot.lane.b32.xlu0 %v118, 8
  %v343 = vpop.permute.xlu0 %342
  %344 = vrot.lane.b32.xlu0 %v119, 8
  %v345 = vpop.permute.xlu0 %344
  %346 = vrot.lane.b32.xlu0 %v120, 8
  %v347 = vpop.permute.xlu0 %346
  %348 = vrot.lane.b32.xlu0 %v121, 8
  %v349 = vpop.permute.xlu0 %348
  %350 = vrot.lane.b32.xlu0 %v122, 8
  %v351 = vpop.permute.xlu0 %350
  %352 = vrot.lane.b32.xlu0 %v123, 8
  %v353 = vpop.permute.xlu0 %352
  %354 = vrot.lane.b32.xlu0 %v124, 8
  %v355 = vpop.permute.xlu0 %354
  %470 = vrot.lane.b32.xlu0 %v125, 16
  %v471 = vpop.permute.xlu0 %470
  %472 = vrot.lane.b32.xlu0 %v126, 16
  %v473 = vpop.permute.xlu0 %472
  %474 = vrot.lane.b32.xlu0 %v127, 16
  %v475 = vpop.permute.xlu0 %474
  %476 = vrot.lane.b32.xlu0 %v128, 16
  %v477 = vpop.permute.xlu0 %476
  %478 = vrot.lane.b32.xlu0 %v129, 16
  %v479 = vpop.permute.xlu0 %478
  %480 = vrot.lane.b32.xlu0 %v130, 16
  %v481 = vpop.permute.xlu0 %480
  %482 = vrot.lane.b32.xlu0 %v131, 16
  %v483 = vpop.permute.xlu0 %482
  %484 = vrot.lane.b32.xlu0 %v132, 16
  %v485 = vpop.permute.xlu0 %484
  %486 = vrot.lane.b32.xlu0 %v133, 16
  %v487 = vpop.permute.xlu0 %486
  %488 = vrot.lane.b32.xlu0 %v134, 16
  %v489 = vpop.permute.xlu0 %488
  %490 = vrot.lane.b32.xlu0 %v135, 16
  %v491 = vpop.permute.xlu0 %490
  %492 = vrot.lane.b32.xlu0 %v136, 16
  %v493 = vpop.permute.xlu0 %492
  %494 = vrot.lane.b32.xlu0 %v137, 16
  %v495 = vpop.permute.xlu0 %494
  %496 = vrot.lane.b32.xlu0 %v138, 16
  %v497 = vpop.permute.xlu0 %496
  %498 = vrot.lane.b32.xlu0 %v139, 16
  %v499 = vpop.permute.xlu0 %498
  %500 = vrot.lane.b32.xlu0 %v140, 16
  %v501 = vpop.permute.xlu0 %500
  %502 = vrot.lane.b32.xlu0 %v141, 16
  %v503 = vpop.permute.xlu0 %502
  %504 = vrot.lane.b32.xlu0 %v142, 16
  %v505 = vpop.permute.xlu0 %504
  %506 = vrot.lane.b32.xlu0 %v143, 16
  %v507 = vpop.permute.xlu0 %506
  %508 = vrot.lane.b32.xlu0 %v144, 16
  %v509 = vpop.permute.xlu0 %508
  %510 = vrot.lane.b32.xlu0 %v145, 16
  %v511 = vpop.permute.xlu0 %510
  %512 = vrot.lane.b32.xlu0 %v146, 16
  %v513 = vpop.permute.xlu0 %512
  %514 = vrot.lane.b32.xlu0 %v147, 16
  %v515 = vpop.permute.xlu0 %514
  %516 = vrot.lane.b32.xlu0 %v148, 16
  %v517 = vpop.permute.xlu0 %516
  %518 = vrot.lane.b32.xlu0 %v149, 16
  %v519 = vpop.permute.xlu0 %518
  %520 = vrot.lane.b32.xlu0 %v150, 16
  %v521 = vpop.permute.xlu0 %520
  %522 = vrot.lane.b32.xlu0 %v151, 16
  %v523 = vpop.permute.xlu0 %522
  %524 = vrot.lane.b32.xlu0 %v152, 16
  %v525 = vpop.permute.xlu0 %524
  %526 = vrot.lane.b32.xlu0 %v153, 16
  %v527 = vpop.permute.xlu0 %526
  %528 = vrot.lane.b32.xlu0 %v154, 16
  %v529 = vpop.permute.xlu0 %528
  %530 = vrot.lane.b32.xlu0 %v155, 16
  %v531 = vpop.permute.xlu0 %530
  %532 = vrot.lane.b32.xlu0 %v156, 16
  %v533 = vpop.permute.xlu0 %532
  %534 = vrot.lane.b32.xlu0 %v157, 16
  %v535 = vpop.permute.xlu0 %534
  %536 = vrot.lane.b32.xlu0 %v158, 16
  %v537 = vpop.permute.xlu0 %536
  %538 = vrot.lane.b32.xlu0 %v159, 16
  %v539 = vpop.permute.xlu0 %538
  %540 = vrot.lane.b32.xlu0 %v160, 16
  %v541 = vpop.permute.xlu0 %540
  %542 = vrot.lane.b32.xlu0 %v161, 16
  %v543 = vpop.permute.xlu0 %542
  %544 = vrot.lane.b32.xlu0 %v162, 16
  %v545 = vpop.permute.xlu0 %544
  %546 = vrot.lane.b32.xlu0 %v163, 16
  %v547 = vpop.permute.xlu0 %546
  %548 = vrot.lane.b32.xlu0 %v164, 16
  %v549 = vpop.permute.xlu0 %548
  %550 = vrot.lane.b32.xlu0 %v165, 16
  %v551 = vpop.permute.xlu0 %550
  %552 = vrot.lane.b32.xlu0 %v166, 16
  %v553 = vpop.permute.xlu0 %552
  %554 = vrot.lane.b32.xlu0 %v167, 16
  %v555 = vpop.permute.xlu0 %554
  %556 = vrot.lane.b32.xlu0 %v168, 16
  %v557 = vpop.permute.xlu0 %556
  %558 = vrot.lane.b32.xlu0 %v169, 16
  %v559 = vpop.permute.xlu0 %558
  %560 = vrot.lane.b32.xlu0 %v170, 16
  %v561 = vpop.permute.xlu0 %560
  %562 = vrot.lane.b32.xlu0 %v171, 16
  %v563 = vpop.permute.xlu0 %562
  %564 = vrot.lane.b32.xlu0 %v172, 16
  %v565 = vpop.permute.xlu0 %564
  %566 = vrot.lane.b32.xlu0 %v173, 16
  %v567 = vpop.permute.xlu0 %566
  %568 = vrot.lane.b32.xlu0 %v174, 16
  %v569 = vpop.permute.xlu0 %568
  %570 = vrot.lane.b32.xlu0 %v175, 16
  %v571 = vpop.permute.xlu0 %570
  %572 = vrot.lane.b32.xlu0 %v176, 16
  %v573 = vpop.permute.xlu0 %572
  %574 = vrot.lane.b32.xlu0 %v177, 16
  %v575 = vpop.permute.xlu0 %574
  %576 = vrot.lane.b32.xlu0 %v178, 16
  %v577 = vpop.permute.xlu0 %576
  %578 = vrot.lane.b32.xlu0 %v179, 16
  %v579 = vpop.permute.xlu0 %578
  %580 = vrot.lane.b32.xlu0 %v180, 16
  %v581 = vpop.permute.xlu0 %580
  %582 = vrot.lane.b32.xlu0 %v181, 16
  %v583 = vpop.permute.xlu0 %582
  %698 = vrot.lane.b32.xlu0 %v13, 24
  %v699 = vpop.permute.xlu0 %698
  %700 = vrot.lane.b32.xlu0 %v14, 24
  %v701 = vpop.permute.xlu0 %700
  %702 = vrot.lane.b32.xlu0 %v15, 24
  %v703 = vpop.permute.xlu0 %702
  %704 = vrot.lane.b32.xlu0 %v16, 24
  %v705 = vpop.permute.xlu0 %704
  %706 = vrot.lane.b32.xlu0 %v17, 24
  %v707 = vpop.permute.xlu0 %706
  %708 = vrot.lane.b32.xlu0 %v18, 24
  %v709 = vpop.permute.xlu0 %708
  %710 = vrot.lane.b32.xlu0 %v19, 24
  %v711 = vpop.permute.xlu0 %710
  %712 = vrot.lane.b32.xlu0 %v20, 24
  %v713 = vpop.permute.xlu0 %712
  %714 = vrot.lane.b32.xlu0 %v21, 24
  %v715 = vpop.permute.xlu0 %714
  %716 = vrot.lane.b32.xlu0 %v22, 24
  %v717 = vpop.permute.xlu0 %716
  %718 = vrot.lane.b32.xlu0 %v23, 24
  %v719 = vpop.permute.xlu0 %718
  %720 = vrot.lane.b32.xlu0 %v24, 24
  %v721 = vpop.permute.xlu0 %720
  %722 = vrot.lane.b32.xlu0 %v25, 24
  %v723 = vpop.permute.xlu0 %722
  %724 = vrot.lane.b32.xlu0 %v26, 24
  %v725 = vpop.permute.xlu0 %724
  %726 = vrot.lane.b32.xlu0 %v27, 24
  %v727 = vpop.permute.xlu0 %726
  %728 = vrot.lane.b32.xlu0 %v28, 24
  %v729 = vpop.permute.xlu0 %728
  %730 = vrot.lane.b32.xlu0 %v29, 24
  %v731 = vpop.permute.xlu0 %730
  %732 = vrot.lane.b32.xlu0 %v30, 24
  %v733 = vpop.permute.xlu0 %732
  %734 = vrot.lane.b32.xlu0 %v31, 24
  %v735 = vpop.permute.xlu0 %734
  %736 = vrot.lane.b32.xlu0 %v32, 24
  %v737 = vpop.permute.xlu0 %736
  %738 = vrot.lane.b32.xlu0 %v33, 24
  %v739 = vpop.permute.xlu0 %738
  %740 = vrot.lane.b32.xlu0 %v34, 24
  %v741 = vpop.permute.xlu0 %740
  %742 = vrot.lane.b32.xlu0 %v35, 24
  %v743 = vpop.permute.xlu0 %742
  %744 = vrot.lane.b32.xlu0 %v36, 24
  %v745 = vpop.permute.xlu0 %744
  %746 = vrot.lane.b32.xlu0 %v37, 24
  %v747 = vpop.permute.xlu0 %746
  %748 = vrot.lane.b32.xlu0 %v38, 24
  %v749 = vpop.permute.xlu0 %748
  %750 = vrot.lane.b32.xlu0 %v39, 24
  %v751 = vpop.permute.xlu0 %750
  %752 = vrot.lane.b32.xlu0 %v40, 24
  %v753 = vpop.permute.xlu0 %752
  %754 = vrot.lane.b32.xlu0 %v41, 24
  %v755 = vpop.permute.xlu0 %754
  %756 = vrot.lane.b32.xlu0 %v42, 24
  %v757 = vpop.permute.xlu0 %756
  %758 = vrot.lane.b32.xlu0 %v43, 24
  %v759 = vpop.permute.xlu0 %758
  %760 = vrot.lane.b32.xlu0 %v44, 24
  %v761 = vpop.permute.xlu0 %760
  %762 = vrot.lane.b32.xlu0 %v45, 24
  %v763 = vpop.permute.xlu0 %762
  %764 = vrot.lane.b32.xlu0 %v46, 24
  %v765 = vpop.permute.xlu0 %764
  %766 = vrot.lane.b32.xlu0 %v47, 24
  %v767 = vpop.permute.xlu0 %766
  %768 = vrot.lane.b32.xlu0 %v48, 24
  %v769 = vpop.permute.xlu0 %768
  %770 = vrot.lane.b32.xlu0 %v49, 24
  %v771 = vpop.permute.xlu0 %770
  %772 = vrot.lane.b32.xlu0 %v50, 24
  %v773 = vpop.permute.xlu0 %772
  %774 = vrot.lane.b32.xlu0 %v51, 24
  %v775 = vpop.permute.xlu0 %774
  %776 = vrot.lane.b32.xlu0 %v52, 24
  %v777 = vpop.permute.xlu0 %776
  %778 = vrot.lane.b32.xlu0 %v53, 24
  %v779 = vpop.permute.xlu0 %778
  %780 = vrot.lane.b32.xlu0 %v54, 24
  %v781 = vpop.permute.xlu0 %780
  %782 = vrot.lane.b32.xlu0 %v55, 24
  %v783 = vpop.permute.xlu0 %782
  %784 = vrot.lane.b32.xlu0 %v56, 24
  %v785 = vpop.permute.xlu0 %784
  %786 = vrot.lane.b32.xlu0 %v57, 24
  %v787 = vpop.permute.xlu0 %786
  %788 = vrot.lane.b32.xlu0 %v58, 24
  %v789 = vpop.permute.xlu0 %788
  %790 = vrot.lane.b32.xlu0 %v59, 24
  %v791 = vpop.permute.xlu0 %790
  %792 = vrot.lane.b32.xlu0 %v60, 24
  %v793 = vpop.permute.xlu0 %792
  %794 = vrot.lane.b32.xlu0 %v61, 24
  %v795 = vpop.permute.xlu0 %794
  %796 = vrot.lane.b32.xlu0 %v62, 24
  %v797 = vpop.permute.xlu0 %796
  %798 = vrot.lane.b32.xlu0 %v63, 24
  %v799 = vpop.permute.xlu0 %798
  %800 = vrot.lane.b32.xlu0 %v64, 24
  %v801 = vpop.permute.xlu0 %800
  %802 = vrot.lane.b32.xlu0 %v65, 24
  %v803 = vpop.permute.xlu0 %802
  %804 = vrot.lane.b32.xlu0 %v66, 24
  %v805 = vpop.permute.xlu0 %804
  %806 = vrot.lane.b32.xlu0 %v182, 24
  %v807 = vpop.permute.xlu0 %806
  %808 = vrot.lane.b32.xlu0 %v183, 24
  %v809 = vpop.permute.xlu0 %808
  %810 = vrot.lane.b32.xlu0 %v184, 24
  %v811 = vpop.permute.xlu0 %810
  %vm869 = vcmask 64512
  %v870 = vsel %vm869, %v11, %v243
  %v871 = vsel %vm869, %v12, %v245
  %v872 = vsel %vm869, %v13, %v247
  %v873 = vsel %vm869, %v14, %v249
  %v874 = vsel %vm869, %v15, %v251
  %v875 = vsel %vm869, %v16, %v253
  %v876 = vsel %vm869, %v17, %v255
  %v877 = vsel %vm869, %v18, %v257
  %v878 = vsel %vm869, %v19, %v259
  %v879 = vsel %vm869, %v20, %v261
  %v880 = vsel %vm869, %v21, %v263
  %v881 = vsel %vm869, %v22, %v265
  %v882 = vsel %vm869, %v23, %v267
  %v883 = vsel %vm869, %v24, %v269
  %v884 = vsel %vm869, %v25, %v271
  %v885 = vsel %vm869, %v26, %v273
  %v886 = vsel %vm869, %v27, %v275
  %v887 = vsel %vm869, %v28, %v277
  %v888 = vsel %vm869, %v29, %v279
  %v889 = vsel %vm869, %v30, %v281
  %v890 = vsel %vm869, %v31, %v283
  %v891 = vsel %vm869, %v32, %v285
  %v892 = vsel %vm869, %v33, %v287
  %v893 = vsel %vm869, %v34, %v289
  %v894 = vsel %vm869, %v35, %v291
  %v895 = vsel %vm869, %v36, %v293
  %v896 = vsel %vm869, %v37, %v295
  %v897 = vsel %vm869, %v38, %v297
  %v898 = vsel %vm869, %v39, %v299
  %v899 = vsel %vm869, %v40, %v301
  %v900 = vsel %vm869, %v41, %v303
  %v901 = vsel %vm869, %v42, %v305
  %v902 = vsel %vm869, %v43, %v307
  %v903 = vsel %vm869, %v44, %v309
  %v904 = vsel %vm869, %v45, %v311
  %v905 = vsel %vm869, %v46, %v313
  %v906 = vsel %vm869, %v47, %v315
  %v907 = vsel %vm869, %v48, %v317
  %v908 = vsel %vm869, %v49, %v319
  %v909 = vsel %vm869, %v50, %v321
  %v910 = vsel %vm869, %v51, %v323
  %v911 = vsel %vm869, %v52, %v325
  %v912 = vsel %vm869, %v53, %v327
  %v913 = vsel %vm869, %v54, %v329
  %v914 = vsel %vm869, %v55, %v331
  %v915 = vsel %vm869, %v56, %v333
  %v916 = vsel %vm869, %v57, %v335
  %v917 = vsel %vm869, %v58, %v337
  %v918 = vsel %vm869, %v59, %v339
  %v919 = vsel %vm869, %v60, %v341
  %v920 = vsel %vm869, %v61, %v343
  %v921 = vsel %vm869, %v62, %v345
  %v922 = vsel %vm869, %v63, %v347
  %v923 = vsel %vm869, %v64, %v349
  %v924 = vsel %vm869, %v65, %v351
  %v925 = vsel %vm869, %v66, %v353
  %v926 = vsel %vm869, %v67, %v355
  %vm927 = vcmask 130048
  %v928 = vsel %vm927, %v870, %v471
  %v929 = vsel %vm927, %v871, %v473
  %v930 = vsel %vm927, %v872, %v475
  %v931 = vsel %vm927, %v873, %v477
  %v932 = vsel %vm927, %v874, %v479
  %v933 = vsel %vm927, %v875, %v481
  %v934 = vsel %vm927, %v876, %v483
  %v935 = vsel %vm927, %v877, %v485
  %v936 = vsel %vm927, %v878, %v487
  %v937 = vsel %vm927, %v879, %v489
  %v938 = vsel %vm927, %v880, %v491
  %v939 = vsel %vm927, %v881, %v493
  %v940 = vsel %vm927, %v882, %v495
  %v941 = vsel %vm927, %v883, %v497
  %v942 = vsel %vm927, %v884, %v499
  %v943 = vsel %vm927, %v885, %v501
  %v944 = vsel %vm927, %v886, %v503
  %v945 = vsel %vm927, %v887, %v505
  %v946 = vsel %vm927, %v888, %v507
  %v947 = vsel %vm927, %v889, %v509
  %v948 = vsel %vm927, %v890, %v511
  %v949 = vsel %vm927, %v891, %v513
  %v950 = vsel %vm927, %v892, %v515
  %v951 = vsel %vm927, %v893, %v517
  %v952 = vsel %vm927, %v894, %v519
  %v953 = vsel %vm927, %v895, %v521
  %v954 = vsel %vm927, %v896, %v523
  %v955 = vsel %vm927, %v897, %v525
  %v956 = vsel %vm927, %v898, %v527
  %v957 = vsel %vm927, %v899, %v529
  %v958 = vsel %vm927, %v900, %v531
  %v959 = vsel %vm927, %v901, %v533
  %v960 = vsel %vm927, %v902, %v535
  %v961 = vsel %vm927, %v903, %v537
  %v962 = vsel %vm927, %v904, %v539
  %v963 = vsel %vm927, %v905, %v541
  %v964 = vsel %vm927, %v906, %v543
  %v965 = vsel %vm927, %v907, %v545
  %v966 = vsel %vm927, %v908, %v547
  %v967 = vsel %vm927, %v909, %v549
  %v968 = vsel %vm927, %v910, %v551
  %v969 = vsel %vm927, %v911, %v553
  %v970 = vsel %vm927, %v912, %v555
  %v971 = vsel %vm927, %v913, %v557
  %v972 = vsel %vm927, %v914, %v559
  %v973 = vsel %vm927, %v915, %v561
  %v974 = vsel %vm927, %v916, %v563
  %v975 = vsel %vm927, %v917, %v565
  %v976 = vsel %vm927, %v918, %v567
  %v977 = vsel %vm927, %v919, %v569
  %v978 = vsel %vm927, %v920, %v571
  %v979 = vsel %vm927, %v921, %v573
  %v980 = vsel %vm927, %v922, %v575
  %v981 = vsel %vm927, %v923, %v577
  %v982 = vsel %vm927, %v924, %v579
  %v983 = vsel %vm927, %v925, %v581
  %v984 = vsel %vm927, %v926, %v583
  %vm985 = vcmask 195584
  %v986 = vsel %vm985, %v928, %v699
  %v987 = vsel %vm985, %v929, %v701
  %v988 = vsel %vm985, %v930, %v703
  %v989 = vsel %vm985, %v931, %v705
  %v990 = vsel %vm985, %v932, %v707
  %v991 = vsel %vm985, %v933, %v709
  %v992 = vsel %vm985, %v934, %v711
  %v993 = vsel %vm985, %v935, %v713
  %v994 = vsel %vm985, %v936, %v715
  %v995 = vsel %vm985, %v937, %v717
  %v996 = vsel %vm985, %v938, %v719
  %v997 = vsel %vm985, %v939, %v721
  %v998 = vsel %vm985, %v940, %v723
  %v999 = vsel %vm985, %v941, %v725
  %v1000 = vsel %vm985, %v942, %v727
  %v1001 = vsel %vm985, %v943, %v729
  %v1002 = vsel %vm985, %v944, %v731
  %v1003 = vsel %vm985, %v945, %v733
  %v1004 = vsel %vm985, %v946, %v735
  %v1005 = vsel %vm985, %v947, %v737
  %v1006 = vsel %vm985, %v948, %v739
  %v1007 = vsel %vm985, %v949, %v741
  %v1008 = vsel %vm985, %v950, %v743
  %v1009 = vsel %vm985, %v951, %v745
  %v1010 = vsel %vm985, %v952, %v747
  %v1011 = vsel %vm985, %v953, %v749
  %v1012 = vsel %vm985, %v954, %v751
  %v1013 = vsel %vm985, %v955, %v753
  %v1014 = vsel %vm985, %v956, %v755
  %v1015 = vsel %vm985, %v957, %v757
  %v1016 = vsel %vm985, %v958, %v759
  %v1017 = vsel %vm985, %v959, %v761
  %v1018 = vsel %vm985, %v960, %v763
  %v1019 = vsel %vm985, %v961, %v765
  %v1020 = vsel %vm985, %v962, %v767
  %v1021 = vsel %vm985, %v963, %v769
  %v1022 = vsel %vm985, %v964, %v771
  %v1023 = vsel %vm985, %v965, %v773
  %v1024 = vsel %vm985, %v966, %v775
  %v1025 = vsel %vm985, %v967, %v777
  %v1026 = vsel %vm985, %v968, %v779
  %v1027 = vsel %vm985, %v969, %v781
  %v1028 = vsel %vm985, %v970, %v783
  %v1029 = vsel %vm985, %v971, %v785
  %v1030 = vsel %vm985, %v972, %v787
  %v1031 = vsel %vm985, %v973, %v789
  %v1032 = vsel %vm985, %v974, %v791
  %v1033 = vsel %vm985, %v975, %v793
  %v1034 = vsel %vm985, %v976, %v795
  %v1035 = vsel %vm985, %v977, %v797
  %v1036 = vsel %vm985, %v978, %v799
  %v1037 = vsel %vm985, %v979, %v801
  %v1038 = vsel %vm985, %v980, %v803
  %v1039 = vsel %vm985, %v981, %v805
  %v1040 = vsel %vm985, %v982, %v807
  %v1041 = vsel %vm985, %v983, %v809
  %v1042 = vsel %vm985, %v984, %v811
  %v1043 = vld [vmem:[%s1] sm:$0xff]
  %v1044 = vld [vmem:[%s1 + $0x8] sm:$0xff]
  %v1045 = vld [vmem:[%s1 + $0x10] sm:$0xff]
  %v1046 = vld [vmem:[%s1 + $0x18] sm:$0xff]
  %v1047 = vld [vmem:[%s1 + $0x20] sm:$0x1]
  %v1048 = vperm.slane %v1047, 0
  %vm1049 = vcmask 261120
  %v1051 = vsel %vm1049, %v986, 0
  %v1054 = vsel %vm1049, %v987, 0
  %v1057 = vsel %vm1049, %v988, 0
  %v1060 = vsel %vm1049, %v989, 0
  %v1063 = vsel %vm1049, %v990, 0
  %v1066 = vsel %vm1049, %v991, 0
  %v1069 = vsel %vm1049, %v992, 0
  %v1072 = vsel %vm1049, %v993, 0
  %v1075 = vsel %vm1049, %v994, 0
  %v1078 = vsel %vm1049, %v995, 0
  %v1081 = vsel %vm1049, %v996, 0
  %v1084 = vsel %vm1049, %v997, 0
  %v1087 = vsel %vm1049, %v998, 0
  %v1090 = vsel %vm1049, %v999, 0
  %v1093 = vsel %vm1049, %v1000, 0
  %v1096 = vsel %vm1049, %v1001, 0
  %v1099 = vsel %vm1049, %v1002, 0
  %v1102 = vsel %vm1049, %v1003, 0
  %v1105 = vsel %vm1049, %v1004, 0
  %v1108 = vsel %vm1049, %v1005, 0
  %v1111 = vsel %vm1049, %v1006, 0
  %v1114 = vsel %vm1049, %v1007, 0
  %v1117 = vsel %vm1049, %v1008, 0
  %v1120 = vsel %vm1049, %v1009, 0
  %v1123 = vsel %vm1049, %v1010, 0
  %v1126 = vsel %vm1049, %v1011, 0
  %v1129 = vsel %vm1049, %v1012, 0
  %v1132 = vsel %vm1049, %v1013, 0
  %v1135 = vsel %vm1049, %v1014, 0
  %v1138 = vsel %vm1049, %v1015, 0
  %v1141 = vsel %vm1049, %v1016, 0
  %v1144 = vsel %vm1049, %v1017, 0
  %v1147 = vsel %vm1049, %v1018, 0
  %v1150 = vsel %vm1049, %v1019, 0
  %v1153 = vsel %vm1049, %v1020, 0
  %v1156 = vsel %vm1049, %v1021, 0
  %v1159 = vsel %vm1049, %v1022, 0
  %v1162 = vsel %vm1049, %v1023, 0
  %v1165 = vsel %vm1049, %v1024, 0
  %v1168 = vsel %vm1049, %v1025, 0
  %v1171 = vsel %vm1049, %v1026, 0
  %v1174 = vsel %vm1049, %v1027, 0
  %v1177 = vsel %vm1049, %v1028, 0
  %v1180 = vsel %vm1049, %v1029, 0
  %v1183 = vsel %vm1049, %v1030, 0
  %v1186 = vsel %vm1049, %v1031, 0
  %v1189 = vsel %vm1049, %v1032, 0
  %v1192 = vsel %vm1049, %v1033, 0
  %v1195 = vsel %vm1049, %v1034, 0
  %v1198 = vsel %vm1049, %v1035, 0
  %v1201 = vsel %vm1049, %v1036, 0
  %v1204 = vsel %vm1049, %v1037, 0
  %v1207 = vsel %vm1049, %v1038, 0
  %v1210 = vsel %vm1049, %v1039, 0
  %v1213 = vsel %vm1049, %v1040, 0
  %v1216 = vsel %vm1049, %v1041, 0
  %v1219 = vsel %vm1049, %v1042, 0
  %1221 = vmatpush.msra.mxu0 0.0
  %1222 = vmatpush.msra.mxu0 0.0
  %1223 = vmatpush.msra.mxu0 0.0
  %1224 = vmatpush.msra.mxu0 0.0
  %1225 = vmatpush.msra.mxu0 0.0
  %1226 = vmatpush.msra.mxu0 0.0
  %1227 = vmatpush.msra.mxu0 0.0
  %1228 = vmatpush.msra.mxu0 0.0
  %1229 = vmatpush.msra.mxu0 0.0
  %1230 = vmatpush.msra.mxu0 0.0
  %1231 = vmatpush.msra.mxu0 0.0
  %1232 = vmatpush.msra.mxu0 0.0
  %1233 = vmatpush.msra.mxu0 %v1046
  %1234 = vmatpush.msra.mxu0 %v1045
  %1235 = vmatpush.msra.mxu0 %v1044
  %1236 = vmatpush.msra.mxu0 %v1043
  %1237 = vmatmul.f32.gmra.mxu0 %v1051
  %v1238 = vpop.f32.mrf.mxu0
  %v1239 = vadd.f32 %v1048, %v1238
  %1240 = vmatmul.f32.gmra.mxu0 %v1054
  %v1241 = vpop.f32.mrf.mxu0
  %v1242 = vadd.f32 %v1048, %v1241
  %1243 = vmatmul.f32.gmra.mxu0 %v1057
  %v1244 = vpop.f32.mrf.mxu0
  %v1245 = vadd.f32 %v1048, %v1244
  %1246 = vmatmul.f32.gmra.mxu0 %v1060
  %v1247 = vpop.f32.mrf.mxu0
  %v1248 = vadd.f32 %v1048, %v1247
  %1249 = vmatmul.f32.gmra.mxu0 %v1063
  %v1250 = vpop.f32.mrf.mxu0
  %v1251 = vadd.f32 %v1048, %v1250
  %1252 = vmatmul.f32.gmra.mxu0 %v1066
  %v1253 = vpop.f32.mrf.mxu0
  %v1254 = vadd.f32 %v1048, %v1253
  %1255 = vmatmul.f32.gmra.mxu0 %v1069
  %v1256 = vpop.f32.mrf.mxu0
  %v1257 = vadd.f32 %v1048, %v1256
  %1258 = vmatmul.f32.gmra.mxu0 %v1072
  %v1259 = vpop.f32.mrf.mxu0
  %v1260 = vadd.f32 %v1048, %v1259
  %1261 = vmatmul.f32.gmra.mxu0 %v1075
  %v1262 = vpop.f32.mrf.mxu0
  %v1263 = vadd.f32 %v1048, %v1262
  %1264 = vmatmul.f32.gmra.mxu0 %v1078
  %v1265 = vpop.f32.mrf.mxu0
  %v1266 = vadd.f32 %v1048, %v1265
  %1267 = vmatmul.f32.gmra.mxu0 %v1081
  %v1268 = vpop.f32.mrf.mxu0
  %v1269 = vadd.f32 %v1048, %v1268
  %1270 = vmatmul.f32.gmra.mxu0 %v1084
  %v1271 = vpop.f32.mrf.mxu0
  %v1272 = vadd.f32 %v1048, %v1271
  %1273 = vmatmul.f32.gmra.mxu0 %v1087
  %v1274 = vpop.f32.mrf.mxu0
  %v1275 = vadd.f32 %v1048, %v1274
  %1276 = vmatmul.f32.gmra.mxu0 %v1090
  %v1277 = vpop.f32.mrf.mxu0
  %v1278 = vadd.f32 %v1048, %v1277
  %1279 = vmatmul.f32.gmra.mxu0 %v1093
  %v1280 = vpop.f32.mrf.mxu0
  %v1281 = vadd.f32 %v1048, %v1280
  %1282 = vmatmul.f32.gmra.mxu0 %v1096
  %v1283 = vpop.f32.mrf.mxu0
  %v1284 = vadd.f32 %v1048, %v1283
  %1285 = vmatmul.f32.gmra.mxu0 %v1099
  %v1286 = vpop.f32.mrf.mxu0
  %v1287 = vadd.f32 %v1048, %v1286
  %1288 = vmatmul.f32.gmra.mxu0 %v1102
  %v1289 = vpop.f32.mrf.mxu0
  %v1290 = vadd.f32 %v1048, %v1289
  %1291 = vmatmul.f32.gmra.mxu0 %v1105
  %v1292 = vpop.f32.mrf.mxu0
  %v1293 = vadd.f32 %v1048, %v1292
  %1294 = vmatmul.f32.gmra.mxu0 %v1108
  %v1295 = vpop.f32.mrf.mxu0
  %v1296 = vadd.f32 %v1048, %v1295
  %1297 = vmatmul.f32.gmra.mxu0 %v1111
  %v1298 = vpop.f32.mrf.mxu0
  %v1299 = vadd.f32 %v1048, %v1298
  %1300 = vmatmul.f32.gmra.mxu0 %v1114
  %v1301 = vpop.f32.mrf.mxu0
  %v1302 = vadd.f32 %v1048, %v1301
  %1303 = vmatmul.f32.gmra.mxu0 %v1117
  %v1304 = vpop.f32.mrf.mxu0
  %v1305 = vadd.f32 %v1048, %v1304
  %1306 = vmatmul.f32.gmra.mxu0 %v1120
  %v1307 = vpop.f32.mrf.mxu0
  %v1308 = vadd.f32 %v1048, %v1307
  %1309 = vmatmul.f32.gmra.mxu0 %v1123
  %v1310 = vpop.f32.mrf.mxu0
  %v1311 = vadd.f32 %v1048, %v1310
  %1312 = vmatmul.f32.gmra.mxu0 %v1126
  %v1313 = vpop.f32.mrf.mxu0
  %v1314 = vadd.f32 %v1048, %v1313
  %1315 = vmatmul.f32.gmra.mxu0 %v1129
  %v1316 = vpop.f32.mrf.mxu0
  %v1317 = vadd.f32 %v1048, %v1316
  %1318 = vmatmul.f32.gmra.mxu0 %v1132
  %v1319 = vpop.f32.mrf.mxu0
  %v1320 = vadd.f32 %v1048, %v1319
  %1321 = vmatmul.f32.gmra.mxu0 %v1135
  %v1322 = vpop.f32.mrf.mxu0
  %v1323 = vadd.f32 %v1048, %v1322
  %1324 = vmatmul.f32.gmra.mxu0 %v1138
  %v1325 = vpop.f32.mrf.mxu0
  %v1326 = vadd.f32 %v1048, %v1325
  %1327 = vmatmul.f32.gmra.mxu0 %v1141
  %v1328 = vpop.f32.mrf.mxu0
  %v1329 = vadd.f32 %v1048, %v1328
  %1330 = vmatmul.f32.gmra.mxu0 %v1144
  %v1331 = vpop.f32.mrf.mxu0
  %v1332 = vadd.f32 %v1048, %v1331
  %1333 = vmatmul.f32.gmra.mxu0 %v1147
  %v1334 = vpop.f32.mrf.mxu0
  %v1335 = vadd.f32 %v1048, %v1334
  %1336 = vmatmul.f32.gmra.mxu0 %v1150
  %v1337 = vpop.f32.mrf.mxu0
  %v1338 = vadd.f32 %v1048, %v1337
  %1339 = vmatmul.f32.gmra.mxu0 %v1153
  %v1340 = vpop.f32.mrf.mxu0
  %v1341 = vadd.f32 %v1048, %v1340
  %1342 = vmatmul.f32.gmra.mxu0 %v1156
  %v1343 = vpop.f32.mrf.mxu0
  %v1344 = vadd.f32 %v1048, %v1343
  %1345 = vmatmul.f32.gmra.mxu0 %v1159
  %v1346 = vpop.f32.mrf.mxu0
  %v1347 = vadd.f32 %v1048, %v1346
  %1348 = vmatmul.f32.gmra.mxu0 %v1162
  %v1349 = vpop.f32.mrf.mxu0
  %v1350 = vadd.f32 %v1048, %v1349
  %1351 = vmatmul.f32.gmra.mxu0 %v1165
  %v1352 = vpop.f32.mrf.mxu0
  %v1353 = vadd.f32 %v1048, %v1352
  %1354 = vmatmul.f32.gmra.mxu0 %v1168
  %v1355 = vpop.f32.mrf.mxu0
  %v1356 = vadd.f32 %v1048, %v1355
  %1357 = vmatmul.f32.gmra.mxu0 %v1171
  %v1358 = vpop.f32.mrf.mxu0
  %v1359 = vadd.f32 %v1048, %v1358
  %1360 = vmatmul.f32.gmra.mxu0 %v1174
  %v1361 = vpop.f32.mrf.mxu0
  %v1362 = vadd.f32 %v1048, %v1361
  %1363 = vmatmul.f32.gmra.mxu0 %v1177
  %v1364 = vpop.f32.mrf.mxu0
  %v1365 = vadd.f32 %v1048, %v1364
  %1366 = vmatmul.f32.gmra.mxu0 %v1180
  %v1367 = vpop.f32.mrf.mxu0
  %v1368 = vadd.f32 %v1048, %v1367
  %1369 = vmatmul.f32.gmra.mxu0 %v1183
  %v1370 = vpop.f32.mrf.mxu0
  %v1371 = vadd.f32 %v1048, %v1370
  %1372 = vmatmul.f32.gmra.mxu0 %v1186
  %v1373 = vpop.f32.mrf.mxu0
  %v1374 = vadd.f32 %v1048, %v1373
  %1375 = vmatmul.f32.gmra.mxu0 %v1189
  %v1376 = vpop.f32.mrf.mxu0
  %v1377 = vadd.f32 %v1048, %v1376
  %1378 = vmatmul.f32.gmra.mxu0 %v1192
  %v1379 = vpop.f32.mrf.mxu0
  %v1380 = vadd.f32 %v1048, %v1379
  %1381 = vmatmul.f32.gmra.mxu0 %v1195
  %v1382 = vpop.f32.mrf.mxu0
  %v1383 = vadd.f32 %v1048, %v1382
  %1384 = vmatmul.f32.gmra.mxu0 %v1198
  %v1385 = vpop.f32.mrf.mxu0
  %v1386 = vadd.f32 %v1048, %v1385
  %1387 = vmatmul.f32.gmra.mxu0 %v1201
  %v1388 = vpop.f32.mrf.mxu0
  %v1389 = vadd.f32 %v1048, %v1388
  %1390 = vmatmul.f32.gmra.mxu0 %v1204
  %v1391 = vpop.f32.mrf.mxu0
  %v1392 = vadd.f32 %v1048, %v1391
  %1393 = vmatmul.f32.gmra.mxu0 %v1207
  %v1394 = vpop.f32.mrf.mxu0
  %v1395 = vadd.f32 %v1048, %v1394
  %1396 = vmatmul.f32.gmra.mxu0 %v1210
  %v1397 = vpop.f32.mrf.mxu0
  %v1398 = vadd.f32 %v1048, %v1397
  %1399 = vmatmul.f32.gmra.mxu0 %v1213
  %v1400 = vpop.f32.mrf.mxu0
  %v1401 = vadd.f32 %v1048, %v1400
  %1402 = vmatmul.f32.gmra.mxu0 %v1216
  %v1403 = vpop.f32.mrf.mxu0
  %v1404 = vadd.f32 %v1048, %v1403
  %1405 = vmatmul.f32.gmra.mxu0 %v1219
  %v1406 = vpop.f32.mrf.mxu0
  %v1407 = vadd.f32 %v1048, %v1406
  %1408 = vdwg.mxu0
  %v1409 = vmax.f32 %v1239, 0.0
  %v1410 = vmax.f32 %v1242, 0.0
  %v1411 = vmax.f32 %v1245, 0.0
  %v1412 = vmax.f32 %v1248, 0.0
  %v1413 = vmax.f32 %v1251, 0.0
  %v1414 = vmax.f32 %v1254, 0.0
  %v1415 = vmax.f32 %v1257, 0.0
  %v1416 = vmax.f32 %v1260, 0.0
  %v1417 = vmax.f32 %v1263, 0.0
  %v1418 = vmax.f32 %v1266, 0.0
  %v1419 = vmax.f32 %v1269, 0.0
  %v1420 = vmax.f32 %v1272, 0.0
  %v1421 = vmax.f32 %v1275, 0.0
  %v1422 = vmax.f32 %v1278, 0.0
  %v1423 = vmax.f32 %v1281, 0.0
  %v1424 = vmax.f32 %v1284, 0.0
  %v1425 = vmax.f32 %v1287, 0.0
  %v1426 = vmax.f32 %v1290, 0.0
  %v1427 = vmax.f32 %v1293, 0.0
  %v1428 = vmax.f32 %v1296, 0.0
  %v1429 = vmax.f32 %v1299, 0.0
  %v1430 = vmax.f32 %v1302, 0.0
  %v1431 = vmax.f32 %v1305, 0.0
  %v1432 = vmax.f32 %v1308, 0.0
  %v1433 = vmax.f32 %v1311, 0.0
  %v1434 = vmax.f32 %v1314, 0.0
  %v1435 = vmax.f32 %v1317, 0.0
  %v1436 = vmax.f32 %v1320, 0.0
  %v1437 = vmax.f32 %v1323, 0.0
  %v1438 = vmax.f32 %v1326, 0.0
  %v1439 = vmax.f32 %v1329, 0.0
  %v1440 = vmax.f32 %v1332, 0.0
  %v1441 = vmax.f32 %v1335, 0.0
  %v1442 = vmax.f32 %v1338, 0.0
  %v1443 = vmax.f32 %v1341, 0.0
  %v1444 = vmax.f32 %v1344, 0.0
  %v1445 = vmax.f32 %v1347, 0.0
  %v1446 = vmax.f32 %v1350, 0.0
  %v1447 = vmax.f32 %v1353, 0.0
  %v1448 = vmax.f32 %v1356, 0.0
  %v1449 = vmax.f32 %v1359, 0.0
  %v1450 = vmax.f32 %v1362, 0.0
  %v1451 = vmax.f32 %v1365, 0.0
  %v1452 = vmax.f32 %v1368, 0.0
  %v1453 = vmax.f32 %v1371, 0.0
  %v1454 = vmax.f32 %v1374, 0.0
  %v1455 = vmax.f32 %v1377, 0.0
  %v1456 = vmax.f32 %v1380, 0.0
  %v1457 = vmax.f32 %v1383, 0.0
  %v1458 = vmax.f32 %v1386, 0.0
  %v1459 = vmax.f32 %v1389, 0.0
  %v1460 = vmax.f32 %v1392, 0.0
  %v1461 = vmax.f32 %v1395, 0.0
  %v1462 = vmax.f32 %v1398, 0.0
  %v1463 = vmax.f32 %v1401, 0.0
  %v1464 = vmax.f32 %v1404, 0.0
  %v1465 = vmax.f32 %v1407, 0.0
  %1466 = vst [vmem:[#allocation2] sm:$0xff] %v1409
  %1467 = vst [vmem:[#allocation2 + $0x8] sm:$0xff] %v1410
  %1468 = vst [vmem:[#allocation2 + $0x10] sm:$0xff] %v1411
  %1469 = vst [vmem:[#allocation2 + $0x18] sm:$0xff] %v1412
  %1470 = vst [vmem:[#allocation2 + $0x20] sm:$0xff] %v1413
  %1471 = vst [vmem:[#allocation2 + $0x28] sm:$0xff] %v1414
  %1472 = vst [vmem:[#allocation2 + $0x30] sm:$0xff] %v1415
  %1473 = vst [vmem:[#allocation2 + $0x38] sm:$0xff] %v1416
  %1474 = vst [vmem:[#allocation2 + $0x40] sm:$0xff] %v1417
  %1475 = vst [vmem:[#allocation2 + $0x48] sm:$0xff] %v1418
  %1476 = vst [vmem:[#allocation2 + $0x50] sm:$0xff] %v1419
  %1477 = vst [vmem:[#allocation2 + $0x58] sm:$0xff] %v1420
  %1478 = vst [vmem:[#allocation2 + $0x60] sm:$0xff] %v1421
  %1479 = vst [vmem:[#allocation2 + $0x68] sm:$0xff] %v1422
  %1480 = vst [vmem:[#allocation2 + $0x70] sm:$0xff] %v1423
  %1481 = vst [vmem:[#allocation2 + $0x78] sm:$0xff] %v1424
  %1482 = vst [vmem:[#allocation2 + $0x80] sm:$0xff] %v1425
  %1483 = vst [vmem:[#allocation2 + $0x88] sm:$0xff] %v1426
  %1484 = vst [vmem:[#allocation2 + $0x90] sm:$0xff] %v1427
  %1485 = vst [vmem:[#allocation2 + $0x98] sm:$0xff] %v1428
  %1486 = vst [vmem:[#allocation2 + $0xa0] sm:$0xff] %v1429
  %1487 = vst [vmem:[#allocation2 + $0xa8] sm:$0xff] %v1430
  %1488 = vst [vmem:[#allocation2 + $0xb0] sm:$0xff] %v1431
  %1489 = vst [vmem:[#allocation2 + $0xb8] sm:$0xff] %v1432
  %1490 = vst [vmem:[#allocation2 + $0xc0] sm:$0xff] %v1433
  %1491 = vst [vmem:[#allocation2 + $0xc8] sm:$0xff] %v1434
  %1492 = vst [vmem:[#allocation2 + $0xd0] sm:$0xff] %v1435
  %1493 = vst [vmem:[#allocation2 + $0xd8] sm:$0xff] %v1436
  %1494 = vst [vmem:[#allocation2 + $0xe0] sm:$0xff] %v1437
  %1495 = vst [vmem:[#allocation2 + $0xe8] sm:$0xff] %v1438
  %1496 = vst [vmem:[#allocation2 + $0xf0] sm:$0xff] %v1439
  %1497 = vst [vmem:[#allocation2 + $0xf8] sm:$0xff] %v1440
  %1498 = vst [vmem:[#allocation2 + $0x100] sm:$0xff] %v1441
  %1499 = vst [vmem:[#allocation2 + $0x108] sm:$0xff] %v1442
  %1500 = vst [vmem:[#allocation2 + $0x110] sm:$0xff] %v1443
  %1501 = vst [vmem:[#allocation2 + $0x118] sm:$0xff] %v1444
  %1502 = vst [vmem:[#allocation2 + $0x120] sm:$0xff] %v1445
  %1503 = vst [vmem:[#allocation2 + $0x128] sm:$0xff] %v1446
  %1504 = vst [vmem:[#allocation2 + $0x130] sm:$0xff] %v1447
  %1505 = vst [vmem:[#allocation2 + $0x138] sm:$0xff] %v1448
  %1506 = vst [vmem:[#allocation2 + $0x140] sm:$0xff] %v1449
  %1507 = vst [vmem:[#allocation2 + $0x148] sm:$0xff] %v1450
  %1508 = vst [vmem:[#allocation2 + $0x150] sm:$0xff] %v1451
  %1509 = vst [vmem:[#allocation2 + $0x158] sm:$0xff] %v1452
  %1510 = vst [vmem:[#allocation2 + $0x160] sm:$0xff] %v1453
  %1511 = vst [vmem:[#allocation2 + $0x168] sm:$0xff] %v1454
  %1512 = vst [vmem:[#allocation2 + $0x170] sm:$0xff] %v1455
  %1513 = vst [vmem:[#allocation2 + $0x178] sm:$0xff] %v1456
  %1514 = vst [vmem:[#allocation2 + $0x180] sm:$0xff] %v1457
  %1515 = vst [vmem:[#allocation2 + $0x188] sm:$0xff] %v1458
  %1516 = vst [vmem:[#allocation2 + $0x190] sm:$0xff] %v1459
  %1517 = vst [vmem:[#allocation2 + $0x198] sm:$0xff] %v1460
  %1518 = vst [vmem:[#allocation2 + $0x1a0] sm:$0xff] %v1461
  %1519 = vst [vmem:[#allocation2 + $0x1a8] sm:$0xff] %v1462
  %1520 = vst [vmem:[#allocation2 + $0x1b0] sm:$0xff] %v1463
  %1521 = vst [vmem:[#allocation2 + $0x1b8] sm:$0xff] %v1464
  %1522 = vst [vmem:[#allocation2 + $0x1c0] sm:$0x3] %v1465
  %1523 = vst [vmem:[#allocation3 + $0x62] sm:$0xff] 0.0
  %v1524 = vld [vmem:[#allocation2] ss:$2 sm:$0x7f]
  %s1525 = scalar_lea.vmem [#allocation2], 1
  %v1526 = vld [vmem:[%s1525] ss:$2 sm:$0x7f]
  %v1527 = vmax.f32 %v1524, %v1526
  %s1528 = scalar_lea.vmem [#allocation2], 15
  %v1529 = vld [vmem:[%s1528] ss:$2 sm:$0x7f]
  %v1530 = vmax.f32 %v1527, %v1529
  %s1531 = scalar_lea.vmem [#allocation2], 16
  %v1532 = vld [vmem:[%s1531] ss:$2 sm:$0x7f]
  %v1533 = vmax.f32 %v1530, %v1532
  %1534 = vst [vmem:[#allocation3] sm:$0x7f] %v1533
  %s1535 = scalar_lea.vmem [#allocation2], 30
  %v1536 = vld [vmem:[%s1535] ss:$2 sm:$0x7f]
  %s1537 = scalar_lea.vmem [#allocation2], 31
  %v1538 = vld [vmem:[%s1537] ss:$2 sm:$0x7f]
  %v1539 = vmax.f32 %v1536, %v1538
  %s1540 = scalar_lea.vmem [#allocation2], 45
  %v1541 = vld [vmem:[%s1540] ss:$2 sm:$0x7f]
  %v1542 = vmax.f32 %v1539, %v1541
  %s1543 = scalar_lea.vmem [#allocation2], 46
  %v1544 = vld [vmem:[%s1543] ss:$2 sm:$0x7f]
  %v1545 = vmax.f32 %v1542, %v1544
  %1546 = vst [vmem:[#allocation3 + $0x7] sm:$0x7f] %v1545
  %s1547 = scalar_lea.vmem [#allocation2], 60
  %v1548 = vld [vmem:[%s1547] ss:$2 sm:$0x7f]
  %s1549 = scalar_lea.vmem [#allocation2], 61
  %v1550 = vld [vmem:[%s1549] ss:$2 sm:$0x7f]
  %v1551 = vmax.f32 %v1548, %v1550
  %s1552 = scalar_lea.vmem [#allocation2], 75
  %v1553 = vld [vmem:[%s1552] ss:$2 sm:$0x7f]
  %v1554 = vmax.f32 %v1551, %v1553
  %s1555 = scalar_lea.vmem [#allocation2], 76
  %v1556 = vld [vmem:[%s1555] ss:$2 sm:$0x7f]
  %v1557 = vmax.f32 %v1554, %v1556
  %1558 = vst [vmem:[#allocation3 + $0xe] sm:$0x7f] %v1557
  %s1559 = scalar_lea.vmem [#allocation2], 90
  %v1560 = vld [vmem:[%s1559] ss:$2 sm:$0x7f]
  %s1561 = scalar_lea.vmem [#allocation2], 91
  %v1562 = vld [vmem:[%s1561] ss:$2 sm:$0x7f]
  %v1563 = vmax.f32 %v1560, %v1562
  %s1564 = scalar_lea.vmem [#allocation2], 105
  %v1565 = vld [vmem:[%s1564] ss:$2 sm:$0x7f]
  %v1566 = vmax.f32 %v1563, %v1565
  %s1567 = scalar_lea.vmem [#allocation2], 106
  %v1568 = vld [vmem:[%s1567] ss:$2 sm:$0x7f]
  %v1569 = vmax.f32 %v1566, %v1568
  %1570 = vst [vmem:[#allocation3 + $0x15] sm:$0x7f] %v1569
  %s1571 = scalar_lea.vmem [#allocation2], 120
  %v1572 = vld [vmem:[%s1571] ss:$2 sm:$0x7f]
  %s1573 = scalar_lea.vmem [#allocation2], 121
  %v1574 = vld [vmem:[%s1573] ss:$2 sm:$0x7f]
  %v1575 = vmax.f32 %v1572, %v1574
  %s1576 = scalar_lea.vmem [#allocation2], 135
  %v1577 = vld [vmem:[%s1576] ss:$2 sm:$0x7f]
  %v1578 = vmax.f32 %v1575, %v1577
  %s1579 = scalar_lea.vmem [#allocation2], 136
  %v1580 = vld [vmem:[%s1579] ss:$2 sm:$0x7f]
  %v1581 = vmax.f32 %v1578, %v1580
  %1582 = vst [vmem:[#allocation3 + $0x1c] sm:$0x7f] %v1581
  %s1583 = scalar_lea.vmem [#allocation2], 150
  %v1584 = vld [vmem:[%s1583] ss:$2 sm:$0x7f]
  %s1585 = scalar_lea.vmem [#allocation2], 151
  %v1586 = vld [vmem:[%s1585] ss:$2 sm:$0x7f]
  %v1587 = vmax.f32 %v1584, %v1586
  %s1588 = scalar_lea.vmem [#allocation2], 165
  %v1589 = vld [vmem:[%s1588] ss:$2 sm:$0x7f]
  %v1590 = vmax.f32 %v1587, %v1589
  %s1591 = scalar_lea.vmem [#allocation2], 166
  %v1592 = vld [vmem:[%s1591] ss:$2 sm:$0x7f]
  %v1593 = vmax.f32 %v1590, %v1592
  %1594 = vst [vmem:[#allocation3 + $0x23] sm:$0x7f] %v1593
  %s1595 = scalar_lea.vmem [#allocation2], 180
  %v1596 = vld [vmem:[%s1595] ss:$2 sm:$0x7f]
  %s1597 = scalar_lea.vmem [#allocation2], 181
  %v1598 = vld [vmem:[%s1597] ss:$2 sm:$0x7f]
  %v1599 = vmax.f32 %v1596, %v1598
  %s1600 = scalar_lea.vmem [#allocation2], 195
  %v1601 = vld [vmem:[%s1600] ss:$2 sm:$0x7f]
  %v1602 = vmax.f32 %v1599, %v1601
  %s1603 = scalar_lea.vmem [#allocation2], 196
  %v1604 = vld [vmem:[%s1603] ss:$2 sm:$0x7f]
  %v1605 = vmax.f32 %v1602, %v1604
  %1606 = vst [vmem:[#allocation3 + $0x2a] sm:$0x7f] %v1605
  %s1607 = scalar_lea.vmem [#allocation2], 225
  %v1608 = vld [vmem:[%s1607] ss:$2 sm:$0x7f]
  %s1609 = scalar_lea.vmem [#allocation2], 226
  %v1610 = vld [vmem:[%s1609] ss:$2 sm:$0x7f]
  %v1611 = vmax.f32 %v1608, %v1610
  %s1612 = scalar_lea.vmem [#allocation2], 240
  %v1613 = vld [vmem:[%s1612] ss:$2 sm:$0x7f]
  %v1614 = vmax.f32 %v1611, %v1613
  %s1615 = scalar_lea.vmem [#allocation2], 241
  %v1616 = vld [vmem:[%s1615] ss:$2 sm:$0x7f]
  %v1617 = vmax.f32 %v1614, %v1616
  %1618 = vst [vmem:[#allocation3 + $0x31] sm:$0x7f] %v1617
  %s1619 = scalar_lea.vmem [#allocation2], 255
  %v1620 = vld [vmem:[%s1619] ss:$2 sm:$0x7f]
  %s1621 = scalar_lea.vmem [#allocation2], 256
  %v1622 = vld [vmem:[%s1621] ss:$2 sm:$0x7f]
  %v1623 = vmax.f32 %v1620, %v1622
  %s1624 = scalar_lea.vmem [#allocation2], 270
  %v1625 = vld [vmem:[%s1624] ss:$2 sm:$0x7f]
  %v1626 = vmax.f32 %v1623, %v1625
  %s1627 = scalar_lea.vmem [#allocation2], 271
  %v1628 = vld [vmem:[%s1627] ss:$2 sm:$0x7f]
  %v1629 = vmax.f32 %v1626, %v1628
  %1630 = vst [vmem:[#allocation3 + $0x38] sm:$0x7f] %v1629
  %s1631 = scalar_lea.vmem [#allocation2], 285
  %v1632 = vld [vmem:[%s1631] ss:$2 sm:$0x7f]
  %s1633 = scalar_lea.vmem [#allocation2], 286
  %v1634 = vld [vmem:[%s1633] ss:$2 sm:$0x7f]
  %v1635 = vmax.f32 %v1632, %v1634
  %s1636 = scalar_lea.vmem [#allocation2], 300
  %v1637 = vld [vmem:[%s1636] ss:$2 sm:$0x7f]
  %v1638 = vmax.f32 %v1635, %v1637
  %s1639 = scalar_lea.vmem [#allocation2], 301
  %v1640 = vld [vmem:[%s1639] ss:$2 sm:$0x7f]
  %v1641 = vmax.f32 %v1638, %v1640
  %1642 = vst [vmem:[#allocation3 + $0x3f] sm:$0x7f] %v1641
  %s1643 = scalar_lea.vmem [#allocation2], 315
  %v1644 = vld [vmem:[%s1643] ss:$2 sm:$0x7f]
  %s1645 = scalar_lea.vmem [#allocation2], 316
  %v1646 = vld [vmem:[%s1645] ss:$2 sm:$0x7f]
  %v1647 = vmax.f32 %v1644, %v1646
  %s1648 = scalar_lea.vmem [#allocation2], 330
  %v1649 = vld [vmem:[%s1648] ss:$2 sm:$0x7f]
  %v1650 = vmax.f32 %v1647, %v1649
  %s1651 = scalar_lea.vmem [#allocation2], 331
  %v1652 = vld [vmem:[%s1651] ss:$2 sm:$0x7f]
  %v1653 = vmax.f32 %v1650, %v1652
  %1654 = vst [vmem:[#allocation3 + $0x46] sm:$0x7f] %v1653
  %s1655 = scalar_lea.vmem [#allocation2], 345
  %v1656 = vld [vmem:[%s1655] ss:$2 sm:$0x7f]
  %s1657 = scalar_lea.vmem [#allocation2], 346
  %v1658 = vld [vmem:[%s1657] ss:$2 sm:$0x7f]
  %v1659 = vmax.f32 %v1656, %v1658
  %s1660 = scalar_lea.vmem [#allocation2], 360
  %v1661 = vld [vmem:[%s1660] ss:$2 sm:$0x7f]
  %v1662 = vmax.f32 %v1659, %v1661
  %s1663 = scalar_lea.vmem [#allocation2], 361
  %v1664 = vld [vmem:[%s1663] ss:$2 sm:$0x7f]
  %v1665 = vmax.f32 %v1662, %v1664
  %1666 = vst [vmem:[#allocation3 + $0x4d] sm:$0x7f] %v1665
  %s1667 = scalar_lea.vmem [#allocation2], 375
  %v1668 = vld [vmem:[%s1667] ss:$2 sm:$0x7f]
  %s1669 = scalar_lea.vmem [#allocation2], 376
  %v1670 = vld [vmem:[%s1669] ss:$2 sm:$0x7f]
  %v1671 = vmax.f32 %v1668, %v1670
  %s1672 = scalar_lea.vmem [#allocation2], 390
  %v1673 = vld [vmem:[%s1672] ss:$2 sm:$0x7f]
  %v1674 = vmax.f32 %v1671, %v1673
  %s1675 = scalar_lea.vmem [#allocation2], 391
  %v1676 = vld [vmem:[%s1675] ss:$2 sm:$0x7f]
  %v1677 = vmax.f32 %v1674, %v1676
  %1678 = vst [vmem:[#allocation3 + $0x54] sm:$0x7f] %v1677
  %s1679 = scalar_lea.vmem [#allocation2], 405
  %v1680 = vld [vmem:[%s1679] ss:$2 sm:$0x7f]
  %s1681 = scalar_lea.vmem [#allocation2], 406
  %v1682 = vld [vmem:[%s1681] ss:$2 sm:$0x7f]
  %v1683 = vmax.f32 %v1680, %v1682
  %s1684 = scalar_lea.vmem [#allocation2], 420
  %v1685 = vld [vmem:[%s1684] ss:$2 sm:$0x7f]
  %v1686 = vmax.f32 %v1683, %v1685
  %s1687 = scalar_lea.vmem [#allocation2], 421
  %v1688 = vld [vmem:[%s1687] ss:$2 sm:$0x7f]
  %v1689 = vmax.f32 %v1686, %v1688
  %1690 = vst [vmem:[#allocation3 + $0x5b] sm:$0x7f] %v1689
  %v1691 = vld [vmem:[#allocation3] sm:$0xff]
  %v1692 = vld [vmem:[#allocation3 + $0x8] sm:$0xff]
  %v1693 = vld [vmem:[#allocation3 + $0x10] sm:$0xff]
  %v1694 = vld [vmem:[#allocation3 + $0x18] sm:$0xff]
  %v1695 = vld [vmem:[#allocation3 + $0x20] sm:$0xff]
  %v1696 = vld [vmem:[#allocation3 + $0x28] sm:$0xff]
  %v1697 = vld [vmem:[#allocation3 + $0x30] sm:$0xff]
  %v1698 = vld [vmem:[#allocation3 + $0x38] sm:$0xff]
  %v1699 = vld [vmem:[#allocation3 + $0x40] sm:$0xff]
  %v1700 = vld [vmem:[#allocation3 + $0x48] sm:$0xff]
  %v1701 = vld [vmem:[#allocation3 + $0x50] sm:$0xff]
  %v1702 = vld [vmem:[#allocation3 + $0x58] sm:$0xff]
  %v1703 = vld [vmem:[#allocation3 + $0x60] sm:$0x3]
  %v1704 = vld [vmem:[#allocation3 + $0x1] sm:$0xff]
  %v1705 = vld [vmem:[#allocation3 + $0x9] sm:$0xff]
  %v1706 = vld [vmem:[#allocation3 + $0x11] sm:$0xff]
  %v1707 = vld [vmem:[#allocation3 + $0x19] sm:$0xff]
  %v1708 = vld [vmem:[#allocation3 + $0x21] sm:$0xff]
  %v1709 = vld [vmem:[#allocation3 + $0x29] sm:$0xff]
  %v1710 = vld [vmem:[#allocation3 + $0x31] sm:$0xff]
  %v1711 = vld [vmem:[#allocation3 + $0x39] sm:$0xff]
  %v1712 = vld [vmem:[#allocation3 + $0x41] sm:$0xff]
  %v1713 = vld [vmem:[#allocation3 + $0x49] sm:$0xff]
  %v1714 = vld [vmem:[#allocation3 + $0x51] sm:$0xff]
  %v1715 = vld [vmem:[#allocation3 + $0x59] sm:$0xff]
  %v1716 = vld [vmem:[#allocation3 + $0x61] sm:$0x3]
  %v1717 = vld [vmem:[#allocation3 + $0x7] sm:$0xff]
  %v1718 = vld [vmem:[#allocation3 + $0xf] sm:$0xff]
  %v1719 = vld [vmem:[#allocation3 + $0x17] sm:$0xff]
  %v1720 = vld [vmem:[#allocation3 + $0x1f] sm:$0xff]
  %v1721 = vld [vmem:[#allocation3 + $0x27] sm:$0xff]
  %v1722 = vld [vmem:[#allocation3 + $0x2f] sm:$0xff]
  %v1723 = vld [vmem:[#allocation3 + $0x37] sm:$0xff]
  %v1724 = vld [vmem:[#allocation3 + $0x3f] sm:$0xff]
  %v1725 = vld [vmem:[#allocation3 + $0x47] sm:$0xff]
  %v1726 = vld [vmem:[#allocation3 + $0x4f] sm:$0xff]
  %v1727 = vld [vmem:[#allocation3 + $0x57] sm:$0xff]
  %v1728 = vld [vmem:[#allocation3 + $0x5f] sm:$0xff]
  %v1729 = vld [vmem:[#allocation3 + $0x67] sm:$0x3]
  %v1730 = vld [vmem:[#allocation3 + $0x8] sm:$0xff]
  %v1731 = vld [vmem:[#allocation3 + $0x10] sm:$0xff]
  %v1732 = vld [vmem:[#allocation3 + $0x18] sm:$0xff]
  %v1733 = vld [vmem:[#allocation3 + $0x20] sm:$0xff]
  %v1734 = vld [vmem:[#allocation3 + $0x28] sm:$0xff]
  %v1735 = vld [vmem:[#allocation3 + $0x30] sm:$0xff]
  %v1736 = vld [vmem:[#allocation3 + $0x38] sm:$0xff]
  %v1737 = vld [vmem:[#allocation3 + $0x40] sm:$0xff]
  %v1738 = vld [vmem:[#allocation3 + $0x48] sm:$0xff]
  %v1739 = vld [vmem:[#allocation3 + $0x50] sm:$0xff]
  %v1740 = vld [vmem:[#allocation3 + $0x58] sm:$0xff]
  %v1741 = vld [vmem:[#allocation3 + $0x60] sm:$0xff]
  %v1742 = vld [vmem:[#allocation3 + $0x68] sm:$0x3]
  %1756 = vrot.lane.b32.xlu0 %v1704, 16
  %v1757 = vpop.permute.xlu0 %1756
  %1758 = vrot.lane.b32.xlu0 %v1705, 16
  %v1759 = vpop.permute.xlu0 %1758
  %1760 = vrot.lane.b32.xlu0 %v1706, 16
  %v1761 = vpop.permute.xlu0 %1760
  %1762 = vrot.lane.b32.xlu0 %v1707, 16
  %v1763 = vpop.permute.xlu0 %1762
  %1764 = vrot.lane.b32.xlu0 %v1708, 16
  %v1765 = vpop.permute.xlu0 %1764
  %1766 = vrot.lane.b32.xlu0 %v1709, 16
  %v1767 = vpop.permute.xlu0 %1766
  %1768 = vrot.lane.b32.xlu0 %v1710, 16
  %v1769 = vpop.permute.xlu0 %1768
  %1770 = vrot.lane.b32.xlu0 %v1711, 16
  %v1771 = vpop.permute.xlu0 %1770
  %1772 = vrot.lane.b32.xlu0 %v1712, 16
  %v1773 = vpop.permute.xlu0 %1772
  %1774 = vrot.lane.b32.xlu0 %v1713, 16
  %v1775 = vpop.permute.xlu0 %1774
  %1776 = vrot.lane.b32.xlu0 %v1714, 16
  %v1777 = vpop.permute.xlu0 %1776
  %1778 = vrot.lane.b32.xlu0 %v1715, 16
  %v1779 = vpop.permute.xlu0 %1778
  %1780 = vrot.lane.b32.xlu0 %v1716, 16
  %v1781 = vpop.permute.xlu0 %1780
  %1808 = vrot.lane.b32.xlu0 %v1717, 32
  %v1809 = vpop.permute.xlu0 %1808
  %1810 = vrot.lane.b32.xlu0 %v1718, 32
  %v1811 = vpop.permute.xlu0 %1810
  %1812 = vrot.lane.b32.xlu0 %v1719, 32
  %v1813 = vpop.permute.xlu0 %1812
  %1814 = vrot.lane.b32.xlu0 %v1720, 32
  %v1815 = vpop.permute.xlu0 %1814
  %1816 = vrot.lane.b32.xlu0 %v1721, 32
  %v1817 = vpop.permute.xlu0 %1816
  %1818 = vrot.lane.b32.xlu0 %v1722, 32
  %v1819 = vpop.permute.xlu0 %1818
  %1820 = vrot.lane.b32.xlu0 %v1723, 32
  %v1821 = vpop.permute.xlu0 %1820
  %1822 = vrot.lane.b32.xlu0 %v1724, 32
  %v1823 = vpop.permute.xlu0 %1822
  %1824 = vrot.lane.b32.xlu0 %v1725, 32
  %v1825 = vpop.permute.xlu0 %1824
  %1826 = vrot.lane.b32.xlu0 %v1726, 32
  %v1827 = vpop.permute.xlu0 %1826
  %1828 = vrot.lane.b32.xlu0 %v1727, 32
  %v1829 = vpop.permute.xlu0 %1828
  %1830 = vrot.lane.b32.xlu0 %v1728, 32
  %v1831 = vpop.permute.xlu0 %1830
  %1832 = vrot.lane.b32.xlu0 %v1729, 32
  %v1833 = vpop.permute.xlu0 %1832
  %1860 = vrot.lane.b32.xlu0 %v1730, 48
  %v1861 = vpop.permute.xlu0 %1860
  %1862 = vrot.lane.b32.xlu0 %v1731, 48
  %v1863 = vpop.permute.xlu0 %1862
  %1864 = vrot.lane.b32.xlu0 %v1732, 48
  %v1865 = vpop.permute.xlu0 %1864
  %1866 = vrot.lane.b32.xlu0 %v1733, 48
  %v1867 = vpop.permute.xlu0 %1866
  %1868 = vrot.lane.b32.xlu0 %v1734, 48
  %v1869 = vpop.permute.xlu0 %1868
  %1870 = vrot.lane.b32.xlu0 %v1735, 48
  %v1871 = vpop.permute.xlu0 %1870
  %1872 = vrot.lane.b32.xlu0 %v1736, 48
  %v1873 = vpop.permute.xlu0 %1872
  %1874 = vrot.lane.b32.xlu0 %v1737, 48
  %v1875 = vpop.permute.xlu0 %1874
  %1876 = vrot.lane.b32.xlu0 %v1738, 48
  %v1877 = vpop.permute.xlu0 %1876
  %1878 = vrot.lane.b32.xlu0 %v1739, 48
  %v1879 = vpop.permute.xlu0 %1878
  %1880 = vrot.lane.b32.xlu0 %v1740, 48
  %v1881 = vpop.permute.xlu0 %1880
  %1882 = vrot.lane.b32.xlu0 %v1741, 48
  %v1883 = vpop.permute.xlu0 %1882
  %1884 = vrot.lane.b32.xlu0 %v1742, 48
  %v1885 = vpop.permute.xlu0 %1884
  %v1899 = vsel %vm927, %v1691, %v1757
  %v1900 = vsel %vm927, %v1692, %v1759
  %v1901 = vsel %vm927, %v1693, %v1761
  %v1902 = vsel %vm927, %v1694, %v1763
  %v1903 = vsel %vm927, %v1695, %v1765
  %v1904 = vsel %vm927, %v1696, %v1767
  %v1905 = vsel %vm927, %v1697, %v1769
  %v1906 = vsel %vm927, %v1698, %v1771
  %v1907 = vsel %vm927, %v1699, %v1773
  %v1908 = vsel %vm927, %v1700, %v1775
  %v1909 = vsel %vm927, %v1701, %v1777
  %v1910 = vsel %vm927, %v1702, %v1779
  %v1911 = vsel %vm927, %v1703, %v1781
  %v1912 = vsel %vm1049, %v1899, %v1809
  %v1913 = vsel %vm1049, %v1900, %v1811
  %v1914 = vsel %vm1049, %v1901, %v1813
  %v1915 = vsel %vm1049, %v1902, %v1815
  %v1916 = vsel %vm1049, %v1903, %v1817
  %v1917 = vsel %vm1049, %v1904, %v1819
  %v1918 = vsel %vm1049, %v1905, %v1821
  %v1919 = vsel %vm1049, %v1906, %v1823
  %v1920 = vsel %vm1049, %v1907, %v1825
  %v1921 = vsel %vm1049, %v1908, %v1827
  %v1922 = vsel %vm1049, %v1909, %v1829
  %v1923 = vsel %vm1049, %v1910, %v1831
  %v1924 = vsel %vm1049, %v1911, %v1833
  %vm1925 = vcmask 392192
  %v1926 = vsel %vm1925, %v1912, %v1861
  %v1927 = vsel %vm1925, %v1913, %v1863
  %v1928 = vsel %vm1925, %v1914, %v1865
  %v1929 = vsel %vm1925, %v1915, %v1867
  %v1930 = vsel %vm1925, %v1916, %v1869
  %v1931 = vsel %vm1925, %v1917, %v1871
  %v1932 = vsel %vm1925, %v1918, %v1873
  %v1933 = vsel %vm1925, %v1919, %v1875
  %v1934 = vsel %vm1925, %v1920, %v1877
  %v1935 = vsel %vm1925, %v1921, %v1879
  %v1936 = vsel %vm1925, %v1922, %v1881
  %v1937 = vsel %vm1925, %v1923, %v1883
  %v1938 = vsel %vm1925, %v1924, %v1885
  %v1939 = vld [vmem:[%s1 + $0x28] sm:$0xff]
  %v1940 = vld [vmem:[%s1 + $0x30] sm:$0xff]
  %v1941 = vld [vmem:[%s1 + $0x38] sm:$0xff]
  %v1942 = vld [vmem:[%s1 + $0x40] sm:$0xff]
  %v1943 = vld [vmem:[%s1 + $0x48] sm:$0xff]
  %v1944 = vld [vmem:[%s1 + $0x50] sm:$0xff]
  %v1945 = vld [vmem:[%s1 + $0x58] sm:$0xff]
  %v1946 = vld [vmem:[%s1 + $0x60] sm:$0xff]
  %v1947 = vld [vmem:[%s1 + $0x68] sm:$0x1]
  %v1948 = vperm.slane %v1947, 0
  %vm1949 = vcmask 523264
  %v1951 = vsel %vm1949, %v1926, 0
  %v1954 = vsel %vm1949, %v1927, 0
  %v1957 = vsel %vm1949, %v1928, 0
  %v1960 = vsel %vm1949, %v1929, 0
  %v1963 = vsel %vm1949, %v1930, 0
  %v1966 = vsel %vm1949, %v1931, 0
  %v1969 = vsel %vm1949, %v1932, 0
  %v1972 = vsel %vm1949, %v1933, 0
  %v1975 = vsel %vm1949, %v1934, 0
  %v1978 = vsel %vm1949, %v1935, 0
  %v1981 = vsel %vm1949, %v1936, 0
  %v1984 = vsel %vm1949, %v1937, 0
  %v1987 = vsel %vm1949, %v1938, 0
  %1989 = vmatpush.msra.mxu0 0.0
  %1990 = vmatpush.msra.mxu0 0.0
  %1991 = vmatpush.msra.mxu0 0.0
  %1992 = vmatpush.msra.mxu0 0.0
  %1993 = vmatpush.msra.mxu0 0.0
  %1994 = vmatpush.msra.mxu0 0.0
  %1995 = vmatpush.msra.mxu0 0.0
  %1996 = vmatpush.msra.mxu0 0.0
  %1997 = vmatpush.msra.mxu0 %v1946
  %1998 = vmatpush.msra.mxu0 %v1945
  %1999 = vmatpush.msra.mxu0 %v1944
  %2000 = vmatpush.msra.mxu0 %v1943
  %2001 = vmatpush.msra.mxu0 %v1942
  %2002 = vmatpush.msra.mxu0 %v1941
  %2003 = vmatpush.msra.mxu0 %v1940
  %2004 = vmatpush.msra.mxu0 %v1939
  %2005 = vmatmul.f32.gmra.mxu0 %v1951
  %v2006 = vpop.f32.mrf.mxu0
  %v2007 = vadd.f32 %v1948, %v2006
  %2008 = vmatmul.f32.gmra.mxu0 %v1954
  %v2009 = vpop.f32.mrf.mxu0
  %v2010 = vadd.f32 %v1948, %v2009
  %2011 = vmatmul.f32.gmra.mxu0 %v1957
  %v2012 = vpop.f32.mrf.mxu0
  %v2013 = vadd.f32 %v1948, %v2012
  %2014 = vmatmul.f32.gmra.mxu0 %v1960
  %v2015 = vpop.f32.mrf.mxu0
  %v2016 = vadd.f32 %v1948, %v2015
  %2017 = vmatmul.f32.gmra.mxu0 %v1963
  %v2018 = vpop.f32.mrf.mxu0
  %v2019 = vadd.f32 %v1948, %v2018
  %2020 = vmatmul.f32.gmra.mxu0 %v1966
  %v2021 = vpop.f32.mrf.mxu0
  %v2022 = vadd.f32 %v1948, %v2021
  %2023 = vmatmul.f32.gmra.mxu0 %v1969
  %v2024 = vpop.f32.mrf.mxu0
  %v2025 = vadd.f32 %v1948, %v2024
  %2026 = vmatmul.f32.gmra.mxu0 %v1972
  %v2027 = vpop.f32.mrf.mxu0
  %v2028 = vadd.f32 %v1948, %v2027
  %2029 = vmatmul.f32.gmra.mxu0 %v1975
  %v2030 = vpop.f32.mrf.mxu0
  %v2031 = vadd.f32 %v1948, %v2030
  %2032 = vmatmul.f32.gmra.mxu0 %v1978
  %v2033 = vpop.f32.mrf.mxu0
  %v2034 = vadd.f32 %v1948, %v2033
  %2035 = vmatmul.f32.gmra.mxu0 %v1981
  %v2036 = vpop.f32.mrf.mxu0
  %v2037 = vadd.f32 %v1948, %v2036
  %2038 = vmatmul.f32.gmra.mxu0 %v1984
  %v2039 = vpop.f32.mrf.mxu0
  %v2040 = vadd.f32 %v1948, %v2039
  %2041 = vmatmul.f32.gmra.mxu0 %v1987
  %v2042 = vpop.f32.mrf.mxu0
  %v2043 = vadd.f32 %v1948, %v2042
  %2044 = vdwg.mxu0
  %v2045 = vmax.f32 %v2007, 0.0
  %v2046 = vmax.f32 %v2010, 0.0
  %v2047 = vmax.f32 %v2013, 0.0
  %v2048 = vmax.f32 %v2016, 0.0
  %v2049 = vmax.f32 %v2019, 0.0
  %v2050 = vmax.f32 %v2022, 0.0
  %v2051 = vmax.f32 %v2025, 0.0
  %v2052 = vmax.f32 %v2028, 0.0
  %v2053 = vmax.f32 %v2031, 0.0
  %v2054 = vmax.f32 %v2034, 0.0
  %v2055 = vmax.f32 %v2037, 0.0
  %v2056 = vmax.f32 %v2040, 0.0
  %v2057 = vmax.f32 %v2043, 0.0
  %2058 = vst [vmem:[#allocation4] sm:$0xff] %v2045
  %2059 = vst [vmem:[#allocation4 + $0x8] sm:$0xff] %v2046
  %2060 = vst [vmem:[#allocation4 + $0x10] sm:$0xff] %v2047
  %2061 = vst [vmem:[#allocation4 + $0x18] sm:$0xff] %v2048
  %2062 = vst [vmem:[#allocation4 + $0x20] sm:$0xff] %v2049
  %2063 = vst [vmem:[#allocation4 + $0x28] sm:$0xff] %v2050
  %2064 = vst [vmem:[#allocation4 + $0x30] sm:$0xff] %v2051
  %2065 = vst [vmem:[#allocation4 + $0x38] sm:$0xff] %v2052
  %2066 = vst [vmem:[#allocation4 + $0x40] sm:$0xff] %v2053
  %2067 = vst [vmem:[#allocation4 + $0x48] sm:$0xff] %v2054
  %2068 = vst [vmem:[#allocation4 + $0x50] sm:$0xff] %v2055
  %2069 = vst [vmem:[#allocation4 + $0x58] sm:$0xff] %v2056
  %2070 = vst [vmem:[#allocation4 + $0x60] sm:$0x3] %v2057
  %2071 = vst [vmem:[#allocation5] sm:$0xff] 0.0
  %2072 = vst [vmem:[#allocation5 + $0x8] sm:$0xff] 0.0
  %2073 = vst [vmem:[#allocation5 + $0x10] sm:$0xff] 0.0
  %2074 = vst [vmem:[#allocation5 + $0x18] sm:$0xff] 0.0
  %2075 = vst [vmem:[#allocation5 + $0x20] sm:$0x1f] 0.0
  %v2076 = vld [vmem:[#allocation4] ss:$2 sm:$0x7]
  %s2077 = scalar_lea.vmem [#allocation4], 1
  %v2078 = vld [vmem:[%s2077] ss:$2 sm:$0x7]
  %v2079 = vmax.f32 %v2076, %v2078
  %s2080 = scalar_lea.vmem [#allocation4], 7
  %v2081 = vld [vmem:[%s2080] ss:$2 sm:$0x7]
  %v2082 = vmax.f32 %v2079, %v2081
  %s2083 = scalar_lea.vmem [#allocation4], 8
  %v2084 = vld [vmem:[%s2083] ss:$2 sm:$0x7]
  %v2085 = vmax.f32 %v2082, %v2084
  %2086 = vst [vmem:[#allocation5 + $0x5] sm:$0x7] %v2085
  %s2087 = scalar_lea.vmem [#allocation4], 14
  %v2088 = vld [vmem:[%s2087] ss:$2 sm:$0x7]
  %s2089 = scalar_lea.vmem [#allocation4], 15
  %v2090 = vld [vmem:[%s2089] ss:$2 sm:$0x7]
  %v2091 = vmax.f32 %v2088, %v2090
  %s2092 = scalar_lea.vmem [#allocation4], 21
  %v2093 = vld [vmem:[%s2092] ss:$2 sm:$0x7]
  %v2094 = vmax.f32 %v2091, %v2093
  %s2095 = scalar_lea.vmem [#allocation4], 22
  %v2096 = vld [vmem:[%s2095] ss:$2 sm:$0x7]
  %v2097 = vmax.f32 %v2094, %v2096
  %2098 = vst [vmem:[#allocation5 + $0x9] sm:$0x7] %v2097
  %s2099 = scalar_lea.vmem [#allocation4], 28
  %v2100 = vld [vmem:[%s2099] ss:$2 sm:$0x7]
  %s2101 = scalar_lea.vmem [#allocation4], 29
  %v2102 = vld [vmem:[%s2101] ss:$2 sm:$0x7]
  %v2103 = vmax.f32 %v2100, %v2102
  %s2104 = scalar_lea.vmem [#allocation4], 35
  %v2105 = vld [vmem:[%s2104] ss:$2 sm:$0x7]
  %v2106 = vmax.f32 %v2103, %v2105
  %s2107 = scalar_lea.vmem [#allocation4], 36
  %v2108 = vld [vmem:[%s2107] ss:$2 sm:$0x7]
  %v2109 = vmax.f32 %v2106, %v2108
  %2110 = vst [vmem:[#allocation5 + $0xd] sm:$0x7] %v2109
  %s2111 = scalar_lea.vmem [#allocation4], 49
  %v2112 = vld [vmem:[%s2111] ss:$2 sm:$0x7]
  %s2113 = scalar_lea.vmem [#allocation4], 50
  %v2114 = vld [vmem:[%s2113] ss:$2 sm:$0x7]
  %v2115 = vmax.f32 %v2112, %v2114
  %s2116 = scalar_lea.vmem [#allocation4], 56
  %v2117 = vld [vmem:[%s2116] ss:$2 sm:$0x7]
  %v2118 = vmax.f32 %v2115, %v2117
  %s2119 = scalar_lea.vmem [#allocation4], 57
  %v2120 = vld [vmem:[%s2119] ss:$2 sm:$0x7]
  %v2121 = vmax.f32 %v2118, %v2120
  %2122 = vst [vmem:[#allocation5 + $0x15] sm:$0x7] %v2121
  %s2123 = scalar_lea.vmem [#allocation4], 63
  %v2124 = vld [vmem:[%s2123] ss:$2 sm:$0x7]
  %s2125 = scalar_lea.vmem [#allocation4], 64
  %v2126 = vld [vmem:[%s2125] ss:$2 sm:$0x7]
  %v2127 = vmax.f32 %v2124, %v2126
  %s2128 = scalar_lea.vmem [#allocation4], 70
  %v2129 = vld [vmem:[%s2128] ss:$2 sm:$0x7]
  %v2130 = vmax.f32 %v2127, %v2129
  %s2131 = scalar_lea.vmem [#allocation4], 71
  %v2132 = vld [vmem:[%s2131] ss:$2 sm:$0x7]
  %v2133 = vmax.f32 %v2130, %v2132
  %2134 = vst [vmem:[#allocation5 + $0x19] sm:$0x7] %v2133
  %s2135 = scalar_lea.vmem [#allocation4], 77
  %v2136 = vld [vmem:[%s2135] ss:$2 sm:$0x7]
  %s2137 = scalar_lea.vmem [#allocation4], 78
  %v2138 = vld [vmem:[%s2137] ss:$2 sm:$0x7]
  %v2139 = vmax.f32 %v2136, %v2138
  %s2140 = scalar_lea.vmem [#allocation4], 84
  %v2141 = vld [vmem:[%s2140] ss:$2 sm:$0x7]
  %v2142 = vmax.f32 %v2139, %v2141
  %s2143 = scalar_lea.vmem [#allocation4], 85
  %v2144 = vld [vmem:[%s2143] ss:$2 sm:$0x7]
  %v2145 = vmax.f32 %v2142, %v2144
  %2146 = vst [vmem:[#allocation5 + $0x1d] sm:$0x7] %v2145
  %v2147 = vld [vmem:[#allocation5] sm:$0xff]
  %v2148 = vld [vmem:[#allocation5 + $0x8] sm:$0xff]
  %v2149 = vld [vmem:[#allocation5 + $0x10] sm:$0xff]
  %v2150 = vld [vmem:[#allocation5 + $0x18] sm:$0xff]
  %v2151 = vld [vmem:[#allocation5 + $0x1] sm:$0xff]
  %v2152 = vld [vmem:[#allocation5 + $0x9] sm:$0xff]
  %v2153 = vld [vmem:[#allocation5 + $0x11] sm:$0xff]
  %v2154 = vld [vmem:[#allocation5 + $0x19] sm:$0xff]
  %v2155 = vld [vmem:[#allocation5 + $0x4] sm:$0xff]
  %v2156 = vld [vmem:[#allocation5 + $0xc] sm:$0xff]
  %v2157 = vld [vmem:[#allocation5 + $0x14] sm:$0xff]
  %v2158 = vld [vmem:[#allocation5 + $0x1c] sm:$0xff]
  %v2159 = vld [vmem:[#allocation5 + $0x5] sm:$0xff]
  %v2160 = vld [vmem:[#allocation5 + $0xd] sm:$0xff]
  %v2161 = vld [vmem:[#allocation5 + $0x15] sm:$0xff]
  %v2162 = vld [vmem:[#allocation5 + $0x1d] sm:$0xff]
  %2167 = vrot.lane.b32.xlu0 %v2151, 32
  %v2168 = vpop.permute.xlu0 %2167
  %2169 = vrot.lane.b32.xlu0 %v2152, 32
  %v2170 = vpop.permute.xlu0 %2169
  %2171 = vrot.lane.b32.xlu0 %v2153, 32
  %v2172 = vpop.permute.xlu0 %2171
  %2173 = vrot.lane.b32.xlu0 %v2154, 32
  %v2174 = vpop.permute.xlu0 %2173
  %2183 = vrot.lane.b32.xlu0 %v2155, 64
  %v2184 = vpop.permute.xlu0 %2183
  %2185 = vrot.lane.b32.xlu0 %v2156, 64
  %v2186 = vpop.permute.xlu0 %2185
  %2187 = vrot.lane.b32.xlu0 %v2157, 64
  %v2188 = vpop.permute.xlu0 %2187
  %2189 = vrot.lane.b32.xlu0 %v2158, 64
  %v2190 = vpop.permute.xlu0 %2189
  %2199 = vrot.lane.b32.xlu0 %v2159, 96
  %v2200 = vpop.permute.xlu0 %2199
  %2201 = vrot.lane.b32.xlu0 %v2160, 96
  %v2202 = vpop.permute.xlu0 %2201
  %2203 = vrot.lane.b32.xlu0 %v2161, 96
  %v2204 = vpop.permute.xlu0 %2203
  %2205 = vrot.lane.b32.xlu0 %v2162, 96
  %v2206 = vpop.permute.xlu0 %2205
  %v2211 = vsel %vm1049, %v2147, %v2168
  %v2212 = vsel %vm1049, %v2148, %v2170
  %v2213 = vsel %vm1049, %v2149, %v2172
  %v2214 = vsel %vm1049, %v2150, %v2174
  %v2215 = vsel %vm1949, %v2211, %v2184
  %v2216 = vsel %vm1949, %v2212, %v2186
  %v2217 = vsel %vm1949, %v2213, %v2188
  %v2218 = vsel %vm1949, %v2214, %v2190
  %vm2219 = vcmask 785408
  %v2220 = vsel %vm2219, %v2215, %v2200
  %v2221 = vsel %vm2219, %v2216, %v2202
  %v2222 = vsel %vm2219, %v2217, %v2204
  %v2223 = vsel %vm2219, %v2218, %v2206
  %v2224 = vld [vmem:[%s1 + $0x70] sm:$0xff]
  %v2225 = vld [vmem:[%s1 + $0x78] sm:$0xff]
  %v2226 = vld [vmem:[%s1 + $0x80] sm:$0xff]
  %v2227 = vld [vmem:[%s1 + $0x88] sm:$0xff]
  %v2228 = vld [vmem:[%s1 + $0x90] sm:$0xff]
  %v2229 = vld [vmem:[%s1 + $0x98] sm:$0xff]
  %v2230 = vld [vmem:[%s1 + $0xa0] sm:$0xff]
  %v2231 = vld [vmem:[%s1 + $0xa8] sm:$0xff]
  %v2232 = vld [vmem:[%s1 + $0xb0] sm:$0xff]
  %v2233 = vld [vmem:[%s1 + $0xb8] sm:$0xff]
  %v2234 = vld [vmem:[%s1 + $0xc0] sm:$0xff]
  %v2235 = vld [vmem:[%s1 + $0xc8] sm:$0xff]
  %v2236 = vld [vmem:[%s1 + $0xd0] sm:$0xff]
  %v2237 = vld [vmem:[%s1 + $0xd8] sm:$0xff]
  %v2238 = vld [vmem:[%s1 + $0xe0] sm:$0xff]
  %v2239 = vld [vmem:[%s1 + $0xe8] sm:$0xff]
  %v2240 = vld [vmem:[%s1 + $0xf0] sm:$0x1]
  %v2241 = vperm.slane %v2240, 0
  %2242 = vmatpush.msra.mxu0 %v2239
  %2243 = vmatpush.msra.mxu0 %v2238
  %2244 = vmatpush.msra.mxu0 %v2237
  %2245 = vmatpush.msra.mxu0 %v2236
  %2246 = vmatpush.msra.mxu0 %v2235
  %2247 = vmatpush.msra.mxu0 %v2234
  %2248 = vmatpush.msra.mxu0 %v2233
  %2249 = vmatpush.msra.mxu0 %v2232
  %2250 = vmatpush.msra.mxu0 %v2231
  %2251 = vmatpush.msra.mxu0 %v2230
  %2252 = vmatpush.msra.mxu0 %v2229
  %2253 = vmatpush.msra.mxu0 %v2228
  %2254 = vmatpush.msra.mxu0 %v2227
  %2255 = vmatpush.msra.mxu0 %v2226
  %2256 = vmatpush.msra.mxu0 %v2225
  %2257 = vmatpush.msra.mxu0 %v2224
  %2258 = vmatmul.f32.gmra.mxu0 %v2220
  %v2259 = vpop.f32.mrf.mxu0
  %v2260 = vadd.f32 %v2241, %v2259
  %2261 = vmatmul.f32.gmra.mxu0 %v2221
  %v2262 = vpop.f32.mrf.mxu0
  %v2263 = vadd.f32 %v2241, %v2262
  %2264 = vmatmul.f32.gmra.mxu0 %v2222
  %v2265 = vpop.f32.mrf.mxu0
  %v2266 = vadd.f32 %v2241, %v2265
  %2267 = vmatmul.f32.gmra.mxu0 %v2223
  %v2268 = vpop.f32.mrf.mxu0
  %v2269 = vadd.f32 %v2241, %v2268
  %2270 = vdwg.mxu0
  %v2271 = vmax.f32 %v2260, 0.0
  %v2272 = vmax.f32 %v2263, 0.0
  %v2273 = vmax.f32 %v2266, 0.0
  %v2274 = vmax.f32 %v2269, 0.0
  %v2275 = vlaneseq
  %v2276 = vshrl.u32 %v2275, 7
  %v2277 = vadd.s32 %v2276, 8
  %v2278 = vadd.s32 %v2276, 16
  %v2279 = vadd.s32 %v2276, 24
  %vm2280 = vcmp.lt.s32.totalorder %v2276, 0
  %v2281 = vsub.s32 0, %v2276
  %v2282 = vsel %vm2280, %v2281, %v2276
  %v2283 = vshrl.u32 %v2282, 4
  %v2284 = vand.u32 %v2282, 15
  %v2285 = vsub.s32 0, %v2284
  %v2286 = vsel %vm2280, %v2285, %v2284
  %vm2287 = vcmp.lt.s32.totalorder %v2277, 0
  %v2288 = vsub.s32 0, %v2277
  %v2289 = vsel %vm2287, %v2288, %v2277
  %v2290 = vshrl.u32 %v2289, 4
  %v2291 = vand.u32 %v2289, 15
  %v2292 = vsub.s32 0, %v2291
  %v2293 = vsel %vm2287, %v2292, %v2291
  %vm2294 = vcmp.lt.s32.totalorder %v2278, 0
  %v2295 = vsub.s32 0, %v2278
  %v2296 = vsel %vm2294, %v2295, %v2278
  %v2297 = vshrl.u32 %v2296, 4
  %v2298 = vand.u32 %v2296, 15
  %v2299 = vsub.s32 0, %v2298
  %v2300 = vsel %vm2294, %v2299, %v2298
  %vm2301 = vcmp.lt.s32.totalorder %v2279, 0
  %v2302 = vsub.s32 0, %v2279
  %v2303 = vsel %vm2301, %v2302, %v2279
  %v2304 = vshrl.u32 %v2303, 4
  %v2305 = vand.u32 %v2303, 15
  %v2306 = vsub.s32 0, %v2305
  %v2307 = vsel %vm2301, %v2306, %v2305
  %vm2308 = vcmp.ne.s32.totalorder %v2286, 0
  %vm2309 = vcmp.ne.s32.totalorder %v2293, 0
  %vm2310 = vcmp.ne.s32.totalorder %v2300, 0
  %vm2311 = vcmp.ne.s32.totalorder %v2307, 0
  %vm2312 = vcmp.lt.s32.totalorder %v2286, 0
  %vm2313 = vcmp.lt.s32.totalorder %v2293, 0
  %vm2314 = vcmp.lt.s32.totalorder %v2300, 0
  %vm2315 = vcmp.lt.s32.totalorder %v2307, 0
  %vm2316 = vmand %vm2312, %vm2308
  %vm2317 = vmand %vm2313, %vm2309
  %vm2318 = vmand %vm2314, %vm2310
  %vm2319 = vmand %vm2315, %vm2311
  %v2320 = vadd.s32 %v2286, 16
  %v2321 = vadd.s32 %v2293, 16
  %v2322 = vadd.s32 %v2300, 16
  %v2323 = vadd.s32 %v2307, 16
  %v2324 = vsel %vm2316, %v2320, %v2286
  %v2325 = vsel %vm2317, %v2321, %v2293
  %v2326 = vsel %vm2318, %v2322, %v2300
  %v2327 = vsel %vm2319, %v2323, %v2307
  %vm2328 = vcmp.lt.s32.totalorder %v2324, 0
  %v2329 = vsub.s32 0, %v2324
  %v2330 = vsel %vm2328, %v2329, %v2324
  %v2331 = vshrl.u32 %v2330, 2
  %v2332 = vand.u32 %v2330, 3
  %v2333 = vsub.s32 0, %v2332
  %v2334 = vsel %vm2328, %v2333, %v2332
  %vm2335 = vcmp.lt.s32.totalorder %v2325, 0
  %v2336 = vsub.s32 0, %v2325
  %v2337 = vsel %vm2335, %v2336, %v2325
  %v2338 = vshrl.u32 %v2337, 2
  %v2339 = vand.u32 %v2337, 3
  %v2340 = vsub.s32 0, %v2339
  %v2341 = vsel %vm2335, %v2340, %v2339
  %vm2342 = vcmp.lt.s32.totalorder %v2326, 0
  %v2343 = vsub.s32 0, %v2326
  %v2344 = vsel %vm2342, %v2343, %v2326
  %v2345 = vshrl.u32 %v2344, 2
  %v2346 = vand.u32 %v2344, 3
  %v2347 = vsub.s32 0, %v2346
  %v2348 = vsel %vm2342, %v2347, %v2346
  %vm2349 = vcmp.lt.s32.totalorder %v2327, 0
  %v2350 = vsub.s32 0, %v2327
  %v2351 = vsel %vm2349, %v2350, %v2327
  %v2352 = vshrl.u32 %v2351, 2
  %v2353 = vand.u32 %v2351, 3
  %v2354 = vsub.s32 0, %v2353
  %v2355 = vsel %vm2349, %v2354, %v2353
  %vm2356 = vcmp.ne.s32.totalorder %v2334, 0
  %vm2357 = vcmp.ne.s32.totalorder %v2341, 0
  %vm2358 = vcmp.ne.s32.totalorder %v2348, 0
  %vm2359 = vcmp.ne.s32.totalorder %v2355, 0
  %vm2360 = vcmp.lt.s32.totalorder %v2334, 0
  %vm2361 = vcmp.lt.s32.totalorder %v2341, 0
  %vm2362 = vcmp.lt.s32.totalorder %v2348, 0
  %vm2363 = vcmp.lt.s32.totalorder %v2355, 0
  %vm2364 = vmand %vm2360, %vm2356
  %vm2365 = vmand %vm2361, %vm2357
  %vm2366 = vmand %vm2362, %vm2358
  %vm2367 = vmand %vm2363, %vm2359
  %v2368 = vadd.s32 %v2334, 4
  %v2369 = vadd.s32 %v2341, 4
  %v2370 = vadd.s32 %v2348, 4
  %v2371 = vadd.s32 %v2355, 4
  %v2372 = vsel %vm2364, %v2368, %v2334
  %v2373 = vsel %vm2365, %v2369, %v2341
  %v2374 = vsel %vm2366, %v2370, %v2348
  %v2375 = vsel %vm2367, %v2371, %v2355
  %vm2376 = vcmp.lt.s32.totalorder %v2372, 3
  %vm2377 = vcmp.lt.s32.totalorder %v2373, 3
  %vm2378 = vcmp.lt.s32.totalorder %v2374, 3
  %vm2379 = vcmp.lt.s32.totalorder %v2375, 3
  %vm2380 = vcmp.lt.s32.totalorder %v2324, 12
  %vm2381 = vcmp.lt.s32.totalorder %v2325, 12
  %vm2382 = vcmp.lt.s32.totalorder %v2326, 12
  %vm2383 = vcmp.lt.s32.totalorder %v2327, 12
  %vm2384 = vmand %vm2376, %vm2380
  %vm2385 = vmand %vm2377, %vm2381
  %vm2386 = vmand %vm2378, %vm2382
  %vm2387 = vmand %vm2379, %vm2383
  %v2388 = vsel %vm2384, 1, 0
  %v2389 = vsel %vm2385, 1, 0
  %v2390 = vsel %vm2386, 1, 0
  %v2391 = vsel %vm2387, 1, 0
  %v2392 = vcvt.s32.f32 %v2388
  %v2393 = vcvt.s32.f32 %v2389
  %v2394 = vcvt.s32.f32 %v2390
  %v2395 = vcvt.s32.f32 %v2391
  %2396 = vst [vmem:[#allocation6] sm:$0x1f] 0.0
  %v2397 = vmul.f32 %v2271, %v2392
  %v2398 = vmul.f32 %v2272, %v2393
  %v2399 = vmul.f32 %v2273, %v2394
  %v2400 = vmul.f32 %v2274, %v2395
  %2401 = vst [vmem:[#allocation6 + $0x5] sm:$0xff] %v2397
  %2402 = vst [vmem:[#allocation6 + $0xd] sm:$0xff] %v2398
  %2403 = vst [vmem:[#allocation6 + $0x15] sm:$0xff] %v2399
  %2404 = vst [vmem:[#allocation6 + $0x1d] sm:$0xff] %v2400
  %v2405 = vld [vmem:[#allocation6] sm:$0xff]
  %v2406 = vld [vmem:[#allocation6 + $0x8] sm:$0xff]
  %v2407 = vld [vmem:[#allocation6 + $0x10] sm:$0xff]
  %v2408 = vld [vmem:[#allocation6 + $0x18] sm:$0xff]
  %v2409 = vld [vmem:[#allocation6 + $0x1] sm:$0xff]
  %v2410 = vld [vmem:[#allocation6 + $0x9] sm:$0xff]
  %v2411 = vld [vmem:[#allocation6 + $0x11] sm:$0xff]
  %v2412 = vld [vmem:[#allocation6 + $0x19] sm:$0xff]
  %v2413 = vld [vmem:[#allocation6 + $0x4] sm:$0xff]
  %v2414 = vld [vmem:[#allocation6 + $0xc] sm:$0xff]
  %v2415 = vld [vmem:[#allocation6 + $0x14] sm:$0xff]
  %v2416 = vld [vmem:[#allocation6 + $0x1c] sm:$0xff]
  %v2417 = vld [vmem:[#allocation6 + $0x5] sm:$0xff]
  %v2418 = vld [vmem:[#allocation6 + $0xd] sm:$0xff]
  %v2419 = vld [vmem:[#allocation6 + $0x15] sm:$0xff]
  %v2420 = vld [vmem:[#allocation6 + $0x1d] sm:$0xff]
  %2425 = vrot.lane.b32.xlu0 %v2409, 16
  %v2426 = vpop.permute.xlu0 %2425
  %2427 = vrot.lane.b32.xlu0 %v2410, 16
  %v2428 = vpop.permute.xlu0 %2427
  %2429 = vrot.lane.b32.xlu0 %v2411, 16
  %v2430 = vpop.permute.xlu0 %2429
  %2431 = vrot.lane.b32.xlu0 %v2412, 16
  %v2432 = vpop.permute.xlu0 %2431
  %2441 = vrot.lane.b32.xlu0 %v2413, 32
  %v2442 = vpop.permute.xlu0 %2441
  %2443 = vrot.lane.b32.xlu0 %v2414, 32
  %v2444 = vpop.permute.xlu0 %2443
  %2445 = vrot.lane.b32.xlu0 %v2415, 32
  %v2446 = vpop.permute.xlu0 %2445
  %2447 = vrot.lane.b32.xlu0 %v2416, 32
  %v2448 = vpop.permute.xlu0 %2447
  %2457 = vrot.lane.b32.xlu0 %v2417, 48
  %v2458 = vpop.permute.xlu0 %2457
  %2459 = vrot.lane.b32.xlu0 %v2418, 48
  %v2460 = vpop.permute.xlu0 %2459
  %2461 = vrot.lane.b32.xlu0 %v2419, 48
  %v2462 = vpop.permute.xlu0 %2461
  %2463 = vrot.lane.b32.xlu0 %v2420, 48
  %v2464 = vpop.permute.xlu0 %2463
  %v2469 = vsel %vm927, %v2405, %v2426
  %v2470 = vsel %vm927, %v2406, %v2428
  %v2471 = vsel %vm927, %v2407, %v2430
  %v2472 = vsel %vm927, %v2408, %v2432
  %v2473 = vsel %vm1049, %v2469, %v2442
  %v2474 = vsel %vm1049, %v2470, %v2444
  %v2475 = vsel %vm1049, %v2471, %v2446
  %v2476 = vsel %vm1049, %v2472, %v2448
  %v2477 = vsel %vm1925, %v2473, %v2458
  %v2478 = vsel %vm1925, %v2474, %v2460
  %v2479 = vsel %vm1925, %v2475, %v2462
  %v2480 = vsel %vm1925, %v2476, %v2464
  %v2481 = vld [vmem:[%s1 + $0xf8] sm:$0xff]
  %v2482 = vld [vmem:[%s1 + $0x100] sm:$0xff]
  %v2483 = vld [vmem:[%s1 + $0x108] sm:$0xff]
  %v2484 = vld [vmem:[%s1 + $0x110] sm:$0xff]
  %v2485 = vld [vmem:[%s1 + $0x118] sm:$0xff]
  %v2486 = vld [vmem:[%s1 + $0x120] sm:$0xff]
  %v2487 = vld [vmem:[%s1 + $0x128] sm:$0xff]
  %v2488 = vld [vmem:[%s1 + $0x130] sm:$0xff]
  %v2489 = vld [vmem:[%s1 + $0x138] sm:$0x1]
  %v2490 = vperm.slane %v2489, 0
  %v2492 = vsel %vm1949, %v2477, 0
  %v2495 = vsel %vm1949, %v2478, 0
  %v2498 = vsel %vm1949, %v2479, 0
  %v2501 = vsel %vm1949, %v2480, 0
  %2503 = vmatpush.msra.mxu0 0.0
  %2504 = vmatpush.msra.mxu0 0.0
  %2505 = vmatpush.msra.mxu0 0.0
  %2506 = vmatpush.msra.mxu0 0.0
  %2507 = vmatpush.msra.mxu0 0.0
  %2508 = vmatpush.msra.mxu0 0.0
  %2509 = vmatpush.msra.mxu0 0.0
  %2510 = vmatpush.msra.mxu0 0.0
  %2511 = vmatpush.msra.mxu0 %v2488
  %2512 = vmatpush.msra.mxu0 %v2487
  %2513 = vmatpush.msra.mxu0 %v2486
  %2514 = vmatpush.msra.mxu0 %v2485
  %2515 = vmatpush.msra.mxu0 %v2484
  %2516 = vmatpush.msra.mxu0 %v2483
  %2517 = vmatpush.msra.mxu0 %v2482
  %2518 = vmatpush.msra.mxu0 %v2481
  %2519 = vmatmul.f32.gmra.mxu0 %v2492
  %v2520 = vpop.f32.mrf.mxu0
  %v2521 = vadd.f32 %v2490, %v2520
  %2522 = vmatmul.f32.gmra.mxu0 %v2495
  %v2523 = vpop.f32.mrf.mxu0
  %v2524 = vadd.f32 %v2490, %v2523
  %2525 = vmatmul.f32.gmra.mxu0 %v2498
  %v2526 = vpop.f32.mrf.mxu0
  %v2527 = vadd.f32 %v2490, %v2526
  %2528 = vmatmul.f32.gmra.mxu0 %v2501
  %v2529 = vpop.f32.mrf.mxu0
  %v2530 = vadd.f32 %v2490, %v2529
  %2531 = vdwg.mxu0
  %v2532 = vmax.f32 %v2521, 0.0
  %v2533 = vmax.f32 %v2524, 0.0
  %v2534 = vmax.f32 %v2527, 0.0
  %v2535 = vmax.f32 %v2530, 0.0
  %2536 = vst [vmem:[#allocation7] sm:$0xff] %v2532
  %2537 = vst [vmem:[#allocation7 + $0x8] sm:$0xff] %v2533
  %2538 = vst [vmem:[#allocation7 + $0x10] sm:$0xff] %v2534
  %2539 = vst [vmem:[#allocation7 + $0x18] sm:$0xff] %v2535
  %v2540 = vld [vmem:[#allocation7] ss:$16 sm:$0x3]
  %v2541 = vld [vmem:[%s1 + $0x140] sm:$0xff]
  %v2542 = vld [vmem:[%s1 + $0x148] sm:$0xff]
  %s2543 = scalar_lea.vmem [#allocation7], 1
  %v2544 = vld [vmem:[%s2543] ss:$16 sm:$0x3]
  %v2545 = vld [vmem:[%s1 + $0x150] sm:$0xff]
  %v2546 = vld [vmem:[%s1 + $0x158] sm:$0xff]
  %v2548 = vsel %vm927, %v2544, 0
  %2550 = vmatpush.msra.mxu0 0.0
  %2551 = vmatpush.msra.mxu0 0.0
  %2552 = vmatpush.msra.mxu0 0.0
  %2553 = vmatpush.msra.mxu0 0.0
  %2554 = vmatpush.msra.mxu0 0.0
  %2555 = vmatpush.msra.mxu0 0.0
  %2556 = vmatpush.msra.mxu0 0.0
  %2557 = vmatpush.msra.mxu0 0.0
  %2558 = vmatpush.msra.mxu0 0.0
  %2559 = vmatpush.msra.mxu0 0.0
  %2560 = vmatpush.msra.mxu0 0.0
  %2561 = vmatpush.msra.mxu0 0.0
  %2562 = vmatpush.msra.mxu0 0.0
  %2563 = vmatpush.msra.mxu0 0.0
  %2564 = vmatpush.msra.mxu0 %v2546
  %2565 = vmatpush.msra.mxu0 %v2545
  %2566 = vmatmul.f32.gmra.mxu0 %v2548
  %v2567 = vpop.f32.mrf.mxu0
  %v2568 = vadd.f32 0.0, %v2567
  %2569 = vdwg.mxu0
  %v2571 = vsel %vm927, %v2540, 0
  %2573 = vmatpush.msra.mxu0 0.0
  %2574 = vmatpush.msra.mxu0 0.0
  %2575 = vmatpush.msra.mxu0 0.0
  %2576 = vmatpush.msra.mxu0 0.0
  %2577 = vmatpush.msra.mxu0 0.0
  %2578 = vmatpush.msra.mxu0 0.0
  %2579 = vmatpush.msra.mxu0 0.0
  %2580 = vmatpush.msra.mxu0 0.0
  %2581 = vmatpush.msra.mxu0 0.0
  %2582 = vmatpush.msra.mxu0 0.0
  %2583 = vmatpush.msra.mxu0 0.0
  %2584 = vmatpush.msra.mxu0 0.0
  %2585 = vmatpush.msra.mxu0 0.0
  %2586 = vmatpush.msra.mxu0 0.0
  %2587 = vmatpush.msra.mxu0 %v2542
  %2588 = vmatpush.msra.mxu0 %v2541
  %2589 = vmatmul.f32.gmra.mxu0 %v2571
  %v2590 = vpop.f32.mrf.mxu0
  %v2591 = vadd.f32 %v2568, %v2590
  %2592 = vdwg.mxu0
  %s2593 = scalar_lea.vmem [#allocation7], 2
  %v2594 = vld [vmem:[%s2593] ss:$16 sm:$0x3]
  %v2595 = vld [vmem:[%s1 + $0x160] sm:$0xff]
  %v2596 = vld [vmem:[%s1 + $0x168] sm:$0xff]
  %v2598 = vsel %vm927, %v2594, 0
  %2600 = vmatpush.msra.mxu0 0.0
  %2601 = vmatpush.msra.mxu0 0.0
  %2602 = vmatpush.msra.mxu0 0.0
  %2603 = vmatpush.msra.mxu0 0.0
  %2604 = vmatpush.msra.mxu0 0.0
  %2605 = vmatpush.msra.mxu0 0.0
  %2606 = vmatpush.msra.mxu0 0.0
  %2607 = vmatpush.msra.mxu0 0.0
  %2608 = vmatpush.msra.mxu0 0.0
  %2609 = vmatpush.msra.mxu0 0.0
  %2610 = vmatpush.msra.mxu0 0.0
  %2611 = vmatpush.msra.mxu0 0.0
  %2612 = vmatpush.msra.mxu0 0.0
  %2613 = vmatpush.msra.mxu0 0.0
  %2614 = vmatpush.msra.mxu0 %v2596
  %2615 = vmatpush.msra.mxu0 %v2595
  %2616 = vmatmul.f32.gmra.mxu0 %v2598
  %v2617 = vpop.f32.mrf.mxu0
  %v2618 = vadd.f32 0.0, %v2617
  %2619 = vdwg.mxu0
  %v2620 = vadd.f32 %v2591, %v2618
  %s2621 = scalar_lea.vmem [#allocation7], 4
  %v2622 = vld [vmem:[%s2621] ss:$16 sm:$0x3]
  %v2623 = vld [vmem:[%s1 + $0x170] sm:$0xff]
  %v2624 = vld [vmem:[%s1 + $0x178] sm:$0xff]
  %v2626 = vsel %vm927, %v2622, 0
  %2628 = vmatpush.msra.mxu0 0.0
  %2629 = vmatpush.msra.mxu0 0.0
  %2630 = vmatpush.msra.mxu0 0.0
  %2631 = vmatpush.msra.mxu0 0.0
  %2632 = vmatpush.msra.mxu0 0.0
  %2633 = vmatpush.msra.mxu0 0.0
  %2634 = vmatpush.msra.mxu0 0.0
  %2635 = vmatpush.msra.mxu0 0.0
  %2636 = vmatpush.msra.mxu0 0.0
  %2637 = vmatpush.msra.mxu0 0.0
  %2638 = vmatpush.msra.mxu0 0.0
  %2639 = vmatpush.msra.mxu0 0.0
  %2640 = vmatpush.msra.mxu0 0.0
  %2641 = vmatpush.msra.mxu0 0.0
  %2642 = vmatpush.msra.mxu0 %v2624
  %2643 = vmatpush.msra.mxu0 %v2623
  %2644 = vmatmul.f32.gmra.mxu0 %v2626
  %v2645 = vpop.f32.mrf.mxu0
  %v2646 = vadd.f32 0.0, %v2645
  %2647 = vdwg.mxu0
  %v2648 = vadd.f32 %v2620, %v2646
  %s2649 = scalar_lea.vmem [#allocation7], 5
  %v2650 = vld [vmem:[%s2649] ss:$16 sm:$0x3]
  %v2651 = vld [vmem:[%s1 + $0x180] sm:$0xff]
  %v2652 = vld [vmem:[%s1 + $0x188] sm:$0xff]
  %v2654 = vsel %vm927, %v2650, 0
  %2656 = vmatpush.msra.mxu0 0.0
  %2657 = vmatpush.msra.mxu0 0.0
  %2658 = vmatpush.msra.mxu0 0.0
  %2659 = vmatpush.msra.mxu0 0.0
  %2660 = vmatpush.msra.mxu0 0.0
  %2661 = vmatpush.msra.mxu0 0.0
  %2662 = vmatpush.msra.mxu0 0.0
  %2663 = vmatpush.msra.mxu0 0.0
  %2664 = vmatpush.msra.mxu0 0.0
  %2665 = vmatpush.msra.mxu0 0.0
  %2666 = vmatpush.msra.mxu0 0.0
  %2667 = vmatpush.msra.mxu0 0.0
  %2668 = vmatpush.msra.mxu0 0.0
  %2669 = vmatpush.msra.mxu0 0.0
  %2670 = vmatpush.msra.mxu0 %v2652
  %2671 = vmatpush.msra.mxu0 %v2651
  %2672 = vmatmul.f32.gmra.mxu0 %v2654
  %v2673 = vpop.f32.mrf.mxu0
  %v2674 = vadd.f32 0.0, %v2673
  %2675 = vdwg.mxu0
  %v2676 = vadd.f32 %v2648, %v2674
  %s2677 = scalar_lea.vmem [#allocation7], 6
  %v2678 = vld [vmem:[%s2677] ss:$16 sm:$0x3]
  %v2679 = vld [vmem:[%s1 + $0x190] sm:$0xff]
  %v2680 = vld [vmem:[%s1 + $0x198] sm:$0xff]
  %v2682 = vsel %vm927, %v2678, 0
  %2684 = vmatpush.msra.mxu0 0.0
  %2685 = vmatpush.msra.mxu0 0.0
  %2686 = vmatpush.msra.mxu0 0.0
  %2687 = vmatpush.msra.mxu0 0.0
  %2688 = vmatpush.msra.mxu0 0.0
  %2689 = vmatpush.msra.mxu0 0.0
  %2690 = vmatpush.msra.mxu0 0.0
  %2691 = vmatpush.msra.mxu0 0.0
  %2692 = vmatpush.msra.mxu0 0.0
  %2693 = vmatpush.msra.mxu0 0.0
  %2694 = vmatpush.msra.mxu0 0.0
  %2695 = vmatpush.msra.mxu0 0.0
  %2696 = vmatpush.msra.mxu0 0.0
  %2697 = vmatpush.msra.mxu0 0.0
  %2698 = vmatpush.msra.mxu0 %v2680
  %2699 = vmatpush.msra.mxu0 %v2679
  %2700 = vmatmul.f32.gmra.mxu0 %v2682
  %v2701 = vpop.f32.mrf.mxu0
  %v2702 = vadd.f32 0.0, %v2701
  %2703 = vdwg.mxu0
  %v2704 = vadd.f32 %v2676, %v2702
  %s2705 = scalar_lea.vmem [#allocation7], 8
  %v2706 = vld [vmem:[%s2705] ss:$16 sm:$0x3]
  %v2707 = vld [vmem:[%s1 + $0x1a0] sm:$0xff]
  %v2708 = vld [vmem:[%s1 + $0x1a8] sm:$0xff]
  %v2710 = vsel %vm927, %v2706, 0
  %2712 = vmatpush.msra.mxu0 0.0
  %2713 = vmatpush.msra.mxu0 0.0
  %2714 = vmatpush.msra.mxu0 0.0
  %2715 = vmatpush.msra.mxu0 0.0
  %2716 = vmatpush.msra.mxu0 0.0
  %2717 = vmatpush.msra.mxu0 0.0
  %2718 = vmatpush.msra.mxu0 0.0
  %2719 = vmatpush.msra.mxu0 0.0
  %2720 = vmatpush.msra.mxu0 0.0
  %2721 = vmatpush.msra.mxu0 0.0
  %2722 = vmatpush.msra.mxu0 0.0
  %2723 = vmatpush.msra.mxu0 0.0
  %2724 = vmatpush.msra.mxu0 0.0
  %2725 = vmatpush.msra.mxu0 0.0
  %2726 = vmatpush.msra.mxu0 %v2708
  %2727 = vmatpush.msra.mxu0 %v2707
  %2728 = vmatmul.f32.gmra.mxu0 %v2710
  %v2729 = vpop.f32.mrf.mxu0
  %v2730 = vadd.f32 0.0, %v2729
  %2731 = vdwg.mxu0
  %v2732 = vadd.f32 %v2704, %v2730
  %s2733 = scalar_lea.vmem [#allocation7], 9
  %v2734 = vld [vmem:[%s2733] ss:$16 sm:$0x3]
  %v2735 = vld [vmem:[%s1 + $0x1b0] sm:$0xff]
  %v2736 = vld [vmem:[%s1 + $0x1b8] sm:$0xff]
  %v2738 = vsel %vm927, %v2734, 0
  %2740 = vmatpush.msra.mxu0 0.0
  %2741 = vmatpush.msra.mxu0 0.0
  %2742 = vmatpush.msra.mxu0 0.0
  %2743 = vmatpush.msra.mxu0 0.0
  %2744 = vmatpush.msra.mxu0 0.0
  %2745 = vmatpush.msra.mxu0 0.0
  %2746 = vmatpush.msra.mxu0 0.0
  %2747 = vmatpush.msra.mxu0 0.0
  %2748 = vmatpush.msra.mxu0 0.0
  %2749 = vmatpush.msra.mxu0 0.0
  %2750 = vmatpush.msra.mxu0 0.0
  %2751 = vmatpush.msra.mxu0 0.0
  %2752 = vmatpush.msra.mxu0 0.0
  %2753 = vmatpush.msra.mxu0 0.0
  %2754 = vmatpush.msra.mxu0 %v2736
  %2755 = vmatpush.msra.mxu0 %v2735
  %2756 = vmatmul.f32.gmra.mxu0 %v2738
  %v2757 = vpop.f32.mrf.mxu0
  %v2758 = vadd.f32 0.0, %v2757
  %2759 = vdwg.mxu0
  %v2760 = vadd.f32 %v2732, %v2758
  %s2761 = scalar_lea.vmem [#allocation7], 10
  %v2762 = vld [vmem:[%s2761] ss:$16 sm:$0x3]
  %v2763 = vld [vmem:[%s1 + $0x1c0] sm:$0xff]
  %v2764 = vld [vmem:[%s1 + $0x1c8] sm:$0xff]
  %v2766 = vsel %vm927, %v2762, 0
  %2768 = vmatpush.msra.mxu0 0.0
  %2769 = vmatpush.msra.mxu0 0.0
  %2770 = vmatpush.msra.mxu0 0.0
  %2771 = vmatpush.msra.mxu0 0.0
  %2772 = vmatpush.msra.mxu0 0.0
  %2773 = vmatpush.msra.mxu0 0.0
  %2774 = vmatpush.msra.mxu0 0.0
  %2775 = vmatpush.msra.mxu0 0.0
  %2776 = vmatpush.msra.mxu0 0.0
  %2777 = vmatpush.msra.mxu0 0.0
  %2778 = vmatpush.msra.mxu0 0.0
  %2779 = vmatpush.msra.mxu0 0.0
  %2780 = vmatpush.msra.mxu0 0.0
  %2781 = vmatpush.msra.mxu0 0.0
  %2782 = vmatpush.msra.mxu0 %v2764
  %2783 = vmatpush.msra.mxu0 %v2763
  %2784 = vmatmul.f32.gmra.mxu0 %v2766
  %v2785 = vpop.f32.mrf.mxu0
  %v2786 = vadd.f32 0.0, %v2785
  %2787 = vdwg.mxu0
  %v2788 = vadd.f32 %v2760, %v2786
  %v2789 = vld [vmem:[%s1 + $0x1d0] sm:$0x1]
  %v2790 = vperm.slane %v2789, 0
  %v2791 = vadd.f32 %v2788, %v2790
  %v2792 = vmax.f32 %v2791, 0.0
  %v2793 = vld [vmem:[%s1 + $0x1d8] sm:$0x1]
  %v2794 = vld [vmem:[%s1 + $0x1e0] sm:$0x1]
  %v2795 = vperm.slane %v2793, 0
  %v2796 = vmul.f32 %v2792, %v2795
  %vm2797 = vcmask 1041408
  %v2798 = vsel %vm2797, %v2796, 0.0
  %2799 = vadd.xlane.f32.xlu0 %v2798
  %v2800 = vpop.xlane.xlu0 %2799
  %v2801 = vperm.slane %v2794, 0
  %v2802 = vadd.f32 %v2800, %v2801
  %2803 = vst [vmem:[%s2] sm:$0x3] %v2802
  // Predicated region
  $region10: #{forward.1} parent=0 // pred_check
    _
  $region11: #{forward.1} parent=0 // pred_check_branch
    %2805 = sbr.rel (0) target = $region13
  $region12: #{forward.1} parent=0 // pred_region
    _
  $region13: #{forward.1} parent=0 // pred_fallthru
    _
  // Predicated region
  $region14: #{forward.1} parent=0 // pred_check
    _
  $region15: #{forward.1} parent=0 // pred_check_branch
    %2807 = sbr.rel (0) target = $region17
  $region16: #{forward.1} parent=0 // pred_region
    _
  $region17: #{forward.1} parent=0 // pred_fallthru
    _

</llo_original>
